<compile_context>
chip_gen: v7x
topology: tpu7x:2x2x1
jax: 0.10.0
libtpu: 0.0.40
codegen_flags: <defaults>
</compile_context>

<pallas_src>
import functools
import numpy as np

import jax
import jax.numpy as jnp
from jax.experimental import pallas as pl
from jax.experimental.pallas import tpu as pltpu


CP = 128                     # lane-dense padded channel width
NEG_INF = -1e30              # additive mask constant (f32 scores only; never bf16)
_VMEM = pltpu.MemorySpace.VMEM


def _round_up(n, m):
    return ((n + m - 1) // m) * m


def _vmem_specs(n):
    return [pl.BlockSpec(memory_space=_VMEM) for _ in range(n)]


def _clamped_vmem(estimate_bytes):
    return int(max(16 << 20, min(int(estimate_bytes), 64 << 20)))


# ----------------------------------------------------------------------------- kernels

def _embed_kernel(xid_ref, pe_ref, eid_ref, nemb_ref, pew_ref, peb_ref, pegb_ref,
                  eemb_ref, h_ref, e_ref, *, n_valid, eps):
    """Fused: pe BatchNorm + pe_lin + node/edge embedding lookups (one-hot MXU matmuls)."""
    f32, bf16 = jnp.float32, jnp.bfloat16
    N_pad = pe_ref.shape[0]
    E_pad = eid_ref.shape[0]

    # --- pe_norm (BatchNorm1d, batch stats over the N valid rows only) ----------
    pe = pe_ref[...]
    rows = jax.lax.broadcasted_iota(jnp.int32, (N_pad, 1), 0)
    valid = (rows < n_valid).astype(f32)
    inv_n = f32(1.0 / n_valid)
    mean = jnp.sum(pe * valid, axis=0, keepdims=True) * inv_n
    d = (pe - mean) * valid
    var = jnp.sum(d * d, axis=0, keepdims=True) * inv_n
    inv = jax.lax.rsqrt(var + eps)
    pegb = pegb_ref[...]
    pe_bn = (pe - mean) * inv * pegb[0:1, :] + pegb[1:2, :]

    # --- pe_lin (weights pre-shifted into cols [C-pe_dim, C)) -------------------
    pe_feat = jnp.dot(pe_bn.astype(bf16), pew_ref[...],
                      preferred_element_type=f32) + peb_ref[...]

    # --- node / edge embeddings: one-hot built in-register from int ids ---------
    oh_n = (jax.lax.broadcasted_iota(jnp.int32, (N_pad, 28), 1)
            == xid_ref[...]).astype(bf16)
    node_feat = jnp.dot(oh_n, nemb_ref[...], preferred_element_type=f32)
    # zero padded rows so they stay bounded through the layer stack
    h_ref[...] = (node_feat + pe_feat) * valid

    oh_e = (jax.lax.broadcasted_iota(jnp.int32, (E_pad, 4), 1)
            == eid_ref[...]).astype(bf16)
    # bf16 output is lossless: one-hot lookup of an already-bf16 table
    e_ref[...] = jnp.dot(oh_e, eemb_ref[...], preferred_element_type=f32).astype(bf16)


def _layer_kernel(h0_ref, e_ref, bidc_ref, bidr_ref, src_ref, tgt_ref,
                  wqkv_ref, w_ref, v_ref, o_ref,
                  gather_s, scatter_s, bias_s, *, n_valid, heads, dh, eps):
    """One GPSConv layer per grid step: GINEConv + BN1, graph-masked MHA + BN2, FFN + BN3.

    The node state h is carried in the resident output block `o_ref` across the layer
    grid; gather/scatter one-hots and the attention bias are layer-invariant and cached
    in VMEM scratch (built once at step 0).
    """
    f32, bf16 = jnp.float32, jnp.bfloat16
    l = pl.program_id(0)
    N_pad, Cpk = o_ref.shape
    E_pad = e_ref.shape[0]

    # ---- step-0 init: layer-invariant structures + initial node state ----------
    @pl.when(l == 0)
    def _():
        gather_s[...] = (jax.lax.broadcasted_iota(jnp.int32, (E_pad, N_pad), 1)
                         == src_ref[...]).astype(bf16)                 # [E_pad, N_pad]
        scatter_s[...] = (jax.lax.broadcasted_iota(jnp.int32, (N_pad, E_pad), 0)
                          == tgt_ref[...]).astype(bf16)                # [N_pad, E_pad]
        # node i attends to node j iff same graph (padded rows carry id -1)
        bias_s[...] = jnp.where(bidc_ref[...] == bidr_ref[...], 0.0, NEG_INF).astype(f32)
        o_ref[...] = h0_ref[...]

    h = o_ref[...]
    V = v_ref[...]                                   # [16, CP] packed bias/norm rows (f32)

    rows = jax.lax.broadcasted_iota(jnp.int32, (N_pad, 1), 0)
    valid = (rows < n_valid).astype(f32)             # padded rows excluded from BN stats
    inv_n = f32(1.0 / n_valid)

    def mm(x, wi, bi, relu=False):                   # bf16 MXU matmul, f32 accumulate
        y = jnp.dot(x.astype(bf16), w_ref[wi], preferred_element_type=f32) + V[bi:bi + 1, :]
        return jnp.maximum(y, 0.0) if relu else y

    def bn(x, gi, bi):                               # BatchNorm1d (biased var, batch stats)
        mean = jnp.sum(x * valid, axis=0, keepdims=True) * inv_n
        d = (x - mean) * valid
        var = jnp.sum(d * d, axis=0, keepdims=True) * inv_n
        inv = jax.lax.rsqrt(var + eps)
        return (x - mean) * inv * V[gi:gi + 1, :] + V[bi:bi + 1, :]

    hb = h.astype(bf16)

    # ---- local branch: GINEConv (eps=0) + residual + BatchNorm ------------------
    x_src = jnp.dot(gather_s[...], hb, preferred_element_type=f32)     # gather x_j
    msg = jnp.maximum(x_src + e_ref[...].astype(f32), 0.0)             # relu(x_j + e_ij)
    agg = jnp.dot(scatter_s[...], msg.astype(bf16), preferred_element_type=f32)
    g = agg + h                                                        # (1 + eps) * x, eps = 0
    g = mm(g, 0, 0, relu=True)                                         # gine Linear+ReLU
    g = mm(g, 1, 1)                                                    # gine Linear
    g = g + h                                                          # residual
    g = bn(g, 8, 9)                                                    # norm1

    # ---- global branch: graph-masked multi-head self-attention ------------------
    # fused QKV projection: one [128, 384] bf16 matmul, then lane-block slices.
    qkv = jnp.dot(hb, wqkv_ref[...], preferred_element_type=f32)       # [N_pad, 3*CP]
    q = qkv[:, 0:Cpk] + V[2:3, :]        # scale dh**-0.5 already folded into wq/bq
    k = qkv[:, Cpk:2 * Cpk] + V[3:4, :]
    v = qkv[:, 2 * Cpk:3 * Cpk] + V[4:5, :]

    bias = bias_s[...]
    lane = jax.lax.broadcasted_iota(jnp.int32, (1, Cpk), 1)
    qb = q.astype(bf16)
    attn = jnp.zeros((N_pad, Cpk), f32)
    # heads via channel masks: contract over the full CP lanes instead of dh=8.
    # TODO(synk): at large N switch to a fori_loop / packed-head layout so only one
    #             [N,N] score buffer is live at a time (VMEM pressure on v7x).
    for hh in range(heads):
        hm = jnp.logical_and(lane >= hh * dh, lane < (hh + 1) * dh).astype(f32)
        kh = (k * hm).astype(bf16)
        vh = (v * hm).astype(bf16)
        s = jax.lax.dot_general(qb, kh, (((1,), (1,)), ((), ())),
                                preferred_element_type=f32)            # [N_pad, N_pad] f32
        s = s + bias
        m = jnp.max(s, axis=-1, keepdims=True)
        p = jnp.exp(s - m)
        p = p * pl.reciprocal(jnp.sum(p, axis=-1, keepdims=True), approx=True)
        attn = attn + jnp.dot(p.astype(bf16), vh, preferred_element_type=f32)

    a = jnp.dot(attn.astype(bf16), w_ref[2], preferred_element_type=f32) + V[5:6, :]
    a = a + h                                                          # residual
    a = bn(a, 10, 11)                                                  # norm2

    # ---- combine + feed-forward + BatchNorm -------------------------------------
    out = g + a
    m1 = mm(out, 3, 6, relu=True)                                      # FFN Linear+ReLU
    out = out + mm(m1, 4, 7)                                           # FFN Linear + residual
    out = bn(out, 12, 13)                                              # norm3
    # zero padded rows so garbage never accumulates across layers
    o_ref[...] = out * valid


def _readout_kernel(h_ref, bidr_ref, w_ref, v_ref, o_ref):
    """Fused global_add_pool (one-hot segment sum) + 3-layer readout MLP."""
    f32, bf16 = jnp.float32, jnp.bfloat16
    B_pad = o_ref.shape[0]
    N_pad = h_ref.shape[0]
    V = v_ref[...]
    P = (jax.lax.broadcasted_iota(jnp.int32, (B_pad, N_pad), 0)
         == bidr_ref[...]).astype(bf16)                              # [B_pad, N_pad]
    pooled = jnp.dot(P, h_ref[...].astype(bf16), preferred_element_type=f32)
    y = jnp.maximum(jnp.dot(pooled.astype(bf16), w_ref[0],
                            preferred_element_type=f32) + V[0:1, :], 0.0)
    y = jnp.maximum(jnp.dot(y.astype(bf16), w_ref[1],
                            preferred_element_type=f32) + V[1:2, :], 0.0)
    y = jnp.dot(y.astype(bf16), w_ref[2], preferred_element_type=f32) + V[2:3, :]
    o_ref[...] = y


# ----------------------------------------------------------------------------- params

def init_params(key, channels, pe_dim, num_layers):
    C = channels
    keys = iter(jax.random.split(key, 128))

    def dense(shape, scale=0.1):
        return jax.random.normal(next(keys), shape, jnp.float32) * scale

    params = {
        'node_emb': dense((28, C - pe_dim), 0.5),
        'pe_lin_w': dense((20, pe_dim)), 'pe_lin_b': dense((pe_dim,)),
        'pe_norm_g': jnp.ones((20,), jnp.float32),
        'pe_norm_b': jnp.zeros((20,), jnp.float32),
        'edge_emb': dense((4, C), 0.5),
        'layers': [],
        'mlp_w1': dense((C, C // 2)), 'mlp_b1': dense((C // 2,)),
        'mlp_w2': dense((C // 2, C // 4)), 'mlp_b2': dense((C // 4,)),
        'mlp_w3': dense((C // 4, 1)), 'mlp_b3': dense((1,)),
    }
    for _ in range(num_layers):
        params['layers'].append({
            'gine_w1': dense((C, C)), 'gine_b1': dense((C,)),
            'gine_w2': dense((C, C)), 'gine_b2': dense((C,)),
            'wq': dense((C, C)), 'bq': dense((C,)),
            'wk': dense((C, C)), 'bk': dense((C,)),
            'wv': dense((C, C)), 'bv': dense((C,)),
            'wo': dense((C, C)), 'bo': dense((C,)),
            'ffn_w1': dense((C, 2 * C)), 'ffn_b1': dense((2 * C,)),
            'ffn_w2': dense((2 * C, C)), 'ffn_b2': dense((C,)),
            'norm1_g': jnp.ones((C,), jnp.float32), 'norm1_b': jnp.zeros((C,), jnp.float32),
            'norm2_g': jnp.ones((C,), jnp.float32), 'norm2_b': jnp.zeros((C,), jnp.float32),
            'norm3_g': jnp.ones((C,), jnp.float32), 'norm3_b': jnp.zeros((C,), jnp.float32),
        })
    return params


def _pad_mat(w, rows, cols, r0=0, c0=0, dtype=jnp.float32):
    out = jnp.zeros((rows, cols), jnp.float32)
    out = out.at[r0:r0 + w.shape[0], c0:c0 + w.shape[1]].set(w)
    return out.astype(dtype)


def _pad_vec(v, cols, c0=0):
    return jnp.zeros((cols,), jnp.float32).at[c0:c0 + v.shape[0]].set(v)


def pack_params(p, channels, pe_dim, heads):
    """Zero-pad to the 128-lane layout and stack per-layer weights across layers (bf16)."""
    C = channels
    dh = C // heads
    scale = float(dh) ** -0.5
    bf = jnp.bfloat16
    packed = {
        'nemb': _pad_mat(p['node_emb'], 28, CP, dtype=bf),                   # cols [0, C-pe)
        'pew': _pad_mat(p['pe_lin_w'], CP, CP, 0, C - pe_dim, dtype=bf),     # cols [C-pe, C)
        'peb': _pad_vec(p['pe_lin_b'], CP, C - pe_dim)[None, :],
        'pegb': jnp.stack([_pad_vec(p['pe_norm_g'], CP), _pad_vec(p['pe_norm_b'], CP)]),
        'eemb': _pad_mat(p['edge_emb'], 4, CP, dtype=bf),
        'ro_w': jnp.stack([_pad_mat(p['mlp_w1'], CP, CP, dtype=bf),
                           _pad_mat(p['mlp_w2'], CP, CP, dtype=bf),
                           _pad_mat(p['mlp_w3'], CP, CP, dtype=bf)]),
        'ro_v': jnp.stack([_pad_vec(p['mlp_b1'], CP),
                           _pad_vec(p['mlp_b2'], CP),
                           _pad_vec(p['mlp_b3'], CP)]),
    }
    wqkv_l, wother_l, v_l = [], [], []
    zero_row = jnp.zeros((CP,), jnp.float32)
    for lp in p['layers']:
        # attention scale folded into wq / bq: q = (x@wq + bq) * dh**-0.5
        wqkv = jnp.concatenate([_pad_mat(lp['wq'] * scale, CP, CP),
                                _pad_mat(lp['wk'], CP, CP),
                                _pad_mat(lp['wv'], CP, CP)], axis=1).astype(bf)  # [CP, 3CP]
        wother = jnp.stack([_pad_mat(lp['gine_w1'], CP, CP, dtype=bf),
                            _pad_mat(lp['gine_w2'], CP, CP, dtype=bf),
                            _pad_mat(lp['wo'], CP, CP, dtype=bf),
                            _pad_mat(lp['ffn_w1'], CP, CP, dtype=bf),
                            _pad_mat(lp['ffn_w2'], CP, CP, dtype=bf)])           # [5, CP, CP]
        V = jnp.stack([_pad_vec(lp['gine_b1'], CP), _pad_vec(lp['gine_b2'], CP),
                       _pad_vec(lp['bq'] * scale, CP), _pad_vec(lp['bk'], CP),
                       _pad_vec(lp['bv'], CP), _pad_vec(lp['bo'], CP),
                       _pad_vec(lp['ffn_b1'], CP), _pad_vec(lp['ffn_b2'], CP),
                       _pad_vec(lp['norm1_g'], CP), _pad_vec(lp['norm1_b'], CP),
                       _pad_vec(lp['norm2_g'], CP), _pad_vec(lp['norm2_b'], CP),
                       _pad_vec(lp['norm3_g'], CP), _pad_vec(lp['norm3_b'], CP),
                       zero_row, zero_row])                                      # [16, CP]
        wqkv_l.append(wqkv); wother_l.append(wother); v_l.append(V)
    packed['Wqkv'] = jnp.stack(wqkv_l)       # [L, CP, 3*CP] bf16
    packed['W'] = jnp.stack(wother_l)        # [L, 5, CP, CP] bf16
    packed['V'] = jnp.stack(v_l)             # [L, 16, CP] f32
    return packed


# ----------------------------------------------------------------------------- forward

def gps_forward(packed, x, pe, edge_index, edge_attr, batch,
                *, num_graphs, channels, heads):
    C = channels
    dh = C // heads
    N = x.shape[0]
    E = edge_index.shape[1]
    B = num_graphs
    L = packed['Wqkv'].shape[0]
    N_pad, E_pad, B_pad = _round_up(N, 16), _round_up(E, 16), _round_up(B, 8)

    # --- cheap padding / index prep (XLA glue, once per forward) -----------------
    xid = jnp.pad(x[:, :1].astype(jnp.int32), ((0, N_pad - N), (0, 0)), constant_values=-1)
    pe_pad = jnp.pad(pe.astype(jnp.float32), ((0, N_pad - N), (0, CP - pe.shape[1])))
    eid = jnp.pad(edge_attr.astype(jnp.int32)[:, None], ((0, E_pad - E), (0, 0)),
                  constant_values=-1)
    src_col = jnp.pad(edge_index[0].astype(jnp.int32)[:, None], ((0, E_pad - E), (0, 0)),
                      constant_values=-1)
    tgt_row = jnp.pad(edge_index[1].astype(jnp.int32)[None, :], ((0, 0), (0, E_pad - E)),
                      constant_values=-1)
    bid_col = jnp.pad(batch.astype(jnp.int32)[:, None], ((0, N_pad - N), (0, 0)),
                      constant_values=-1)
    bid_row = jnp.transpose(bid_col)                                  # [1, N_pad]

    # --- fused input embeddings ---------------------------------------------------
    emb_vmem = _clamped_vmem(8 * (N_pad + E_pad) * CP * 4 + (1 << 20))
    h, e = pl.pallas_call(
        functools.partial(_embed_kernel, n_valid=N, eps=1e-5),
        out_shape=(jax.ShapeDtypeStruct((N_pad, CP), jnp.float32),
                   jax.ShapeDtypeStruct((E_pad, CP), jnp.bfloat16)),
        in_specs=_vmem_specs(8),
        out_specs=(pl.BlockSpec(memory_space=_VMEM), pl.BlockSpec(memory_space=_VMEM)),
        compiler_params=pltpu.CompilerParams(vmem_limit_bytes=emb_vmem),
    )(xid, pe_pad, eid, packed['nemb'], packed['pew'], packed['peb'],
      packed['pegb'], packed['eemb'])

    # --- ONE gridded pallas_call for all GPSConv layers -----------------------------
    # live-set VMEM estimate: double-buffered weight stacks + resident activations +
    # one-hot / bias scratch + [N,N] score intermediates, with 2x headroom.
    w_bytes = 2 * (CP * 3 * CP * 2 + 5 * CP * CP * 2 + 16 * CP * 4)
    act_bytes = 2 * N_pad * CP * 4 + E_pad * CP * 2 + (N_pad + E_pad) * 2 * 512
    scratch_bytes = 2 * E_pad * N_pad * 2 + N_pad * N_pad * 4
    live_bytes = 8 * N_pad * N_pad * 4 + 16 * N_pad * CP * 4 + 2 * E_pad * CP * 4
    layer_vmem = _clamped_vmem(2 * (w_bytes + act_bytes + scratch_bytes + live_bytes))

    grid_spec = pltpu.PrefetchScalarGridSpec(
        num_scalar_prefetch=0,
        grid=(L,),
        in_specs=[
            pl.BlockSpec((N_pad, CP), lambda l: (0, 0)),                       # h0
            pl.BlockSpec((E_pad, CP), lambda l: (0, 0)),                       # e (resident)
            pl.BlockSpec((N_pad, 1), lambda l: (0, 0)),                        # bid_col
            pl.BlockSpec((1, N_pad), lambda l: (0, 0)),                        # bid_row
            pl.BlockSpec((E_pad, 1), lambda l: (0, 0)),                        # src_col
            pl.BlockSpec((1, E_pad), lambda l: (0, 0)),                        # tgt_row
            pl.BlockSpec((pl.Squeezed(), CP, 3 * CP), lambda l: (l, 0, 0)),    # Wqkv[l]
            pl.BlockSpec((pl.Squeezed(), 5, CP, CP), lambda l: (l, 0, 0, 0)),  # W[l]
            pl.BlockSpec((pl.Squeezed(), 16, CP), lambda l: (l, 0, 0)),        # V[l]
        ],
        out_specs=pl.BlockSpec((N_pad, CP), lambda l: (0, 0)),                 # h (resident)
        scratch_shapes=[
            pltpu.VMEM((E_pad, N_pad), jnp.bfloat16),   # gather one-hot (layer-invariant)
            pltpu.VMEM((N_pad, E_pad), jnp.bfloat16),   # scatter one-hot (layer-invariant)
            pltpu.VMEM((N_pad, N_pad), jnp.float32),    # graph-membership attention bias
        ],
    )
    h = pl.pallas_call(
        functools.partial(_layer_kernel, n_valid=N, heads=heads, dh=dh, eps=1e-5),
        out_shape=jax.ShapeDtypeStruct((N_pad, CP), jnp.float32),
        grid_spec=grid_spec,
        compiler_params=pltpu.CompilerParams(
            dimension_semantics=("arbitrary",),          # sequential layer dependency
            vmem_limit_bytes=layer_vmem),
    )(h, e, bid_col, bid_row, src_col, tgt_row, packed['Wqkv'], packed['W'], packed['V'])

    # --- fused global_add_pool + readout MLP ---------------------------------------
    ro_vmem = _clamped_vmem(4 * (N_pad + B_pad) * CP * 4 + (1 << 20))
    y = pl.pallas_call(
        _readout_kernel,
        out_shape=jax.ShapeDtypeStruct((B_pad, CP), jnp.float32),
        in_specs=_vmem_specs(4),
        out_specs=pl.BlockSpec(memory_space=_VMEM),
        compiler_params=pltpu.CompilerParams(vmem_limit_bytes=ro_vmem),
    )(h, bid_row, packed['ro_w'], packed['ro_v'])
    return y[:B, :1]


# ----------------------------------------------------------------------------- main

if __name__ == "__main__":
    channels, pe_dim, num_layers, heads = 32, 8, 2, 4

    key = jax.random.PRNGKey(0)
    kp, kpe, kx, kea = jax.random.split(key, 4)
    params = init_params(kp, channels, pe_dim, num_layers)
    packed = pack_params(params, channels, pe_dim, heads)

    # small synthetic batch of 3 molecule-like graphs (sizes 4, 6, 5)
    sizes = [4, 6, 5]
    batch_np = np.concatenate([np.full(s, i, np.int32) for i, s in enumerate(sizes)])
    N = int(batch_np.shape[0])

    srcs, tgts = [], []
    off = 0
    for s in sizes:                        # bidirected chain inside each graph
        for a in range(s - 1):
            srcs += [off + a, off + a + 1]
            tgts += [off + a + 1, off + a]
        off += s
    edge_index_np = np.stack([np.asarray(srcs, np.int32), np.asarray(tgts, np.int32)])
    E = int(edge_index_np.shape[1])

    x = jax.random.randint(kx, (N, 1), 0, 28, dtype=jnp.int32)       # atom types
    pe = jax.random.normal(kpe, (N, 20), jnp.float32)                # positional encodings
    edge_attr = jax.random.randint(kea, (E,), 0, 4, dtype=jnp.int32) # bond types
    edge_index = jnp.asarray(edge_index_np)
    batch = jnp.asarray(batch_np)

    fwd = jax.jit(functools.partial(gps_forward, num_graphs=len(sizes),
                                    channels=channels, heads=heads))
    out = fwd(packed, x, pe, edge_index, edge_attr, batch)
    out = jax.block_until_ready(out)
    assert out.shape == (len(sizes), 1) and bool(jnp.all(jnp.isfinite(out)))
    print("KERNEL_OK")
</pallas_src>

<mosaic_0001>
module attributes {stable_mosaic.version = 11 : i64} {
  func.func @_embed_kernel(%arg0: memref<16x1xi32, #tpu.memory_space<vmem>>, %arg1: memref<16x128xf32, #tpu.memory_space<vmem>>, %arg2: memref<32x1xi32, #tpu.memory_space<vmem>>, %arg3: memref<28x128xbf16, #tpu.memory_space<vmem>>, %arg4: memref<128x128xbf16, #tpu.memory_space<vmem>>, %arg5: memref<1x128xf32, #tpu.memory_space<vmem>>, %arg6: memref<2x128xf32, #tpu.memory_space<vmem>>, %arg7: memref<4x128xbf16, #tpu.memory_space<vmem>>, %arg8: memref<16x128xf32, #tpu.memory_space<vmem>>, %arg9: memref<32x128xbf16, #tpu.memory_space<vmem>>) attributes {dimension_semantics = [], scalar_prefetch = 0 : i64, scratch_operands = 0 : i64, tpu.core_type = #tpu.core_type<tc>} {
    %c0 = arith.constant 0 : index
    %c0_0 = arith.constant 0 : index
    %0 = vector.load %arg1[%c0, %c0_0] : memref<16x128xf32, #tpu.memory_space<vmem>>, vector<16x128xf32>
    %1 = tpu.iota {dimensions = array<i32: 0>} : vector<16x1xi32>
    %c15_i32 = arith.constant 15 : i32
    %2 = vector.broadcast %c15_i32 : i32 to vector<16x1xi32>
    %3 = arith.cmpi slt, %1, %2 : vector<16x1xi32>
    %4 = arith.extui %3 : vector<16x1xi1> to vector<16x1xi32>
    %5 = arith.sitofp %4 : vector<16x1xi32> to vector<16x1xf32>
    %6 = vector.broadcast %5 : vector<16x1xf32> to vector<16x128xf32>
    %7 = arith.mulf %0, %6 : vector<16x128xf32>
    %cst = arith.constant dense<0.000000e+00> : vector<128xf32>
    %8 = vector.multi_reduction <add>, %7, %cst [0] : vector<16x128xf32> to vector<128xf32>
    %9 = vector.shape_cast %8 : vector<128xf32> to vector<1x128xf32>
    %cst_1 = arith.constant 0.0666666701 : f32
    %10 = vector.broadcast %cst_1 : f32 to vector<1x128xf32>
    %11 = arith.mulf %9, %10 : vector<1x128xf32>
    %12 = vector.broadcast %11 : vector<1x128xf32> to vector<16x128xf32>
    %13 = arith.subf %0, %12 : vector<16x128xf32>
    %14 = vector.broadcast %5 : vector<16x1xf32> to vector<16x128xf32>
    %15 = arith.mulf %13, %14 : vector<16x128xf32>
    %16 = arith.mulf %15, %15 : vector<16x128xf32>
    %cst_2 = arith.constant dense<0.000000e+00> : vector<128xf32>
    %17 = vector.multi_reduction <add>, %16, %cst_2 [0] : vector<16x128xf32> to vector<128xf32>
    %18 = vector.shape_cast %17 : vector<128xf32> to vector<1x128xf32>
    %cst_3 = arith.constant 0.0666666701 : f32
    %19 = vector.broadcast %cst_3 : f32 to vector<1x128xf32>
    %20 = arith.mulf %18, %19 : vector<1x128xf32>
    %cst_4 = arith.constant 9.99999974E-6 : f32
    %21 = vector.broadcast %cst_4 : f32 to vector<1x128xf32>
    %22 = arith.addf %20, %21 : vector<1x128xf32>
    %23 = math.rsqrt %22 : vector<1x128xf32>
    %c0_5 = arith.constant 0 : index
    %c0_6 = arith.constant 0 : index
    %24 = vector.load %arg6[%c0_5, %c0_6] : memref<2x128xf32, #tpu.memory_space<vmem>>, vector<2x128xf32>
    %25 = vector.broadcast %11 : vector<1x128xf32> to vector<16x128xf32>
    %26 = arith.subf %0, %25 : vector<16x128xf32>
    %27 = vector.broadcast %23 : vector<1x128xf32> to vector<16x128xf32>
    %28 = arith.mulf %26, %27 : vector<16x128xf32>
    %29 = vector.extract_strided_slice %24 {offsets = [0, 0], sizes = [1, 128], strides = [1, 1]} : vector<2x128xf32> to vector<1x128xf32>
    %30 = vector.broadcast %29 : vector<1x128xf32> to vector<16x128xf32>
    %31 = arith.mulf %28, %30 : vector<16x128xf32>
    %32 = vector.extract_strided_slice %24 {offsets = [1, 0], sizes = [1, 128], strides = [1, 1]} : vector<2x128xf32> to vector<1x128xf32>
    %33 = vector.broadcast %32 : vector<1x128xf32> to vector<16x128xf32>
    %34 = arith.addf %31, %33 : vector<16x128xf32>
    %35 = arith.truncf %34 : vector<16x128xf32> to vector<16x128xbf16>
    %c0_7 = arith.constant 0 : index
    %c0_8 = arith.constant 0 : index
    %36 = vector.load %arg4[%c0_7, %c0_8] : memref<128x128xbf16, #tpu.memory_space<vmem>>, vector<128x128xbf16>
    %cst_9 = arith.constant dense<0.000000e+00> : vector<16x128xf32>
    %37 = tpu.matmul %35, %36, %cst_9 {dimension_numbers = #tpu.dot_dimension_numbers<[1], [0], [0], [1], [0, 0, 1, 1], [], []>} : vector<16x128xbf16>, vector<128x128xbf16>, vector<16x128xf32> -> vector<16x128xf32>
    %c0_10 = arith.constant 0 : index
    %c0_11 = arith.constant 0 : index
    %38 = vector.load %arg5[%c0_10, %c0_11] : memref<1x128xf32, #tpu.memory_space<vmem>>, vector<1x128xf32>
    %39 = vector.broadcast %38 : vector<1x128xf32> to vector<16x128xf32>
    %40 = arith.addf %37, %39 : vector<16x128xf32>
    %41 = tpu.iota {dimensions = array<i32: 1>} : vector<16x28xi32>
    %c0_12 = arith.constant 0 : index
    %c0_13 = arith.constant 0 : index
    %42 = vector.load %arg0[%c0_12, %c0_13] : memref<16x1xi32, #tpu.memory_space<vmem>>, vector<16x1xi32>
    %43 = vector.broadcast %42 : vector<16x1xi32> to vector<16x28xi32>
    %44 = arith.cmpi eq, %41, %43 : vector<16x28xi32>
    %45 = arith.extui %44 : vector<16x28xi1> to vector<16x28xi32>
    %46 = arith.sitofp %45 : vector<16x28xi32> to vector<16x28xf32>
    %47 = arith.truncf %46 : vector<16x28xf32> to vector<16x28xbf16>
    %c0_14 = arith.constant 0 : index
    %c0_15 = arith.constant 0 : index
    %48 = vector.load %arg3[%c0_14, %c0_15] : memref<28x128xbf16, #tpu.memory_space<vmem>>, vector<28x128xbf16>
    %cst_16 = arith.constant dense<0.000000e+00> : vector<16x128xf32>
    %49 = tpu.matmul %47, %48, %cst_16 {dimension_numbers = #tpu.dot_dimension_numbers<[1], [0], [0], [1], [0, 0, 1, 1], [], []>} : vector<16x28xbf16>, vector<28x128xbf16>, vector<16x128xf32> -> vector<16x128xf32>
    %50 = arith.addf %49, %40 : vector<16x128xf32>
    %51 = vector.broadcast %5 : vector<16x1xf32> to vector<16x128xf32>
    %52 = arith.mulf %50, %51 : vector<16x128xf32>
    %c0_17 = arith.constant 0 : index
    %c0_18 = arith.constant 0 : index
    %53 = vector.load %arg8[%c0_17, %c0_18] : memref<16x128xf32, #tpu.memory_space<vmem>>, vector<16x128xf32>
    tpu.vector_store %arg8[%c0_17, %c0_18], %52 {strides = array<i32>} : memref<16x128xf32, #tpu.memory_space<vmem>>, vector<16x128xf32>,
    %54 = tpu.iota {dimensions = array<i32: 1>} : vector<32x4xi32>
    %c0_19 = arith.constant 0 : index
    %c0_20 = arith.constant 0 : index
    %55 = vector.load %arg2[%c0_19, %c0_20] : memref<32x1xi32, #tpu.memory_space<vmem>>, vector<32x1xi32>
    %56 = vector.broadcast %55 : vector<32x1xi32> to vector<32x4xi32>
    %57 = arith.cmpi eq, %54, %56 : vector<32x4xi32>
    %58 = arith.extui %57 : vector<32x4xi1> to vector<32x4xi32>
    %59 = arith.sitofp %58 : vector<32x4xi32> to vector<32x4xf32>
    %60 = arith.truncf %59 : vector<32x4xf32> to vector<32x4xbf16>
    %c0_21 = arith.constant 0 : index
    %c0_22 = arith.constant 0 : index
    %61 = vector.load %arg7[%c0_21, %c0_22] : memref<4x128xbf16, #tpu.memory_space<vmem>>, vector<4x128xbf16>
    %cst_23 = arith.constant dense<0.000000e+00> : vector<32x128xf32>
    %62 = tpu.matmul %60, %61, %cst_23 {dimension_numbers = #tpu.dot_dimension_numbers<[1], [0], [0], [1], [0, 0, 1, 1], [], []>} : vector<32x4xbf16>, vector<4x128xbf16>, vector<32x128xf32> -> vector<32x128xf32>
    %63 = arith.truncf %62 : vector<32x128xf32> to vector<32x128xbf16>
    %c0_24 = arith.constant 0 : index
    %c0_25 = arith.constant 0 : index
    %64 = vector.load %arg9[%c0_24, %c0_25] : memref<32x128xbf16, #tpu.memory_space<vmem>>, vector<32x128xbf16>
    tpu.vector_store %arg9[%c0_24, %c0_25], %63 {strides = array<i32>} : memref<32x128xbf16, #tpu.memory_space<vmem>>, vector<32x128xbf16>,
    return
  }
}

module attributes {stable_mosaic.version = 11 : i64} {
  func.func @_readout_kernel(%arg0: memref<16x128xf32, #tpu.memory_space<vmem>>, %arg1: memref<1x16xi32, #tpu.memory_space<vmem>>, %arg2: memref<3x128x128xbf16, #tpu.memory_space<vmem>>, %arg3: memref<3x128xf32, #tpu.memory_space<vmem>>, %arg4: memref<8x128xf32, #tpu.memory_space<vmem>>) attributes {dimension_semantics = [], scalar_prefetch = 0 : i64, scratch_operands = 0 : i64, tpu.core_type = #tpu.core_type<tc>} {
    %c0 = arith.constant 0 : index
    %c0_0 = arith.constant 0 : index
    %0 = vector.load %arg3[%c0, %c0_0] : memref<3x128xf32, #tpu.memory_space<vmem>>, vector<3x128xf32>
    %1 = tpu.iota {dimensions = array<i32: 0>} : vector<8x16xi32>
    %c0_1 = arith.constant 0 : index
    %c0_2 = arith.constant 0 : index
    %2 = vector.load %arg1[%c0_1, %c0_2] : memref<1x16xi32, #tpu.memory_space<vmem>>, vector<1x16xi32>
    %3 = vector.broadcast %2 : vector<1x16xi32> to vector<8x16xi32>
    %4 = arith.cmpi eq, %1, %3 : vector<8x16xi32>
    %5 = arith.extui %4 : vector<8x16xi1> to vector<8x16xi32>
    %6 = arith.sitofp %5 : vector<8x16xi32> to vector<8x16xf32>
    %7 = arith.truncf %6 : vector<8x16xf32> to vector<8x16xbf16>
    %c0_3 = arith.constant 0 : index
    %c0_4 = arith.constant 0 : index
    %8 = vector.load %arg0[%c0_3, %c0_4] : memref<16x128xf32, #tpu.memory_space<vmem>>, vector<16x128xf32>
    %9 = arith.truncf %8 : vector<16x128xf32> to vector<16x128xbf16>
    %cst = arith.constant dense<0.000000e+00> : vector<8x128xf32>
    %10 = tpu.matmul %7, %9, %cst {dimension_numbers = #tpu.dot_dimension_numbers<[1], [0], [0], [1], [0, 0, 1, 1], [], []>} : vector<8x16xbf16>, vector<16x128xbf16>, vector<8x128xf32> -> vector<8x128xf32>
    %11 = arith.truncf %10 : vector<8x128xf32> to vector<8x128xbf16>
    %c0_5 = arith.constant 0 : index
    %c0_6 = arith.constant 0 : index
    %c0_7 = arith.constant 0 : index
    %12 = vector.load %arg2[%c0_5, %c0_6, %c0_7] : memref<3x128x128xbf16, #tpu.memory_space<vmem>>, vector<1x128x128xbf16>
    %13 = vector.shape_cast %12 : vector<1x128x128xbf16> to vector<128x128xbf16>
    %cst_8 = arith.constant dense<0.000000e+00> : vector<8x128xf32>
    %14 = tpu.matmul %11, %13, %cst_8 {dimension_numbers = #tpu.dot_dimension_numbers<[1], [0], [0], [1], [0, 0, 1, 1], [], []>} : vector<8x128xbf16>, vector<128x128xbf16>, vector<8x128xf32> -> vector<8x128xf32>
    %15 = vector.extract_strided_slice %0 {offsets = [0, 0], sizes = [1, 128], strides = [1, 1]} : vector<3x128xf32> to vector<1x128xf32>
    %16 = vector.broadcast %15 : vector<1x128xf32> to vector<8x128xf32>
    %17 = arith.addf %14, %16 : vector<8x128xf32>
    %cst_9 = arith.constant 0.000000e+00 : f32
    %18 = vector.broadcast %cst_9 : f32 to vector<8x128xf32>
    %19 = arith.maximumf %17, %18 : vector<8x128xf32>
    %20 = arith.truncf %19 : vector<8x128xf32> to vector<8x128xbf16>
    %c1 = arith.constant 1 : index
    %c0_10 = arith.constant 0 : index
    %c0_11 = arith.constant 0 : index
    %21 = vector.load %arg2[%c1, %c0_10, %c0_11] : memref<3x128x128xbf16, #tpu.memory_space<vmem>>, vector<1x128x128xbf16>
    %22 = vector.shape_cast %21 : vector<1x128x128xbf16> to vector<128x128xbf16>
    %cst_12 = arith.constant dense<0.000000e+00> : vector<8x128xf32>
    %23 = tpu.matmul %20, %22, %cst_12 {dimension_numbers = #tpu.dot_dimension_numbers<[1], [0], [0], [1], [0, 0, 1, 1], [], []>} : vector<8x128xbf16>, vector<128x128xbf16>, vector<8x128xf32> -> vector<8x128xf32>
    %24 = vector.extract_strided_slice %0 {offsets = [1, 0], sizes = [1, 128], strides = [1, 1]} : vector<3x128xf32> to vector<1x128xf32>
    %25 = vector.broadcast %24 : vector<1x128xf32> to vector<8x128xf32>
    %26 = arith.addf %23, %25 : vector<8x128xf32>
    %cst_13 = arith.constant 0.000000e+00 : f32
    %27 = vector.broadcast %cst_13 : f32 to vector<8x128xf32>
    %28 = arith.maximumf %26, %27 : vector<8x128xf32>
    %29 = arith.truncf %28 : vector<8x128xf32> to vector<8x128xbf16>
    %c2 = arith.constant 2 : index
    %c0_14 = arith.constant 0 : index
    %c0_15 = arith.constant 0 : index
    %30 = vector.load %arg2[%c2, %c0_14, %c0_15] : memref<3x128x128xbf16, #tpu.memory_space<vmem>>, vector<1x128x128xbf16>
    %31 = vector.shape_cast %30 : vector<1x128x128xbf16> to vector<128x128xbf16>
    %cst_16 = arith.constant dense<0.000000e+00> : vector<8x128xf32>
    %32 = tpu.matmul %29, %31, %cst_16 {dimension_numbers = #tpu.dot_dimension_numbers<[1], [0], [0], [1], [0, 0, 1, 1], [], []>} : vector<8x128xbf16>, vector<128x128xbf16>, vector<8x128xf32> -> vector<8x128xf32>
    %33 = vector.extract_strided_slice %0 {offsets = [2, 0], sizes = [1, 128], strides = [1, 1]} : vector<3x128xf32> to vector<1x128xf32>
    %34 = vector.broadcast %33 : vector<1x128xf32> to vector<8x128xf32>
    %35 = arith.addf %32, %34 : vector<8x128xf32>
    %c0_17 = arith.constant 0 : index
    %c0_18 = arith.constant 0 : index
    %36 = vector.load %arg4[%c0_17, %c0_18] : memref<8x128xf32, #tpu.memory_space<vmem>>, vector<8x128xf32>
    tpu.vector_store %arg4[%c0_17, %c0_18], %35 {strides = array<i32>} : memref<8x128xf32, #tpu.memory_space<vmem>>, vector<8x128xf32>,
    return
  }
}

module attributes {stable_mosaic.version = 11 : i64} {
  func.func @_layer_kernel(%arg0: i32, %arg1: memref<16x128xf32, #tpu.memory_space<vmem>>, %arg2: memref<32x128xbf16, #tpu.memory_space<vmem>>, %arg3: memref<16x1xi32, #tpu.memory_space<vmem>>, %arg4: memref<1x16xi32, #tpu.memory_space<vmem>>, %arg5: memref<32x1xi32, #tpu.memory_space<vmem>>, %arg6: memref<1x32xi32, #tpu.memory_space<vmem>>, %arg7: memref<1x128x384xbf16, #tpu.memory_space<vmem>>, %arg8: memref<1x5x128x128xbf16, #tpu.memory_space<vmem>>, %arg9: memref<1x16x128xf32, #tpu.memory_space<vmem>>, %arg10: memref<16x128xf32, #tpu.memory_space<vmem>>, %arg11: memref<32x16xbf16, #tpu.memory_space<vmem>>, %arg12: memref<16x32xbf16, #tpu.memory_space<vmem>>, %arg13: memref<16x16xf32, #tpu.memory_space<vmem>>) attributes {dimension_semantics = [#tpu.dimension_semantics<arbitrary>], iteration_bounds = array<i64: 2>, scalar_prefetch = 0 : i64, scratch_operands = 3 : i64, tpu.core_type = #tpu.core_type<tc>, window_params = [{pipeline_mode = #tpu.pipeline_mode<synchronous>, transform_indices = @transform_0, window_bounds = array<i64: 16, 128>}, {pipeline_mode = #tpu.pipeline_mode<synchronous>, transform_indices = @transform_1, window_bounds = array<i64: 32, 128>}, {pipeline_mode = #tpu.pipeline_mode<synchronous>, transform_indices = @transform_2, window_bounds = array<i64: 16, 1>}, {pipeline_mode = #tpu.pipeline_mode<synchronous>, transform_indices = @transform_3, window_bounds = array<i64: 1, 16>}, {pipeline_mode = #tpu.pipeline_mode<synchronous>, transform_indices = @transform_4, window_bounds = array<i64: 32, 1>}, {pipeline_mode = #tpu.pipeline_mode<synchronous>, transform_indices = @transform_5, window_bounds = array<i64: 1, 32>}, {transform_indices = @transform_6, window_bounds = array<i64: 1, 128, 384>}, {transform_indices = @transform_7, window_bounds = array<i64: 1, 5, 128, 128>}, {transform_indices = @transform_8, window_bounds = array<i64: 1, 16, 128>}, {pipeline_mode = #tpu.pipeline_mode<synchronous>, transform_indices = @transform_9, window_bounds = array<i64: 16, 128>}]} {
    %c0_i32 = arith.constant 0 : i32
    %0 = arith.cmpi eq, %arg0, %c0_i32 : i32
    %1 = arith.extui %0 : i1 to i32
    %c0_i32_0 = arith.constant 0 : i32
    %2 = arith.cmpi ne, %1, %c0_i32_0 : i32
    scf.if %2 {
      %284 = tpu.iota {dimensions = array<i32: 1>} : vector<32x16xi32>
      %c0_80 = arith.constant 0 : index
      %c0_81 = arith.constant 0 : index
      %285 = vector.load %arg5[%c0_80, %c0_81] : memref<32x1xi32, #tpu.memory_space<vmem>>, vector<32x1xi32>
      %286 = vector.broadcast %285 : vector<32x1xi32> to vector<32x16xi32>
      %287 = arith.cmpi eq, %284, %286 : vector<32x16xi32>
      %288 = arith.extui %287 : vector<32x16xi1> to vector<32x16xi32>
      %289 = arith.sitofp %288 : vector<32x16xi32> to vector<32x16xf32>
      %290 = arith.truncf %289 : vector<32x16xf32> to vector<32x16xbf16>
      %c0_82 = arith.constant 0 : index
      %c0_83 = arith.constant 0 : index
      %291 = vector.load %arg11[%c0_82, %c0_83] : memref<32x16xbf16, #tpu.memory_space<vmem>>, vector<32x16xbf16>
      tpu.vector_store %arg11[%c0_82, %c0_83], %290 {strides = array<i32>} : memref<32x16xbf16, #tpu.memory_space<vmem>>, vector<32x16xbf16>,
      %292 = tpu.iota {dimensions = array<i32: 0>} : vector<16x32xi32>
      %c0_84 = arith.constant 0 : index
      %c0_85 = arith.constant 0 : index
      %293 = vector.load %arg6[%c0_84, %c0_85] : memref<1x32xi32, #tpu.memory_space<vmem>>, vector<1x32xi32>
      %294 = vector.broadcast %293 : vector<1x32xi32> to vector<16x32xi32>
      %295 = arith.cmpi eq, %292, %294 : vector<16x32xi32>
      %296 = arith.extui %295 : vector<16x32xi1> to vector<16x32xi32>
      %297 = arith.sitofp %296 : vector<16x32xi32> to vector<16x32xf32>
      %298 = arith.truncf %297 : vector<16x32xf32> to vector<16x32xbf16>
      %c0_86 = arith.constant 0 : index
      %c0_87 = arith.constant 0 : index
      %299 = vector.load %arg12[%c0_86, %c0_87] : memref<16x32xbf16, #tpu.memory_space<vmem>>, vector<16x32xbf16>
      tpu.vector_store %arg12[%c0_86, %c0_87], %298 {strides = array<i32>} : memref<16x32xbf16, #tpu.memory_space<vmem>>, vector<16x32xbf16>,
      %c0_88 = arith.constant 0 : index
      %c0_89 = arith.constant 0 : index
      %300 = vector.load %arg3[%c0_88, %c0_89] : memref<16x1xi32, #tpu.memory_space<vmem>>, vector<16x1xi32>
      %c0_90 = arith.constant 0 : index
      %c0_91 = arith.constant 0 : index
      %301 = vector.load %arg4[%c0_90, %c0_91] : memref<1x16xi32, #tpu.memory_space<vmem>>, vector<1x16xi32>
      %302 = vector.broadcast %300 : vector<16x1xi32> to vector<16x16xi32>
      %303 = vector.broadcast %301 : vector<1x16xi32> to vector<16x16xi32>
      %304 = arith.cmpi eq, %302, %303 : vector<16x16xi32>
      %cst_92 = arith.constant 0.000000e+00 : f32
      %cst_93 = arith.constant -1.000000e+30 : f32
      %305 = vector.broadcast %cst_92 : f32 to vector<16x16xf32>
      %306 = vector.broadcast %cst_93 : f32 to vector<16x16xf32>
      %307 = arith.select %304, %305, %306 : vector<16x16xi1>, vector<16x16xf32>
      %c0_94 = arith.constant 0 : index
      %c0_95 = arith.constant 0 : index
      %308 = vector.load %arg13[%c0_94, %c0_95] : memref<16x16xf32, #tpu.memory_space<vmem>>, vector<16x16xf32>
      tpu.vector_store %arg13[%c0_94, %c0_95], %307 {strides = array<i32>} : memref<16x16xf32, #tpu.memory_space<vmem>>, vector<16x16xf32>,
      %c0_96 = arith.constant 0 : index
      %c0_97 = arith.constant 0 : index
      %309 = vector.load %arg1[%c0_96, %c0_97] : memref<16x128xf32, #tpu.memory_space<vmem>>, vector<16x128xf32>
      %c0_98 = arith.constant 0 : index
      %c0_99 = arith.constant 0 : index
      %310 = vector.load %arg10[%c0_98, %c0_99] : memref<16x128xf32, #tpu.memory_space<vmem>>, vector<16x128xf32>
      tpu.vector_store %arg10[%c0_98, %c0_99], %309 {strides = array<i32>} : memref<16x128xf32, #tpu.memory_space<vmem>>, vector<16x128xf32>,
    } else {
    }
    %c0 = arith.constant 0 : index
    %c0_1 = arith.constant 0 : index
    %3 = vector.load %arg10[%c0, %c0_1] : memref<16x128xf32, #tpu.memory_space<vmem>>, vector<16x128xf32>
    %c0_2 = arith.constant 0 : index
    %c0_3 = arith.constant 0 : index
    %c0_4 = arith.constant 0 : index
    %4 = vector.load %arg9[%c0_2, %c0_3, %c0_4] : memref<1x16x128xf32, #tpu.memory_space<vmem>>, vector<1x16x128xf32>
    %5 = vector.shape_cast %4 : vector<1x16x128xf32> to vector<16x128xf32>
    %6 = tpu.iota {dimensions = array<i32: 0>} : vector<16x1xi32>
    %c15_i32 = arith.constant 15 : i32
    %7 = vector.broadcast %c15_i32 : i32 to vector<16x1xi32>
    %8 = arith.cmpi slt, %6, %7 : vector<16x1xi32>
    %9 = arith.extui %8 : vector<16x1xi1> to vector<16x1xi32>
    %10 = arith.sitofp %9 : vector<16x1xi32> to vector<16x1xf32>
    %11 = arith.truncf %3 : vector<16x128xf32> to vector<16x128xbf16>
    %c0_5 = arith.constant 0 : index
    %c0_6 = arith.constant 0 : index
    %12 = vector.load %arg11[%c0_5, %c0_6] : memref<32x16xbf16, #tpu.memory_space<vmem>>, vector<32x16xbf16>
    %cst = arith.constant dense<0.000000e+00> : vector<32x128xf32>
    %13 = tpu.matmul %12, %11, %cst {dimension_numbers = #tpu.dot_dimension_numbers<[1], [0], [0], [1], [0, 0, 1, 1], [], []>} : vector<32x16xbf16>, vector<16x128xbf16>, vector<32x128xf32> -> vector<32x128xf32>
    %c0_7 = arith.constant 0 : index
    %c0_8 = arith.constant 0 : index
    %14 = vector.load %arg2[%c0_7, %c0_8] : memref<32x128xbf16, #tpu.memory_space<vmem>>, vector<32x128xbf16>
    %15 = arith.extf %14 : vector<32x128xbf16> to vector<32x128xf32>
    %16 = arith.addf %13, %15 : vector<32x128xf32>
    %cst_9 = arith.constant 0.000000e+00 : f32
    %17 = vector.broadcast %cst_9 : f32 to vector<32x128xf32>
    %18 = arith.maximumf %16, %17 : vector<32x128xf32>
    %c0_10 = arith.constant 0 : index
    %c0_11 = arith.constant 0 : index
    %19 = vector.load %arg12[%c0_10, %c0_11] : memref<16x32xbf16, #tpu.memory_space<vmem>>, vector<16x32xbf16>
    %20 = arith.truncf %18 : vector<32x128xf32> to vector<32x128xbf16>
    %cst_12 = arith.constant dense<0.000000e+00> : vector<16x128xf32>
    %21 = tpu.matmul %19, %20, %cst_12 {dimension_numbers = #tpu.dot_dimension_numbers<[1], [0], [0], [1], [0, 0, 1, 1], [], []>} : vector<16x32xbf16>, vector<32x128xbf16>, vector<16x128xf32> -> vector<16x128xf32>
    %22 = arith.addf %21, %3 : vector<16x128xf32>
    %23 = arith.truncf %22 : vector<16x128xf32> to vector<16x128xbf16>
    %c0_13 = arith.constant 0 : index
    %c0_14 = arith.constant 0 : index
    %c0_15 = arith.constant 0 : index
    %c0_16 = arith.constant 0 : index
    %24 = vector.load %arg8[%c0_13, %c0_14, %c0_15, %c0_16] : memref<1x5x128x128xbf16, #tpu.memory_space<vmem>>, vector<1x1x128x128xbf16>
    %25 = vector.shape_cast %24 : vector<1x1x128x128xbf16> to vector<128x128xbf16>
    %cst_17 = arith.constant dense<0.000000e+00> : vector<16x128xf32>
    %26 = tpu.matmul %23, %25, %cst_17 {dimension_numbers = #tpu.dot_dimension_numbers<[1], [0], [0], [1], [0, 0, 1, 1], [], []>} : vector<16x128xbf16>, vector<128x128xbf16>, vector<16x128xf32> -> vector<16x128xf32>
    %27 = vector.extract_strided_slice %5 {offsets = [0, 0], sizes = [1, 128], strides = [1, 1]} : vector<16x128xf32> to vector<1x128xf32>
    %28 = vector.broadcast %27 : vector<1x128xf32> to vector<16x128xf32>
    %29 = arith.addf %26, %28 : vector<16x128xf32>
    %cst_18 = arith.constant 0.000000e+00 : f32
    %30 = vector.broadcast %cst_18 : f32 to vector<16x128xf32>
    %31 = arith.maximumf %29, %30 : vector<16x128xf32>
    %32 = arith.truncf %31 : vector<16x128xf32> to vector<16x128xbf16>
    %c0_19 = arith.constant 0 : index
    %c1 = arith.constant 1 : index
    %c0_20 = arith.constant 0 : index
    %c0_21 = arith.constant 0 : index
    %33 = vector.load %arg8[%c0_19, %c1, %c0_20, %c0_21] : memref<1x5x128x128xbf16, #tpu.memory_space<vmem>>, vector<1x1x128x128xbf16>
    %34 = vector.shape_cast %33 : vector<1x1x128x128xbf16> to vector<128x128xbf16>
    %cst_22 = arith.constant dense<0.000000e+00> : vector<16x128xf32>
    %35 = tpu.matmul %32, %34, %cst_22 {dimension_numbers = #tpu.dot_dimension_numbers<[1], [0], [0], [1], [0, 0, 1, 1], [], []>} : vector<16x128xbf16>, vector<128x128xbf16>, vector<16x128xf32> -> vector<16x128xf32>
    %36 = vector.extract_strided_slice %5 {offsets = [1, 0], sizes = [1, 128], strides = [1, 1]} : vector<16x128xf32> to vector<1x128xf32>
    %37 = vector.broadcast %36 : vector<1x128xf32> to vector<16x128xf32>
    %38 = arith.addf %35, %37 : vector<16x128xf32>
    %39 = arith.addf %38, %3 : vector<16x128xf32>
    %40 = vector.broadcast %10 : vector<16x1xf32> to vector<16x128xf32>
    %41 = arith.mulf %39, %40 : vector<16x128xf32>
    %cst_23 = arith.constant dense<0.000000e+00> : vector<128xf32>
    %42 = vector.multi_reduction <add>, %41, %cst_23 [0] : vector<16x128xf32> to vector<128xf32>
    %43 = vector.shape_cast %42 : vector<128xf32> to vector<1x128xf32>
    %cst_24 = arith.constant 0.0666666701 : f32
    %44 = vector.broadcast %cst_24 : f32 to vector<1x128xf32>
    %45 = arith.mulf %43, %44 : vector<1x128xf32>
    %46 = vector.broadcast %45 : vector<1x128xf32> to vector<16x128xf32>
    %47 = arith.subf %39, %46 : vector<16x128xf32>
    %48 = vector.broadcast %10 : vector<16x1xf32> to vector<16x128xf32>
    %49 = arith.mulf %47, %48 : vector<16x128xf32>
    %50 = arith.mulf %49, %49 : vector<16x128xf32>
    %cst_25 = arith.constant dense<0.000000e+00> : vector<128xf32>
    %51 = vector.multi_reduction <add>, %50, %cst_25 [0] : vector<16x128xf32> to vector<128xf32>
    %52 = vector.shape_cast %51 : vector<128xf32> to vector<1x128xf32>
    %cst_26 = arith.constant 0.0666666701 : f32
    %53 = vector.broadcast %cst_26 : f32 to vector<1x128xf32>
    %54 = arith.mulf %52, %53 : vector<1x128xf32>
    %cst_27 = arith.constant 9.99999974E-6 : f32
    %55 = vector.broadcast %cst_27 : f32 to vector<1x128xf32>
    %56 = arith.addf %54, %55 : vector<1x128xf32>
    %57 = math.rsqrt %56 : vector<1x128xf32>
    %58 = vector.broadcast %45 : vector<1x128xf32> to vector<16x128xf32>
    %59 = arith.subf %39, %58 : vector<16x128xf32>
    %60 = vector.broadcast %57 : vector<1x128xf32> to vector<16x128xf32>
    %61 = arith.mulf %59, %60 : vector<16x128xf32>
    %62 = vector.extract_strided_slice %5 {offsets = [8, 0], sizes = [1, 128], strides = [1, 1]} : vector<16x128xf32> to vector<1x128xf32>
    %63 = vector.broadcast %62 : vector<1x128xf32> to vector<16x128xf32>
    %64 = arith.mulf %61, %63 : vector<16x128xf32>
    %65 = vector.extract_strided_slice %5 {offsets = [9, 0], sizes = [1, 128], strides = [1, 1]} : vector<16x128xf32> to vector<1x128xf32>
    %66 = vector.broadcast %65 : vector<1x128xf32> to vector<16x128xf32>
    %67 = arith.addf %64, %66 : vector<16x128xf32>
    %c0_28 = arith.constant 0 : index
    %c0_29 = arith.constant 0 : index
    %c0_30 = arith.constant 0 : index
    %68 = vector.load %arg7[%c0_28, %c0_29, %c0_30] : memref<1x128x384xbf16, #tpu.memory_space<vmem>>, vector<1x128x384xbf16>
    %69 = vector.shape_cast %68 : vector<1x128x384xbf16> to vector<128x384xbf16>
    %cst_31 = arith.constant dense<0.000000e+00> : vector<16x384xf32>
    %70 = tpu.matmul %11, %69, %cst_31 {dimension_numbers = #tpu.dot_dimension_numbers<[1], [0], [0], [1], [0, 0, 1, 1], [], []>} : vector<16x128xbf16>, vector<128x384xbf16>, vector<16x384xf32> -> vector<16x384xf32>
    %71 = vector.extract_strided_slice %70 {offsets = [0, 0], sizes = [16, 128], strides = [1, 1]} : vector<16x384xf32> to vector<16x128xf32>
    %72 = vector.extract_strided_slice %5 {offsets = [2, 0], sizes = [1, 128], strides = [1, 1]} : vector<16x128xf32> to vector<1x128xf32>
    %73 = vector.broadcast %72 : vector<1x128xf32> to vector<16x128xf32>
    %74 = arith.addf %71, %73 : vector<16x128xf32>
    %75 = vector.extract_strided_slice %70 {offsets = [0, 128], sizes = [16, 128], strides = [1, 1]} : vector<16x384xf32> to vector<16x128xf32>
    %76 = vector.extract_strided_slice %5 {offsets = [3, 0], sizes = [1, 128], strides = [1, 1]} : vector<16x128xf32> to vector<1x128xf32>
    %77 = vector.broadcast %76 : vector<1x128xf32> to vector<16x128xf32>
    %78 = arith.addf %75, %77 : vector<16x128xf32>
    %79 = vector.extract_strided_slice %70 {offsets = [0, 256], sizes = [16, 128], strides = [1, 1]} : vector<16x384xf32> to vector<16x128xf32>
    %80 = vector.extract_strided_slice %5 {offsets = [4, 0], sizes = [1, 128], strides = [1, 1]} : vector<16x128xf32> to vector<1x128xf32>
    %81 = vector.broadcast %80 : vector<1x128xf32> to vector<16x128xf32>
    %82 = arith.addf %79, %81 : vector<16x128xf32>
    %c0_32 = arith.constant 0 : index
    %c0_33 = arith.constant 0 : index
    %83 = vector.load %arg13[%c0_32, %c0_33] : memref<16x16xf32, #tpu.memory_space<vmem>>, vector<16x16xf32>
    %84 = tpu.iota {dimensions = array<i32: 1>} : vector<1x128xi32>
    %85 = arith.truncf %74 : vector<16x128xf32> to vector<16x128xbf16>
    %cst_34 = arith.constant 0.000000e+00 : f32
    %86 = vector.broadcast %cst_34 : f32 to vector<16x128xf32>
    %c0_i32_35 = arith.constant 0 : i32
    %87 = vector.broadcast %c0_i32_35 : i32 to vector<1x128xi32>
    %88 = arith.cmpi sge, %84, %87 : vector<1x128xi32>
    %c8_i32 = arith.constant 8 : i32
    %89 = vector.broadcast %c8_i32 : i32 to vector<1x128xi32>
    %90 = arith.cmpi slt, %84, %89 : vector<1x128xi32>
    %91 = arith.andi %88, %90 : vector<1x128xi1>
    %92 = arith.extui %91 : vector<1x128xi1> to vector<1x128xi32>
    %93 = arith.sitofp %92 : vector<1x128xi32> to vector<1x128xf32>
    %94 = vector.broadcast %93 : vector<1x128xf32> to vector<16x128xf32>
    %95 = arith.mulf %78, %94 : vector<16x128xf32>
    %96 = arith.truncf %95 : vector<16x128xf32> to vector<16x128xbf16>
    %97 = vector.broadcast %93 : vector<1x128xf32> to vector<16x128xf32>
    %98 = arith.mulf %82, %97 : vector<16x128xf32>
    %99 = arith.truncf %98 : vector<16x128xf32> to vector<16x128xbf16>
    %cst_36 = arith.constant dense<0.000000e+00> : vector<16x16xf32>
    %100 = tpu.matmul %85, %96, %cst_36 {dimension_numbers = #tpu.dot_dimension_numbers<[1], [1], [0], [0], [0, 0, 1, 0], [], []>} : vector<16x128xbf16>, vector<16x128xbf16>, vector<16x16xf32> -> vector<16x16xf32>
    %101 = arith.addf %100, %83 : vector<16x16xf32>
    %cst_37 = arith.constant dense<0xFF800000> : vector<16xf32>
    %102 = vector.multi_reduction <maximumf>, %101, %cst_37 [1] : vector<16x16xf32> to vector<16xf32>
    %103 = vector.shape_cast %102 : vector<16xf32> to vector<16x1xf32>
    %104 = vector.broadcast %103 : vector<16x1xf32> to vector<16x16xf32>
    %105 = arith.subf %101, %104 : vector<16x16xf32>
    %106 = math.exp %105 : vector<16x16xf32>
    %cst_38 = arith.constant dense<0.000000e+00> : vector<16xf32>
    %107 = vector.multi_reduction <add>, %106, %cst_38 [1] : vector<16x16xf32> to vector<16xf32>
    %108 = vector.shape_cast %107 : vector<16xf32> to vector<16x1xf32>
    %109 = tpu.reciprocal %108 {approx = true} : vector<16x1xf32> -> vector<16x1xf32>
    %110 = vector.broadcast %109 : vector<16x1xf32> to vector<16x16xf32>
    %111 = arith.mulf %106, %110 : vector<16x16xf32>
    %112 = arith.truncf %111 : vector<16x16xf32> to vector<16x16xbf16>
    %cst_39 = arith.constant dense<0.000000e+00> : vector<16x128xf32>
    %113 = tpu.matmul %112, %99, %cst_39 {dimension_numbers = #tpu.dot_dimension_numbers<[1], [0], [0], [1], [0, 0, 1, 1], [], []>} : vector<16x16xbf16>, vector<16x128xbf16>, vector<16x128xf32> -> vector<16x128xf32>
    %114 = arith.addf %86, %113 : vector<16x128xf32>
    %c8_i32_40 = arith.constant 8 : i32
    %115 = vector.broadcast %c8_i32_40 : i32 to vector<1x128xi32>
    %116 = arith.cmpi sge, %84, %115 : vector<1x128xi32>
    %c16_i32 = arith.constant 16 : i32
    %117 = vector.broadcast %c16_i32 : i32 to vector<1x128xi32>
    %118 = arith.cmpi slt, %84, %117 : vector<1x128xi32>
    %119 = arith.andi %116, %118 : vector<1x128xi1>
    %120 = arith.extui %119 : vector<1x128xi1> to vector<1x128xi32>
    %121 = arith.sitofp %120 : vector<1x128xi32> to vector<1x128xf32>
    %122 = vector.broadcast %121 : vector<1x128xf32> to vector<16x128xf32>
    %123 = arith.mulf %78, %122 : vector<16x128xf32>
    %124 = arith.truncf %123 : vector<16x128xf32> to vector<16x128xbf16>
    %125 = vector.broadcast %121 : vector<1x128xf32> to vector<16x128xf32>
    %126 = arith.mulf %82, %125 : vector<16x128xf32>
    %127 = arith.truncf %126 : vector<16x128xf32> to vector<16x128xbf16>
    %cst_41 = arith.constant dense<0.000000e+00> : vector<16x16xf32>
    %128 = tpu.matmul %85, %124, %cst_41 {dimension_numbers = #tpu.dot_dimension_numbers<[1], [1], [0], [0], [0, 0, 1, 0], [], []>} : vector<16x128xbf16>, vector<16x128xbf16>, vector<16x16xf32> -> vector<16x16xf32>
    %129 = arith.addf %128, %83 : vector<16x16xf32>
    %cst_42 = arith.constant dense<0xFF800000> : vector<16xf32>
    %130 = vector.multi_reduction <maximumf>, %129, %cst_42 [1] : vector<16x16xf32> to vector<16xf32>
    %131 = vector.shape_cast %130 : vector<16xf32> to vector<16x1xf32>
    %132 = vector.broadcast %131 : vector<16x1xf32> to vector<16x16xf32>
    %133 = arith.subf %129, %132 : vector<16x16xf32>
    %134 = math.exp %133 : vector<16x16xf32>
    %cst_43 = arith.constant dense<0.000000e+00> : vector<16xf32>
    %135 = vector.multi_reduction <add>, %134, %cst_43 [1] : vector<16x16xf32> to vector<16xf32>
    %136 = vector.shape_cast %135 : vector<16xf32> to vector<16x1xf32>
    %137 = tpu.reciprocal %136 {approx = true} : vector<16x1xf32> -> vector<16x1xf32>
    %138 = vector.broadcast %137 : vector<16x1xf32> to vector<16x16xf32>
    %139 = arith.mulf %134, %138 : vector<16x16xf32>
    %140 = arith.truncf %139 : vector<16x16xf32> to vector<16x16xbf16>
    %cst_44 = arith.constant dense<0.000000e+00> : vector<16x128xf32>
    %141 = tpu.matmul %140, %127, %cst_44 {dimension_numbers = #tpu.dot_dimension_numbers<[1], [0], [0], [1], [0, 0, 1, 1], [], []>} : vector<16x16xbf16>, vector<16x128xbf16>, vector<16x128xf32> -> vector<16x128xf32>
    %142 = arith.addf %114, %141 : vector<16x128xf32>
    %c16_i32_45 = arith.constant 16 : i32
    %143 = vector.broadcast %c16_i32_45 : i32 to vector<1x128xi32>
    %144 = arith.cmpi sge, %84, %143 : vector<1x128xi32>
    %c24_i32 = arith.constant 24 : i32
    %145 = vector.broadcast %c24_i32 : i32 to vector<1x128xi32>
    %146 = arith.cmpi slt, %84, %145 : vector<1x128xi32>
    %147 = arith.andi %144, %146 : vector<1x128xi1>
    %148 = arith.extui %147 : vector<1x128xi1> to vector<1x128xi32>
    %149 = arith.sitofp %148 : vector<1x128xi32> to vector<1x128xf32>
    %150 = vector.broadcast %149 : vector<1x128xf32> to vector<16x128xf32>
    %151 = arith.mulf %78, %150 : vector<16x128xf32>
    %152 = arith.truncf %151 : vector<16x128xf32> to vector<16x128xbf16>
    %153 = vector.broadcast %149 : vector<1x128xf32> to vector<16x128xf32>
    %154 = arith.mulf %82, %153 : vector<16x128xf32>
    %155 = arith.truncf %154 : vector<16x128xf32> to vector<16x128xbf16>
    %cst_46 = arith.constant dense<0.000000e+00> : vector<16x16xf32>
    %156 = tpu.matmul %85, %152, %cst_46 {dimension_numbers = #tpu.dot_dimension_numbers<[1], [1], [0], [0], [0, 0, 1, 0], [], []>} : vector<16x128xbf16>, vector<16x128xbf16>, vector<16x16xf32> -> vector<16x16xf32>
    %157 = arith.addf %156, %83 : vector<16x16xf32>
    %cst_47 = arith.constant dense<0xFF800000> : vector<16xf32>
    %158 = vector.multi_reduction <maximumf>, %157, %cst_47 [1] : vector<16x16xf32> to vector<16xf32>
    %159 = vector.shape_cast %158 : vector<16xf32> to vector<16x1xf32>
    %160 = vector.broadcast %159 : vector<16x1xf32> to vector<16x16xf32>
    %161 = arith.subf %157, %160 : vector<16x16xf32>
    %162 = math.exp %161 : vector<16x16xf32>
    %cst_48 = arith.constant dense<0.000000e+00> : vector<16xf32>
    %163 = vector.multi_reduction <add>, %162, %cst_48 [1] : vector<16x16xf32> to vector<16xf32>
    %164 = vector.shape_cast %163 : vector<16xf32> to vector<16x1xf32>
    %165 = tpu.reciprocal %164 {approx = true} : vector<16x1xf32> -> vector<16x1xf32>
    %166 = vector.broadcast %165 : vector<16x1xf32> to vector<16x16xf32>
    %167 = arith.mulf %162, %166 : vector<16x16xf32>
    %168 = arith.truncf %167 : vector<16x16xf32> to vector<16x16xbf16>
    %cst_49 = arith.constant dense<0.000000e+00> : vector<16x128xf32>
    %169 = tpu.matmul %168, %155, %cst_49 {dimension_numbers = #tpu.dot_dimension_numbers<[1], [0], [0], [1], [0, 0, 1, 1], [], []>} : vector<16x16xbf16>, vector<16x128xbf16>, vector<16x128xf32> -> vector<16x128xf32>
    %170 = arith.addf %142, %169 : vector<16x128xf32>
    %c24_i32_50 = arith.constant 24 : i32
    %171 = vector.broadcast %c24_i32_50 : i32 to vector<1x128xi32>
    %172 = arith.cmpi sge, %84, %171 : vector<1x128xi32>
    %c32_i32 = arith.constant 32 : i32
    %173 = vector.broadcast %c32_i32 : i32 to vector<1x128xi32>
    %174 = arith.cmpi slt, %84, %173 : vector<1x128xi32>
    %175 = arith.andi %172, %174 : vector<1x128xi1>
    %176 = arith.extui %175 : vector<1x128xi1> to vector<1x128xi32>
    %177 = arith.sitofp %176 : vector<1x128xi32> to vector<1x128xf32>
    %178 = vector.broadcast %177 : vector<1x128xf32> to vector<16x128xf32>
    %179 = arith.mulf %78, %178 : vector<16x128xf32>
    %180 = arith.truncf %179 : vector<16x128xf32> to vector<16x128xbf16>
    %181 = vector.broadcast %177 : vector<1x128xf32> to vector<16x128xf32>
    %182 = arith.mulf %82, %181 : vector<16x128xf32>
    %183 = arith.truncf %182 : vector<16x128xf32> to vector<16x128xbf16>
    %cst_51 = arith.constant dense<0.000000e+00> : vector<16x16xf32>
    %184 = tpu.matmul %85, %180, %cst_51 {dimension_numbers = #tpu.dot_dimension_numbers<[1], [1], [0], [0], [0, 0, 1, 0], [], []>} : vector<16x128xbf16>, vector<16x128xbf16>, vector<16x16xf32> -> vector<16x16xf32>
    %185 = arith.addf %184, %83 : vector<16x16xf32>
    %cst_52 = arith.constant dense<0xFF800000> : vector<16xf32>
    %186 = vector.multi_reduction <maximumf>, %185, %cst_52 [1] : vector<16x16xf32> to vector<16xf32>
    %187 = vector.shape_cast %186 : vector<16xf32> to vector<16x1xf32>
    %188 = vector.broadcast %187 : vector<16x1xf32> to vector<16x16xf32>
    %189 = arith.subf %185, %188 : vector<16x16xf32>
    %190 = math.exp %189 : vector<16x16xf32>
    %cst_53 = arith.constant dense<0.000000e+00> : vector<16xf32>
    %191 = vector.multi_reduction <add>, %190, %cst_53 [1] : vector<16x16xf32> to vector<16xf32>
    %192 = vector.shape_cast %191 : vector<16xf32> to vector<16x1xf32>
    %193 = tpu.reciprocal %192 {approx = true} : vector<16x1xf32> -> vector<16x1xf32>
    %194 = vector.broadcast %193 : vector<16x1xf32> to vector<16x16xf32>
    %195 = arith.mulf %190, %194 : vector<16x16xf32>
    %196 = arith.truncf %195 : vector<16x16xf32> to vector<16x16xbf16>
    %cst_54 = arith.constant dense<0.000000e+00> : vector<16x128xf32>
    %197 = tpu.matmul %196, %183, %cst_54 {dimension_numbers = #tpu.dot_dimension_numbers<[1], [0], [0], [1], [0, 0, 1, 1], [], []>} : vector<16x16xbf16>, vector<16x128xbf16>, vector<16x128xf32> -> vector<16x128xf32>
    %198 = arith.addf %170, %197 : vector<16x128xf32>
    %199 = arith.truncf %198 : vector<16x128xf32> to vector<16x128xbf16>
    %c0_55 = arith.constant 0 : index
    %c2 = arith.constant 2 : index
    %c0_56 = arith.constant 0 : index
    %c0_57 = arith.constant 0 : index
    %200 = vector.load %arg8[%c0_55, %c2, %c0_56, %c0_57] : memref<1x5x128x128xbf16, #tpu.memory_space<vmem>>, vector<1x1x128x128xbf16>
    %201 = vector.shape_cast %200 : vector<1x1x128x128xbf16> to vector<128x128xbf16>
    %cst_58 = arith.constant dense<0.000000e+00> : vector<16x128xf32>
    %202 = tpu.matmul %199, %201, %cst_58 {dimension_numbers = #tpu.dot_dimension_numbers<[1], [0], [0], [1], [0, 0, 1, 1], [], []>} : vector<16x128xbf16>, vector<128x128xbf16>, vector<16x128xf32> -> vector<16x128xf32>
    %203 = vector.extract_strided_slice %5 {offsets = [5, 0], sizes = [1, 128], strides = [1, 1]} : vector<16x128xf32> to vector<1x128xf32>
    %204 = vector.broadcast %203 : vector<1x128xf32> to vector<16x128xf32>
    %205 = arith.addf %202, %204 : vector<16x128xf32>
    %206 = arith.addf %205, %3 : vector<16x128xf32>
    %207 = vector.broadcast %10 : vector<16x1xf32> to vector<16x128xf32>
    %208 = arith.mulf %206, %207 : vector<16x128xf32>
    %cst_59 = arith.constant dense<0.000000e+00> : vector<128xf32>
    %209 = vector.multi_reduction <add>, %208, %cst_59 [0] : vector<16x128xf32> to vector<128xf32>
    %210 = vector.shape_cast %209 : vector<128xf32> to vector<1x128xf32>
    %cst_60 = arith.constant 0.0666666701 : f32
    %211 = vector.broadcast %cst_60 : f32 to vector<1x128xf32>
    %212 = arith.mulf %210, %211 : vector<1x128xf32>
    %213 = vector.broadcast %212 : vector<1x128xf32> to vector<16x128xf32>
    %214 = arith.subf %206, %213 : vector<16x128xf32>
    %215 = vector.broadcast %10 : vector<16x1xf32> to vector<16x128xf32>
    %216 = arith.mulf %214, %215 : vector<16x128xf32>
    %217 = arith.mulf %216, %216 : vector<16x128xf32>
    %cst_61 = arith.constant dense<0.000000e+00> : vector<128xf32>
    %218 = vector.multi_reduction <add>, %217, %cst_61 [0] : vector<16x128xf32> to vector<128xf32>
    %219 = vector.shape_cast %218 : vector<128xf32> to vector<1x128xf32>
    %cst_62 = arith.constant 0.0666666701 : f32
    %220 = vector.broadcast %cst_62 : f32 to vector<1x128xf32>
    %221 = arith.mulf %219, %220 : vector<1x128xf32>
    %cst_63 = arith.constant 9.99999974E-6 : f32
    %222 = vector.broadcast %cst_63 : f32 to vector<1x128xf32>
    %223 = arith.addf %221, %222 : vector<1x128xf32>
    %224 = math.rsqrt %223 : vector<1x128xf32>
    %225 = vector.broadcast %212 : vector<1x128xf32> to vector<16x128xf32>
    %226 = arith.subf %206, %225 : vector<16x128xf32>
    %227 = vector.broadcast %224 : vector<1x128xf32> to vector<16x128xf32>
    %228 = arith.mulf %226, %227 : vector<16x128xf32>
    %229 = vector.extract_strided_slice %5 {offsets = [10, 0], sizes = [1, 128], strides = [1, 1]} : vector<16x128xf32> to vector<1x128xf32>
    %230 = vector.broadcast %229 : vector<1x128xf32> to vector<16x128xf32>
    %231 = arith.mulf %228, %230 : vector<16x128xf32>
    %232 = vector.extract_strided_slice %5 {offsets = [11, 0], sizes = [1, 128], strides = [1, 1]} : vector<16x128xf32> to vector<1x128xf32>
    %233 = vector.broadcast %232 : vector<1x128xf32> to vector<16x128xf32>
    %234 = arith.addf %231, %233 : vector<16x128xf32>
    %235 = arith.addf %67, %234 : vector<16x128xf32>
    %236 = arith.truncf %235 : vector<16x128xf32> to vector<16x128xbf16>
    %c0_64 = arith.constant 0 : index
    %c3 = arith.constant 3 : index
    %c0_65 = arith.constant 0 : index
    %c0_66 = arith.constant 0 : index
    %237 = vector.load %arg8[%c0_64, %c3, %c0_65, %c0_66] : memref<1x5x128x128xbf16, #tpu.memory_space<vmem>>, vector<1x1x128x128xbf16>
    %238 = vector.shape_cast %237 : vector<1x1x128x128xbf16> to vector<128x128xbf16>
    %cst_67 = arith.constant dense<0.000000e+00> : vector<16x128xf32>
    %239 = tpu.matmul %236, %238, %cst_67 {dimension_numbers = #tpu.dot_dimension_numbers<[1], [0], [0], [1], [0, 0, 1, 1], [], []>} : vector<16x128xbf16>, vector<128x128xbf16>, vector<16x128xf32> -> vector<16x128xf32>
    %240 = vector.extract_strided_slice %5 {offsets = [6, 0], sizes = [1, 128], strides = [1, 1]} : vector<16x128xf32> to vector<1x128xf32>
    %241 = vector.broadcast %240 : vector<1x128xf32> to vector<16x128xf32>
    %242 = arith.addf %239, %241 : vector<16x128xf32>
    %cst_68 = arith.constant 0.000000e+00 : f32
    %243 = vector.broadcast %cst_68 : f32 to vector<16x128xf32>
    %244 = arith.maximumf %242, %243 : vector<16x128xf32>
    %245 = arith.truncf %244 : vector<16x128xf32> to vector<16x128xbf16>
    %c0_69 = arith.constant 0 : index
    %c4 = arith.constant 4 : index
    %c0_70 = arith.constant 0 : index
    %c0_71 = arith.constant 0 : index
    %246 = vector.load %arg8[%c0_69, %c4, %c0_70, %c0_71] : memref<1x5x128x128xbf16, #tpu.memory_space<vmem>>, vector<1x1x128x128xbf16>
    %247 = vector.shape_cast %246 : vector<1x1x128x128xbf16> to vector<128x128xbf16>
    %cst_72 = arith.constant dense<0.000000e+00> : vector<16x128xf32>
    %248 = tpu.matmul %245, %247, %cst_72 {dimension_numbers = #tpu.dot_dimension_numbers<[1], [0], [0], [1], [0, 0, 1, 1], [], []>} : vector<16x128xbf16>, vector<128x128xbf16>, vector<16x128xf32> -> vector<16x128xf32>
    %249 = vector.extract_strided_slice %5 {offsets = [7, 0], sizes = [1, 128], strides = [1, 1]} : vector<16x128xf32> to vector<1x128xf32>
    %250 = vector.broadcast %249 : vector<1x128xf32> to vector<16x128xf32>
    %251 = arith.addf %248, %250 : vector<16x128xf32>
    %252 = arith.addf %235, %251 : vector<16x128xf32>
    %253 = vector.broadcast %10 : vector<16x1xf32> to vector<16x128xf32>
    %254 = arith.mulf %252, %253 : vector<16x128xf32>
    %cst_73 = arith.constant dense<0.000000e+00> : vector<128xf32>
    %255 = vector.multi_reduction <add>, %254, %cst_73 [0] : vector<16x128xf32> to vector<128xf32>
    %256 = vector.shape_cast %255 : vector<128xf32> to vector<1x128xf32>
    %cst_74 = arith.constant 0.0666666701 : f32
    %257 = vector.broadcast %cst_74 : f32 to vector<1x128xf32>
    %258 = arith.mulf %256, %257 : vector<1x128xf32>
    %259 = vector.broadcast %258 : vector<1x128xf32> to vector<16x128xf32>
    %260 = arith.subf %252, %259 : vector<16x128xf32>
    %261 = vector.broadcast %10 : vector<16x1xf32> to vector<16x128xf32>
    %262 = arith.mulf %260, %261 : vector<16x128xf32>
    %263 = arith.mulf %262, %262 : vector<16x128xf32>
    %cst_75 = arith.constant dense<0.000000e+00> : vector<128xf32>
    %264 = vector.multi_reduction <add>, %263, %cst_75 [0] : vector<16x128xf32> to vector<128xf32>
    %265 = vector.shape_cast %264 : vector<128xf32> to vector<1x128xf32>
    %cst_76 = arith.constant 0.0666666701 : f32
    %266 = vector.broadcast %cst_76 : f32 to vector<1x128xf32>
    %267 = arith.mulf %265, %266 : vector<1x128xf32>
    %cst_77 = arith.constant 9.99999974E-6 : f32
    %268 = vector.broadcast %cst_77 : f32 to vector<1x128xf32>
    %269 = arith.addf %267, %268 : vector<1x128xf32>
    %270 = math.rsqrt %269 : vector<1x128xf32>
    %271 = vector.broadcast %258 : vector<1x128xf32> to vector<16x128xf32>
    %272 = arith.subf %252, %271 : vector<16x128xf32>
    %273 = vector.broadcast %270 : vector<1x128xf32> to vector<16x128xf32>
    %274 = arith.mulf %272, %273 : vector<16x128xf32>
    %275 = vector.extract_strided_slice %5 {offsets = [12, 0], sizes = [1, 128], strides = [1, 1]} : vector<16x128xf32> to vector<1x128xf32>
    %276 = vector.broadcast %275 : vector<1x128xf32> to vector<16x128xf32>
    %277 = arith.mulf %274, %276 : vector<16x128xf32>
    %278 = vector.extract_strided_slice %5 {offsets = [13, 0], sizes = [1, 128], strides = [1, 1]} : vector<16x128xf32> to vector<1x128xf32>
    %279 = vector.broadcast %278 : vector<1x128xf32> to vector<16x128xf32>
    %280 = arith.addf %277, %279 : vector<16x128xf32>
    %281 = vector.broadcast %10 : vector<16x1xf32> to vector<16x128xf32>
    %282 = arith.mulf %280, %281 : vector<16x128xf32>
    %c0_78 = arith.constant 0 : index
    %c0_79 = arith.constant 0 : index
    %283 = vector.load %arg10[%c0_78, %c0_79] : memref<16x128xf32, #tpu.memory_space<vmem>>, vector<16x128xf32>
    tpu.vector_store %arg10[%c0_78, %c0_79], %282 {strides = array<i32>} : memref<16x128xf32, #tpu.memory_space<vmem>>, vector<16x128xf32>,
    return
  }
  func.func @transform_0(%arg0: i32) -> (i32, i32) {
    %c0_i32 = arith.constant 0 : i32
    %c0_i32_0 = arith.constant 0 : i32
    %c0_i32_1 = arith.constant 0 : i32
    return %c0_i32, %c0_i32_0 : i32, i32
  }
  func.func @transform_1(%arg0: i32) -> (i32, i32) {
    %c0_i32 = arith.constant 0 : i32
    %c0_i32_0 = arith.constant 0 : i32
    %c0_i32_1 = arith.constant 0 : i32
    return %c0_i32, %c0_i32_0 : i32, i32
  }
  func.func @transform_2(%arg0: i32) -> (i32, i32) {
    %c0_i32 = arith.constant 0 : i32
    %c0_i32_0 = arith.constant 0 : i32
    %c0_i32_1 = arith.constant 0 : i32
    return %c0_i32, %c0_i32_0 : i32, i32
  }
  func.func @transform_3(%arg0: i32) -> (i32, i32) {
    %c0_i32 = arith.constant 0 : i32
    %c0_i32_0 = arith.constant 0 : i32
    %c0_i32_1 = arith.constant 0 : i32
    return %c0_i32, %c0_i32_0 : i32, i32
  }
  func.func @transform_4(%arg0: i32) -> (i32, i32) {
    %c0_i32 = arith.constant 0 : i32
    %c0_i32_0 = arith.constant 0 : i32
    %c0_i32_1 = arith.constant 0 : i32
    return %c0_i32, %c0_i32_0 : i32, i32
  }
  func.func @transform_5(%arg0: i32) -> (i32, i32) {
    %c0_i32 = arith.constant 0 : i32
    %c0_i32_0 = arith.constant 0 : i32
    %c0_i32_1 = arith.constant 0 : i32
    return %c0_i32, %c0_i32_0 : i32, i32
  }
  func.func @transform_6(%arg0: i32) -> (i32, i32, i32) {
    %c0_i32 = arith.constant 0 : i32
    %c0_i32_0 = arith.constant 0 : i32
    %c0_i32_1 = arith.constant 0 : i32
    return %arg0, %c0_i32, %c0_i32_0 : i32, i32, i32
  }
  func.func @transform_7(%arg0: i32) -> (i32, i32, i32, i32) {
    %c0_i32 = arith.constant 0 : i32
    %c0_i32_0 = arith.constant 0 : i32
    %c0_i32_1 = arith.constant 0 : i32
    %c0_i32_2 = arith.constant 0 : i32
    return %arg0, %c0_i32, %c0_i32_0, %c0_i32_1 : i32, i32, i32, i32
  }
  func.func @transform_8(%arg0: i32) -> (i32, i32, i32) {
    %c0_i32 = arith.constant 0 : i32
    %c0_i32_0 = arith.constant 0 : i32
    %c0_i32_1 = arith.constant 0 : i32
    return %arg0, %c0_i32, %c0_i32_0 : i32, i32, i32
  }
  func.func @transform_9(%arg0: i32) -> (i32, i32) {
    %c0_i32 = arith.constant 0 : i32
    %c0_i32_0 = arith.constant 0 : i32
    %c0_i32_1 = arith.constant 0 : i32
    return %c0_i32, %c0_i32_0 : i32, i32
  }
}

</mosaic_0001>

<llo_original>
// kernel: gps_forward.5
$region0: #{gps_forward.5}
  #allocation0 [shape = 'u32[]', space=smem, size = 0x4, offset = 0x4, fixed_abs, tag = 'smem constant byte address 0x4 - core index']
  #allocation1 [shape = 'u32[144,128]{1,0:T(1,128)}', space=vmem, size = 0x12000, scoped, tag = 'internal scratch']
  %s0 = inlined_call_operand.vmem [shape: f32[16,128], index: 0, kind: input, shape index: {}]
  %s1 = inlined_call_operand.vmem [shape: s32[1,16], index: 1, kind: input, shape index: {}]
  %s2 = inlined_call_operand.vmem [shape: bf16[3,128,128], index: 2, kind: input, shape index: {}]
  %s3 = inlined_call_operand.vmem [shape: f32[3,128], index: 3, kind: input, shape index: {}]
  %s4 = inlined_call_operand.vmem [shape: f32[8,128], index: 4, kind: output, shape index: {}]
  %s5 = sld [smem:[#allocation0]]
  $region26: #{gps_forward.5} parent=0
    _
  %s7 = ssub.s32 1, %s5
  %s8 = scalar_select 0, %s7, %s5
  // Predicated region
  $region2: #{gps_forward.5} parent=0 // pred_check
    _
  $region3: #{gps_forward.5} parent=0 // pred_check_branch
    %10 = sbr.rel (0) target = $region5
  $region4: #{gps_forward.5} parent=0 // pred_region
    _
  $region5: #{gps_forward.5} parent=0 // pred_fallthru
    _
  // Predicated region
  $region6: #{gps_forward.5} parent=0 // pred_check
    _
  $region7: #{gps_forward.5} parent=0 // pred_check_branch
    %12 = sbr.rel (0) target = $region9
  $region8: #{gps_forward.5} parent=0 // pred_region
    _
  $region9: #{gps_forward.5} parent=0 // pred_fallthru
    _
  // Predicated region
  $region10: #{gps_forward.5} parent=0 // pred_check
    _
  $region11: #{gps_forward.5} parent=0 // pred_check_branch
    %14 = sbr.rel (0) target = $region13
  $region12: #{gps_forward.5} parent=0 // pred_region
    _
  $region13: #{gps_forward.5} parent=0 // pred_fallthru
    _
  // Predicated region
  $region14: #{gps_forward.5} parent=0 // pred_check
    _
  $region15: #{gps_forward.5} parent=0 // pred_check_branch
    %16 = sbr.rel (0) target = $region17
  $region16: #{gps_forward.5} parent=0 // pred_region
    _
  $region17: #{gps_forward.5} parent=0 // pred_fallthru
    _
  %v18 = vld [vmem:[%s3] sm:$0x7]
  %v19 = vlaneseq
  %v20 = vshrl.u32 %v19, 7
  %v21 = vld [vmem:[%s1] sm:$0x1]
  %v22 = vlaneseq
  %v23 = vshrl.u32 %v22, 7
  %v24 = vsub.s32 0, %v23
  %v25 = vrot.slane %v21, %v24
  %vm26 = vcmp.eq.s32.totalorder %v20, %v25
  %v27 = vsel %vm26, 1, 0
  %v28 = vcvt.s32.f32 %v27
  %v29 = vpack.c.bf16 %v28, %v28
  %v30 = vld [vmem:[%s0] sm:$0xff]
  %v31 = vld [vmem:[%s0 + $0x8] sm:$0xff]
  %v32 = vpack.c.bf16 %v31, %v30
  %vm33 = vcmask 130048
  %v35 = vsel %vm33, %v29, 0
  %37 = vmatprep.subr.bf16.mxu0 0
  %38 = vmatpush1.bf16.msra.mxu0 %v32
  %39 = vmatprep.subr.bf16.mxu0 0
  %40 = vmatpush1.bf16.msra.mxu0 0
  %41 = vmatprep.subr.bf16.mxu0 0
  %42 = vmatpush1.bf16.msra.mxu0 0
  %43 = vmatprep.subr.bf16.mxu0 0
  %44 = vmatpush1.bf16.msra.mxu0 0
  %45 = vmatprep.subr.bf16.mxu0 0
  %46 = vmatpush1.bf16.msra.mxu0 0
  %47 = vmatprep.subr.bf16.mxu0 0
  %48 = vmatpush1.bf16.msra.mxu0 0
  %49 = vmatprep.subr.bf16.mxu0 0
  %50 = vmatpush1.bf16.msra.mxu0 0
  %51 = vmatprep.subr.bf16.mxu0 0
  %52 = vmatpush1.bf16.msra.mxu0 0
  %53 = vmatprep.subr.bf16.mxu0 0
  %54 = vmatpush1.bf16.msra.mxu0 0
  %55 = vmatprep.subr.bf16.mxu0 0
  %56 = vmatpush1.bf16.msra.mxu0 0
  %57 = vmatprep.subr.bf16.mxu0 0
  %58 = vmatpush1.bf16.msra.mxu0 0
  %59 = vmatprep.subr.bf16.mxu0 0
  %60 = vmatpush1.bf16.msra.mxu0 0
  %61 = vmatprep.subr.bf16.mxu0 0
  %62 = vmatpush1.bf16.msra.mxu0 0
  %63 = vmatprep.subr.bf16.mxu0 0
  %64 = vmatpush1.bf16.msra.mxu0 0
  %65 = vmatprep.subr.bf16.mxu0 0
  %66 = vmatpush1.bf16.msra.mxu0 0
  %67 = vmatprep.subr.bf16.mxu0 0
  %68 = vmatpush1.bf16.msra.mxu0 0
  %69 = vmatprep.mubr.bf16.mxu0 0
  %70 = vmatmul.mubr.bf16.gmra.mrb[0].mxu0 %v35
  %v71 = vpop.f32.mrb[0].mxu0
  %v72 = vadd.f32 0.0, %v71
  %v73 = vpop.f32.mrb[0].mxu0
  %v74 = vpop.f32.mrb[0].mxu0
  %v75 = vpop.f32.mrb[0].mxu0
  %76 = vdwg.mxu0
  %v77 = vpack.c.bf16 %v72, %v72
  %v78 = vld [vmem:[%s2] sm:$0xf]
  %v79 = vld [vmem:[%s2 + $0x4] sm:$0xf]
  %v80 = vld [vmem:[%s2 + $0x8] sm:$0xf]
  %v81 = vld [vmem:[%s2 + $0xc] sm:$0xf]
  %v82 = vld [vmem:[%s2 + $0x10] sm:$0xf]
  %v83 = vld [vmem:[%s2 + $0x14] sm:$0xf]
  %v84 = vld [vmem:[%s2 + $0x18] sm:$0xf]
  %v85 = vld [vmem:[%s2 + $0x1c] sm:$0xf]
  %v86 = vld [vmem:[%s2 + $0x20] sm:$0xf]
  %v87 = vld [vmem:[%s2 + $0x24] sm:$0xf]
  %v88 = vld [vmem:[%s2 + $0x28] sm:$0xf]
  %v89 = vld [vmem:[%s2 + $0x2c] sm:$0xf]
  %v90 = vld [vmem:[%s2 + $0x30] sm:$0xf]
  %v91 = vld [vmem:[%s2 + $0x34] sm:$0xf]
  %v92 = vld [vmem:[%s2 + $0x38] sm:$0xf]
  %v93 = vld [vmem:[%s2 + $0x3c] sm:$0xf]
  %v94 = vlaneseq
  %v95 = vshrl.u32 %v94, 7
  %v96 = vsub.s32 0, %v95
  %v97 = vrot.slane %v18, %v96
  %v114 = vunpack.c.l.b16 %v78
  %v115 = vunpack.c.l.b16 %v79
  %v116 = vunpack.c.l.b16 %v80
  %v117 = vunpack.c.l.b16 %v81
  %v118 = vunpack.c.l.b16 %v82
  %v119 = vunpack.c.l.b16 %v83
  %v120 = vunpack.c.l.b16 %v84
  %v121 = vunpack.c.l.b16 %v85
  %v122 = vunpack.c.l.b16 %v86
  %v123 = vunpack.c.l.b16 %v87
  %v124 = vunpack.c.l.b16 %v88
  %v125 = vunpack.c.l.b16 %v89
  %v126 = vunpack.c.l.b16 %v90
  %v127 = vunpack.c.l.b16 %v91
  %v128 = vunpack.c.l.b16 %v92
  %v129 = vunpack.c.l.b16 %v93
  %v130 = vpack.c.b16 %v115, %v114
  %v131 = vpack.c.b16 %v117, %v116
  %v132 = vpack.c.b16 %v119, %v118
  %v133 = vpack.c.b16 %v121, %v120
  %v134 = vpack.c.b16 %v123, %v122
  %v135 = vpack.c.b16 %v125, %v124
  %v136 = vpack.c.b16 %v127, %v126
  %v137 = vpack.c.b16 %v129, %v128
  %146 = vmatprep.subr.bf16.mxu0 0
  %147 = vmatpush1.bf16.msra.mxu0 %v130
  %148 = vmatprep.subr.bf16.mxu0 0
  %149 = vmatpush1.bf16.msra.mxu0 %v131
  %150 = vmatprep.subr.bf16.mxu0 0
  %151 = vmatpush1.bf16.msra.mxu0 %v132
  %152 = vmatprep.subr.bf16.mxu0 0
  %153 = vmatpush1.bf16.msra.mxu0 %v133
  %154 = vmatprep.subr.bf16.mxu0 0
  %155 = vmatpush1.bf16.msra.mxu0 %v134
  %156 = vmatprep.subr.bf16.mxu0 0
  %157 = vmatpush1.bf16.msra.mxu0 %v135
  %158 = vmatprep.subr.bf16.mxu0 0
  %159 = vmatpush1.bf16.msra.mxu0 %v136
  %160 = vmatprep.subr.bf16.mxu0 0
  %161 = vmatpush1.bf16.msra.mxu0 %v137
  %162 = vmatprep.subr.bf16.mxu0 0
  %163 = vmatpush1.bf16.msra.mxu0 0
  %164 = vmatprep.subr.bf16.mxu0 0
  %165 = vmatpush1.bf16.msra.mxu0 0
  %166 = vmatprep.subr.bf16.mxu0 0
  %167 = vmatpush1.bf16.msra.mxu0 0
  %168 = vmatprep.subr.bf16.mxu0 0
  %169 = vmatpush1.bf16.msra.mxu0 0
  %170 = vmatprep.subr.bf16.mxu0 0
  %171 = vmatpush1.bf16.msra.mxu0 0
  %172 = vmatprep.subr.bf16.mxu0 0
  %173 = vmatpush1.bf16.msra.mxu0 0
  %174 = vmatprep.subr.bf16.mxu0 0
  %175 = vmatpush1.bf16.msra.mxu0 0
  %176 = vmatprep.subr.bf16.mxu0 0
  %177 = vmatpush1.bf16.msra.mxu0 0
  %178 = vmatprep.mubr.bf16.mxu0 0
  %179 = vmatmul.mubr.bf16.gmra.mrb[0].mxu0 %v77
  %v180 = vpop.f32.mrb[0].mxu0
  %v181 = vadd.f32 %v97, %v180
  %v182 = vpop.f32.mrb[0].mxu0
  %v183 = vpop.f32.mrb[0].mxu0
  %v184 = vpop.f32.mrb[0].mxu0
  %185 = vdwg.mxu0
  %v186 = vmax.f32 %v181, 0.0
  %v187 = vpack.c.bf16 %v186, %v186
  %s188 = scalar_lea.vmem %s2, 64
  %v189 = vld [vmem:[%s188] sm:$0xf]
  %v190 = vld [vmem:[%s188 + $0x4] sm:$0xf]
  %v191 = vld [vmem:[%s188 + $0x8] sm:$0xf]
  %v192 = vld [vmem:[%s188 + $0xc] sm:$0xf]
  %v193 = vld [vmem:[%s188 + $0x10] sm:$0xf]
  %v194 = vld [vmem:[%s188 + $0x14] sm:$0xf]
  %v195 = vld [vmem:[%s188 + $0x18] sm:$0xf]
  %v196 = vld [vmem:[%s188 + $0x1c] sm:$0xf]
  %v197 = vld [vmem:[%s188 + $0x20] sm:$0xf]
  %v198 = vld [vmem:[%s188 + $0x24] sm:$0xf]
  %v199 = vld [vmem:[%s188 + $0x28] sm:$0xf]
  %v200 = vld [vmem:[%s188 + $0x2c] sm:$0xf]
  %v201 = vld [vmem:[%s188 + $0x30] sm:$0xf]
  %v202 = vld [vmem:[%s188 + $0x34] sm:$0xf]
  %v203 = vld [vmem:[%s188 + $0x38] sm:$0xf]
  %v204 = vld [vmem:[%s188 + $0x3c] sm:$0xf]
  %v205 = vlaneseq
  %v206 = vshrl.u32 %v205, 7
  %v207 = vsub.s32 1, %v206
  %v208 = vrot.slane %v18, %v207
  %v225 = vunpack.c.l.b16 %v189
  %v226 = vunpack.c.l.b16 %v190
  %v227 = vunpack.c.l.b16 %v191
  %v228 = vunpack.c.l.b16 %v192
  %v229 = vunpack.c.l.b16 %v193
  %v230 = vunpack.c.l.b16 %v194
  %v231 = vunpack.c.l.b16 %v195
  %v232 = vunpack.c.l.b16 %v196
  %v233 = vunpack.c.l.b16 %v197
  %v234 = vunpack.c.l.b16 %v198
  %v235 = vunpack.c.l.b16 %v199
  %v236 = vunpack.c.l.b16 %v200
  %v237 = vunpack.c.l.b16 %v201
  %v238 = vunpack.c.l.b16 %v202
  %v239 = vunpack.c.l.b16 %v203
  %v240 = vunpack.c.l.b16 %v204
  %v241 = vpack.c.b16 %v226, %v225
  %v242 = vpack.c.b16 %v228, %v227
  %v243 = vpack.c.b16 %v230, %v229
  %v244 = vpack.c.b16 %v232, %v231
  %v245 = vpack.c.b16 %v234, %v233
  %v246 = vpack.c.b16 %v236, %v235
  %v247 = vpack.c.b16 %v238, %v237
  %v248 = vpack.c.b16 %v240, %v239
  %257 = vmatprep.subr.bf16.mxu0 0
  %258 = vmatpush1.bf16.msra.mxu0 %v241
  %259 = vmatprep.subr.bf16.mxu0 0
  %260 = vmatpush1.bf16.msra.mxu0 %v242
  %261 = vmatprep.subr.bf16.mxu0 0
  %262 = vmatpush1.bf16.msra.mxu0 %v243
  %263 = vmatprep.subr.bf16.mxu0 0
  %264 = vmatpush1.bf16.msra.mxu0 %v244
  %265 = vmatprep.subr.bf16.mxu0 0
  %266 = vmatpush1.bf16.msra.mxu0 %v245
  %267 = vmatprep.subr.bf16.mxu0 0
  %268 = vmatpush1.bf16.msra.mxu0 %v246
  %269 = vmatprep.subr.bf16.mxu0 0
  %270 = vmatpush1.bf16.msra.mxu0 %v247
  %271 = vmatprep.subr.bf16.mxu0 0
  %272 = vmatpush1.bf16.msra.mxu0 %v248
  %273 = vmatprep.subr.bf16.mxu0 0
  %274 = vmatpush1.bf16.msra.mxu0 0
  %275 = vmatprep.subr.bf16.mxu0 0
  %276 = vmatpush1.bf16.msra.mxu0 0
  %277 = vmatprep.subr.bf16.mxu0 0
  %278 = vmatpush1.bf16.msra.mxu0 0
  %279 = vmatprep.subr.bf16.mxu0 0
  %280 = vmatpush1.bf16.msra.mxu0 0
  %281 = vmatprep.subr.bf16.mxu0 0
  %282 = vmatpush1.bf16.msra.mxu0 0
  %283 = vmatprep.subr.bf16.mxu0 0
  %284 = vmatpush1.bf16.msra.mxu0 0
  %285 = vmatprep.subr.bf16.mxu0 0
  %286 = vmatpush1.bf16.msra.mxu0 0
  %287 = vmatprep.subr.bf16.mxu0 0
  %288 = vmatpush1.bf16.msra.mxu0 0
  %289 = vmatprep.mubr.bf16.mxu0 0
  %290 = vmatmul.mubr.bf16.gmra.mrb[0].mxu0 %v187
  %v291 = vpop.f32.mrb[0].mxu0
  %v292 = vadd.f32 %v208, %v291
  %v293 = vpop.f32.mrb[0].mxu0
  %v294 = vpop.f32.mrb[0].mxu0
  %v295 = vpop.f32.mrb[0].mxu0
  %296 = vdwg.mxu0
  %v297 = vmax.f32 %v292, 0.0
  %v298 = vpack.c.bf16 %v297, %v297
  %s299 = scalar_lea.vmem %s2, 128
  %v300 = vld [vmem:[%s299] sm:$0xf]
  %v301 = vld [vmem:[%s299 + $0x4] sm:$0xf]
  %v302 = vld [vmem:[%s299 + $0x8] sm:$0xf]
  %v303 = vld [vmem:[%s299 + $0xc] sm:$0xf]
  %v304 = vld [vmem:[%s299 + $0x10] sm:$0xf]
  %v305 = vld [vmem:[%s299 + $0x14] sm:$0xf]
  %v306 = vld [vmem:[%s299 + $0x18] sm:$0xf]
  %v307 = vld [vmem:[%s299 + $0x1c] sm:$0xf]
  %v308 = vld [vmem:[%s299 + $0x20] sm:$0xf]
  %v309 = vld [vmem:[%s299 + $0x24] sm:$0xf]
  %v310 = vld [vmem:[%s299 + $0x28] sm:$0xf]
  %v311 = vld [vmem:[%s299 + $0x2c] sm:$0xf]
  %v312 = vld [vmem:[%s299 + $0x30] sm:$0xf]
  %v313 = vld [vmem:[%s299 + $0x34] sm:$0xf]
  %v314 = vld [vmem:[%s299 + $0x38] sm:$0xf]
  %v315 = vld [vmem:[%s299 + $0x3c] sm:$0xf]
  %v316 = vlaneseq
  %v317 = vshrl.u32 %v316, 7
  %v318 = vsub.s32 2, %v317
  %v319 = vrot.slane %v18, %v318
  %v336 = vunpack.c.l.b16 %v300
  %v337 = vunpack.c.l.b16 %v301
  %v338 = vunpack.c.l.b16 %v302
  %v339 = vunpack.c.l.b16 %v303
  %v340 = vunpack.c.l.b16 %v304
  %v341 = vunpack.c.l.b16 %v305
  %v342 = vunpack.c.l.b16 %v306
  %v343 = vunpack.c.l.b16 %v307
  %v344 = vunpack.c.l.b16 %v308
  %v345 = vunpack.c.l.b16 %v309
  %v346 = vunpack.c.l.b16 %v310
  %v347 = vunpack.c.l.b16 %v311
  %v348 = vunpack.c.l.b16 %v312
  %v349 = vunpack.c.l.b16 %v313
  %v350 = vunpack.c.l.b16 %v314
  %v351 = vunpack.c.l.b16 %v315
  %v352 = vpack.c.b16 %v337, %v336
  %v353 = vpack.c.b16 %v339, %v338
  %v354 = vpack.c.b16 %v341, %v340
  %v355 = vpack.c.b16 %v343, %v342
  %v356 = vpack.c.b16 %v345, %v344
  %v357 = vpack.c.b16 %v347, %v346
  %v358 = vpack.c.b16 %v349, %v348
  %v359 = vpack.c.b16 %v351, %v350
  %368 = vmatprep.subr.bf16.mxu0 0
  %369 = vmatpush1.bf16.msra.mxu0 %v352
  %370 = vmatprep.subr.bf16.mxu0 0
  %371 = vmatpush1.bf16.msra.mxu0 %v353
  %372 = vmatprep.subr.bf16.mxu0 0
  %373 = vmatpush1.bf16.msra.mxu0 %v354
  %374 = vmatprep.subr.bf16.mxu0 0
  %375 = vmatpush1.bf16.msra.mxu0 %v355
  %376 = vmatprep.subr.bf16.mxu0 0
  %377 = vmatpush1.bf16.msra.mxu0 %v356
  %378 = vmatprep.subr.bf16.mxu0 0
  %379 = vmatpush1.bf16.msra.mxu0 %v357
  %380 = vmatprep.subr.bf16.mxu0 0
  %381 = vmatpush1.bf16.msra.mxu0 %v358
  %382 = vmatprep.subr.bf16.mxu0 0
  %383 = vmatpush1.bf16.msra.mxu0 %v359
  %384 = vmatprep.subr.bf16.mxu0 0
  %385 = vmatpush1.bf16.msra.mxu0 0
  %386 = vmatprep.subr.bf16.mxu0 0
  %387 = vmatpush1.bf16.msra.mxu0 0
  %388 = vmatprep.subr.bf16.mxu0 0
  %389 = vmatpush1.bf16.msra.mxu0 0
  %390 = vmatprep.subr.bf16.mxu0 0
  %391 = vmatpush1.bf16.msra.mxu0 0
  %392 = vmatprep.subr.bf16.mxu0 0
  %393 = vmatpush1.bf16.msra.mxu0 0
  %394 = vmatprep.subr.bf16.mxu0 0
  %395 = vmatpush1.bf16.msra.mxu0 0
  %396 = vmatprep.subr.bf16.mxu0 0
  %397 = vmatpush1.bf16.msra.mxu0 0
  %398 = vmatprep.subr.bf16.mxu0 0
  %399 = vmatpush1.bf16.msra.mxu0 0
  %400 = vmatprep.mubr.bf16.mxu0 0
  %401 = vmatmul.mubr.bf16.gmra.mrb[0].mxu0 %v298
  %v402 = vpop.f32.mrb[0].mxu0
  %v403 = vadd.f32 %v319, %v402
  %v404 = vpop.f32.mrb[0].mxu0
  %v405 = vpop.f32.mrb[0].mxu0
  %v406 = vpop.f32.mrb[0].mxu0
  %407 = vdwg.mxu0
  %408 = vst [vmem:[%s4] sm:$0xff] %v403
  // Predicated region
  $region18: #{gps_forward.5} parent=0 // pred_check
    _
  $region19: #{gps_forward.5} parent=0 // pred_check_branch
    %410 = sbr.rel (0) target = $region21
  $region20: #{gps_forward.5} parent=0 // pred_region
    _
  $region21: #{gps_forward.5} parent=0 // pred_fallthru
    _
  // Predicated region
  $region22: #{gps_forward.5} parent=0 // pred_check
    _
  $region23: #{gps_forward.5} parent=0 // pred_check_branch
    %412 = sbr.rel (0) target = $region25
  $region24: #{gps_forward.5} parent=0 // pred_region
    _
  $region25: #{gps_forward.5} parent=0 // pred_fallthru
    _

// kernel: gps_forward.3
$region0: #{gps_forward.3}
  #allocation0 [shape = 'u32[]', space=smem, size = 0x4, offset = 0x4, fixed_abs, tag = 'smem constant byte address 0x4 - core index']
  #allocation1 [shape = 'u32[144,128]{1,0:T(1,128)}', space=vmem, size = 0x12000, scoped, tag = 'internal scratch']
  %s0 = inlined_call_operand.vmem [shape: s32[16,1], index: 0, kind: input, shape index: {}]
  %s1 = inlined_call_operand.vmem [shape: f32[16,128], index: 1, kind: input, shape index: {}]
  %s2 = inlined_call_operand.vmem [shape: s32[32,1], index: 2, kind: input, shape index: {}]
  %s3 = inlined_call_operand.vmem [shape: bf16[28,128], index: 3, kind: input, shape index: {}]
  %s4 = inlined_call_operand.vmem [shape: bf16[128,128], index: 4, kind: input, shape index: {}]
  %s5 = inlined_call_operand.vmem [shape: f32[1,128], index: 5, kind: input, shape index: {}]
  %s6 = inlined_call_operand.vmem [shape: f32[2,128], index: 6, kind: input, shape index: {}]
  %s7 = inlined_call_operand.hbm [shape: bf16[4,128], index: 7, kind: input, shape index: {}]
  %s8 = inlined_call_operand.vmem [shape: f32[16,128], index: 8, kind: output, shape index: {0}]
  %s9 = inlined_call_operand.vmem [shape: bf16[32,128], index: 9, kind: output, shape index: {1}]
  %10 = xla_tuple %s8, %s9
  %s11 = sld [smem:[#allocation0]]
  $region54: #{gps_forward.3} parent=0
    _
  %s13 = ssub.s32 1, %s11
  %s14 = scalar_select 0, %s13, %s11
  $region1: #{gps_forward.3} parent=0
    #allocation2 [shape = 'u8[1024]{0}', space=vmem, size = 0x400, scoped, tag = 'input window, operand 7, single buffered']
    #allocation3 [shape = 's32[1]{0}', space=sflag, size = 0x4, scoped, tag = 'scoped memory for gps_forward.3']
    %15 = vsyncpa [#allocation3], 0
    // Predicated region
    $region2: #{gps_forward.3} parent=1 // pred_check
      _
    $region3: #{gps_forward.3} parent=1 // pred_check_branch
      %17 = sbr.rel (0) target = $region5
    $region4: #{gps_forward.3} parent=1 // pred_region
      _
    $region5: #{gps_forward.3} parent=1 // pred_fallthru
      _
    // Predicated region
    $region6: #{gps_forward.3} parent=1 // pred_check
      _
    $region7: #{gps_forward.3} parent=1 // pred_check_branch
      %19 = sbr.rel (0) target = $region9
    $region8: #{gps_forward.3} parent=1 // pred_region
      _
    $region9: #{gps_forward.3} parent=1 // pred_fallthru
      _
    // Predicated region
    $region10: #{gps_forward.3} parent=1 // pred_check
      _
    $region11: #{gps_forward.3} parent=1 // pred_check_branch
      %21 = sbr.rel (0) target = $region13
    $region12: #{gps_forward.3} parent=1 // pred_region
      _
    $region13: #{gps_forward.3} parent=1 // pred_fallthru
      _
    // Predicated region
    $region14: #{gps_forward.3} parent=1 // pred_check
      _
    $region15: #{gps_forward.3} parent=1 // pred_check_branch
      %23 = sbr.rel (0) target = $region17
    $region16: #{gps_forward.3} parent=1 // pred_region
      _
    $region17: #{gps_forward.3} parent=1 // pred_fallthru
      _
    // Predicated region
    $region18: #{gps_forward.3} parent=1 // pred_check
      _
    $region19: #{gps_forward.3} parent=1 // pred_check_branch
      %25 = sbr.rel (0) target = $region21
    $region20: #{gps_forward.3} parent=1 // pred_region
      _
    $region21: #{gps_forward.3} parent=1 // pred_fallthru
      _
    // Predicated region
    $region22: #{gps_forward.3} parent=1 // pred_check
      _
    $region23: #{gps_forward.3} parent=1 // pred_check_branch
      %27 = sbr.rel (0) target = $region25
    $region24: #{gps_forward.3} parent=1 // pred_region
      _
    $region25: #{gps_forward.3} parent=1 // pred_fallthru
      _
    // Predicated region
    $region26: #{gps_forward.3} parent=1 // pred_check
      _
    $region27: #{gps_forward.3} parent=1 // pred_check_branch
      %29 = sbr.rel (0) target = $region29
    $region28: #{gps_forward.3} parent=1 // pred_region
      _
    $region29: #{gps_forward.3} parent=1 // pred_fallthru
      _
    // Predicated region
    $region30: #{gps_forward.3} parent=1 // pred_check
      _
    $region31: #{gps_forward.3} parent=1 // pred_check_branch
      %31 = sbr.rel (0) target = $region33
    $region32: #{gps_forward.3} parent=1 // pred_region
      %s33 = ssub.s32 32, 32
      %34 = vsyncadd [#allocation3], %s33
      %s36 = sshll.u32 [#allocation2], 4
      %s37 = int_to_ptr.vmem [resolvable:$true] %s36
      %39 = dma.hbm_to_vmem [thread:$0]  %s7, 32, %s37, [#allocation3]
    $region33: #{gps_forward.3} parent=1 // pred_fallthru
      _
    // Predicated region
    $region34: #{gps_forward.3} parent=1 // pred_check
      _
    $region35: #{gps_forward.3} parent=1 // pred_check_branch
      %41 = sbr.rel (0) target = $region37
    $region36: #{gps_forward.3} parent=1 // pred_region
      %42 = dma.done [#allocation3], 32
    $region37: #{gps_forward.3} parent=1 // pred_fallthru
      _
    %v44 = vld [vmem:[%s1] sm:$0xff]
    %v45 = vld [vmem:[%s1 + $0x8] sm:$0xff]
    %v46 = vlaneseq
    %v47 = vshrl.u32 %v46, 7
    %v48 = vadd.s32 %v47, 8
    %vm49 = vcmp.lt.s32.totalorder %v47, 15
    %vm50 = vcmp.lt.s32.totalorder %v48, 15
    %v51 = vsel %vm49, 1, 0
    %v52 = vsel %vm50, 1, 0
    %v53 = vcvt.s32.f32 %v51
    %v54 = vcvt.s32.f32 %v52
    %v55 = vmul.f32 %v44, %v53
    %v56 = vmul.f32 %v45, %v54
    %v57 = vadd.f32 %v55, %v56
    %v58 = vrot.slane %v57, 4
    %v59 = vadd.f32 %v57, %v58
    %v60 = vrot.slane %v59, 2
    %v61 = vadd.f32 %v59, %v60
    %v62 = vrot.slane %v61, 1
    %v63 = vadd.f32 %v61, %v62
    %v64 = vmul.f32 %v63, 0.06666667
    %v65 = vsub.f32 %v44, %v64
    %v66 = vsub.f32 %v45, %v64
    %v67 = vmul.f32 %v65, %v53
    %v68 = vmul.f32 %v66, %v54
    %v69 = vmul.f32 %v67, %v67
    %v70 = vmul.f32 %v68, %v68
    %v71 = vadd.f32 %v69, %v70
    %v72 = vrot.slane %v71, 4
    %v73 = vadd.f32 %v71, %v72
    %v74 = vrot.slane %v73, 2
    %v75 = vadd.f32 %v73, %v74
    %v76 = vrot.slane %v75, 1
    %v77 = vadd.f32 %v75, %v76
    %v78 = vmul.f32 %v77, 0.06666667
    %v79 = vadd.f32 %v78, 1e-05
    %v80 = vrsqrt.pop %v79
    %v81 = vld [vmem:[%s6] sm:$0x3]
    %v82 = vmul.f32 %v65, %v80
    %v83 = vmul.f32 %v66, %v80
    %v84 = vlaneseq
    %v85 = vshrl.u32 %v84, 7
    %v86 = vsub.s32 0, %v85
    %v87 = vrot.slane %v81, %v86
    %v88 = vmul.f32 %v82, %v87
    %v89 = vmul.f32 %v83, %v87
    %v90 = vlaneseq
    %v91 = vshrl.u32 %v90, 7
    %v92 = vsub.s32 1, %v91
    %v93 = vrot.slane %v81, %v92
    %v94 = vadd.f32 %v88, %v93
    %v95 = vadd.f32 %v89, %v93
    %v96 = vpack.c.bf16 %v95, %v94
    %v97 = vld [vmem:[%s4] sm:$0xf]
    %v98 = vld [vmem:[%s4 + $0x4] sm:$0xf]
    %v99 = vld [vmem:[%s4 + $0x8] sm:$0xf]
    %v100 = vld [vmem:[%s4 + $0xc] sm:$0xf]
    %v101 = vld [vmem:[%s4 + $0x10] sm:$0xf]
    %v102 = vld [vmem:[%s4 + $0x14] sm:$0xf]
    %v103 = vld [vmem:[%s4 + $0x18] sm:$0xf]
    %v104 = vld [vmem:[%s4 + $0x1c] sm:$0xf]
    %v105 = vld [vmem:[%s4 + $0x20] sm:$0xf]
    %v106 = vld [vmem:[%s4 + $0x24] sm:$0xf]
    %v107 = vld [vmem:[%s4 + $0x28] sm:$0xf]
    %v108 = vld [vmem:[%s4 + $0x2c] sm:$0xf]
    %v109 = vld [vmem:[%s4 + $0x30] sm:$0xf]
    %v110 = vld [vmem:[%s4 + $0x34] sm:$0xf]
    %v111 = vld [vmem:[%s4 + $0x38] sm:$0xf]
    %v112 = vld [vmem:[%s4 + $0x3c] sm:$0xf]
    %v113 = vld [vmem:[%s5] sm:$0x1]
    %v115 = vlaneseq
    %v116 = vshrl.u32 %v115, 7
    %v117 = vsub.s32 0, %v116
    %v118 = vrot.slane %v113, %v117
    %v136 = vunpack.c.l.b16 %v97
    %v137 = vunpack.c.l.b16 %v98
    %v138 = vunpack.c.l.b16 %v99
    %v139 = vunpack.c.l.b16 %v100
    %v140 = vunpack.c.l.b16 %v101
    %v141 = vunpack.c.l.b16 %v102
    %v142 = vunpack.c.l.b16 %v103
    %v143 = vunpack.c.l.b16 %v104
    %v144 = vunpack.c.l.b16 %v105
    %v145 = vunpack.c.l.b16 %v106
    %v146 = vunpack.c.l.b16 %v107
    %v147 = vunpack.c.l.b16 %v108
    %v148 = vunpack.c.l.b16 %v109
    %v149 = vunpack.c.l.b16 %v110
    %v150 = vunpack.c.l.b16 %v111
    %v151 = vunpack.c.l.b16 %v112
    %v152 = vpack.c.b16 %v137, %v136
    %v153 = vpack.c.b16 %v139, %v138
    %v154 = vpack.c.b16 %v141, %v140
    %v155 = vpack.c.b16 %v143, %v142
    %v156 = vpack.c.b16 %v145, %v144
    %v157 = vpack.c.b16 %v147, %v146
    %v158 = vpack.c.b16 %v149, %v148
    %v159 = vpack.c.b16 %v151, %v150
    %168 = vmatprep.subr.bf16.mxu0 0
    %169 = vmatpush1.bf16.msra.mxu0 %v152
    %170 = vmatprep.subr.bf16.mxu0 0
    %171 = vmatpush1.bf16.msra.mxu0 %v153
    %172 = vmatprep.subr.bf16.mxu0 0
    %173 = vmatpush1.bf16.msra.mxu0 %v154
    %174 = vmatprep.subr.bf16.mxu0 0
    %175 = vmatpush1.bf16.msra.mxu0 %v155
    %176 = vmatprep.subr.bf16.mxu0 0
    %177 = vmatpush1.bf16.msra.mxu0 %v156
    %178 = vmatprep.subr.bf16.mxu0 0
    %179 = vmatpush1.bf16.msra.mxu0 %v157
    %180 = vmatprep.subr.bf16.mxu0 0
    %181 = vmatpush1.bf16.msra.mxu0 %v158
    %182 = vmatprep.subr.bf16.mxu0 0
    %183 = vmatpush1.bf16.msra.mxu0 %v159
    %184 = vmatprep.subr.bf16.mxu0 0
    %185 = vmatpush1.bf16.msra.mxu0 0
    %186 = vmatprep.subr.bf16.mxu0 0
    %187 = vmatpush1.bf16.msra.mxu0 0
    %188 = vmatprep.subr.bf16.mxu0 0
    %189 = vmatpush1.bf16.msra.mxu0 0
    %190 = vmatprep.subr.bf16.mxu0 0
    %191 = vmatpush1.bf16.msra.mxu0 0
    %192 = vmatprep.subr.bf16.mxu0 0
    %193 = vmatpush1.bf16.msra.mxu0 0
    %194 = vmatprep.subr.bf16.mxu0 0
    %195 = vmatpush1.bf16.msra.mxu0 0
    %196 = vmatprep.subr.bf16.mxu0 0
    %197 = vmatpush1.bf16.msra.mxu0 0
    %198 = vmatprep.subr.bf16.mxu0 0
    %199 = vmatpush1.bf16.msra.mxu0 0
    %200 = vmatprep.mubr.bf16.mxu0 0
    %201 = vmatmul.mubr.bf16.gmra.mrb[0].mxu0 %v96
    %v202 = vpop.f32.mrb[0].mxu0
    %v203 = vadd.f32 %v118, %v202
    %v204 = vpop.f32.mrb[0].mxu0
    %v205 = vpop.f32.mrb[0].mxu0
    %v206 = vadd.f32 %v118, %v205
    %v207 = vpop.f32.mrb[0].mxu0
    %208 = vdwg.mxu0
    %v209 = vlaneseq
    %v210 = vand.u32 %v209, 127
    %v211 = vld [vmem:[%s0] sm:$0xff]
    %v212 = vld [vmem:[%s0 + $0x8] sm:$0xff]
    %213 = vset.pattern.permute.xlu0 0
    %214 = vperm.xlu0 %213, %v211
    %v215 = vpop.permute.xlu0 %214
    %216 = vset.pattern.permute.xlu0 0
    %217 = vperm.xlu0 %216, %v212
    %v218 = vpop.permute.xlu0 %217
    %vm219 = vcmp.eq.s32.totalorder %v210, %v215
    %vm220 = vcmp.eq.s32.totalorder %v210, %v218
    %v221 = vsel %vm219, 1, 0
    %v222 = vsel %vm220, 1, 0
    %v223 = vcvt.s32.f32 %v221
    %v224 = vcvt.s32.f32 %v222
    %v225 = vpack.c.bf16 %v224, %v223
    %v226 = vld [vmem:[%s3] sm:$0xf]
    %v227 = vld [vmem:[%s3 + $0x4] sm:$0xf]
    %v228 = vld [vmem:[%s3 + $0x8] sm:$0xf]
    %v229 = vld [vmem:[%s3 + $0xc] sm:$0x3]
    %v234 = vunpack.c.l.b16 %v226
    %v235 = vunpack.c.l.b16 %v227
    %v236 = vunpack.c.l.b16 %v228
    %v237 = vunpack.c.l.b16 %v229
    %v238 = vpack.c.b16 %v235, %v234
    %v239 = vpack.c.b16 %v237, %v236
    %vm241 = vcmask 228352
    %v243 = vsel %vm241, %v225, 0
    %vm245 = vcmask 1045504
    %v247 = vsel %vm245, %v239, 0
    %249 = vmatprep.subr.bf16.mxu0 0
    %250 = vmatpush1.bf16.msra.mxu0 %v238
    %251 = vmatprep.subr.bf16.mxu0 0
    %252 = vmatpush1.bf16.msra.mxu0 %v247
    %253 = vmatprep.subr.bf16.mxu0 0
    %254 = vmatpush1.bf16.msra.mxu0 0
    %255 = vmatprep.subr.bf16.mxu0 0
    %256 = vmatpush1.bf16.msra.mxu0 0
    %257 = vmatprep.subr.bf16.mxu0 0
    %258 = vmatpush1.bf16.msra.mxu0 0
    %259 = vmatprep.subr.bf16.mxu0 0
    %260 = vmatpush1.bf16.msra.mxu0 0
    %261 = vmatprep.subr.bf16.mxu0 0
    %262 = vmatpush1.bf16.msra.mxu0 0
    %263 = vmatprep.subr.bf16.mxu0 0
    %264 = vmatpush1.bf16.msra.mxu0 0
    %265 = vmatprep.subr.bf16.mxu0 0
    %266 = vmatpush1.bf16.msra.mxu0 0
    %267 = vmatprep.subr.bf16.mxu0 0
    %268 = vmatpush1.bf16.msra.mxu0 0
    %269 = vmatprep.subr.bf16.mxu0 0
    %270 = vmatpush1.bf16.msra.mxu0 0
    %271 = vmatprep.subr.bf16.mxu0 0
    %272 = vmatpush1.bf16.msra.mxu0 0
    %273 = vmatprep.subr.bf16.mxu0 0
    %274 = vmatpush1.bf16.msra.mxu0 0
    %275 = vmatprep.subr.bf16.mxu0 0
    %276 = vmatpush1.bf16.msra.mxu0 0
    %277 = vmatprep.subr.bf16.mxu0 0
    %278 = vmatpush1.bf16.msra.mxu0 0
    %279 = vmatprep.subr.bf16.mxu0 0
    %280 = vmatpush1.bf16.msra.mxu0 0
    %281 = vmatprep.mubr.bf16.mxu0 0
    %282 = vmatmul.mubr.bf16.gmra.mrb[0].mxu0 %v243
    %v283 = vpop.f32.mrb[0].mxu0
    %v284 = vadd.f32 %v203, %v283
    %v285 = vpop.f32.mrb[0].mxu0
    %v286 = vpop.f32.mrb[0].mxu0
    %v287 = vadd.f32 %v206, %v286
    %v288 = vpop.f32.mrb[0].mxu0
    %289 = vdwg.mxu0
    %v290 = vmul.f32 %v284, %v53
    %v291 = vmul.f32 %v287, %v54
    %292 = vst [vmem:[%s8] sm:$0xff] %v290
    %293 = vst [vmem:[%s8 + $0x8] sm:$0xff] %v291
    %v294 = vld [vmem:[%s2] sm:$0xff]
    %v295 = vld [vmem:[%s2 + $0x8] sm:$0xff]
    %v296 = vld [vmem:[%s2 + $0x10] sm:$0xff]
    %v297 = vld [vmem:[%s2 + $0x18] sm:$0xff]
    %298 = vset.pattern.permute.xlu0 0
    %299 = vperm.xlu0 %298, %v294
    %v300 = vpop.permute.xlu0 %299
    %301 = vset.pattern.permute.xlu0 0
    %302 = vperm.xlu0 %301, %v295
    %v303 = vpop.permute.xlu0 %302
    %304 = vset.pattern.permute.xlu0 0
    %305 = vperm.xlu0 %304, %v296
    %v306 = vpop.permute.xlu0 %305
    %307 = vset.pattern.permute.xlu0 0
    %308 = vperm.xlu0 %307, %v297
    %v309 = vpop.permute.xlu0 %308
    %vm310 = vcmp.eq.s32.totalorder %v210, %v300
    %vm311 = vcmp.eq.s32.totalorder %v210, %v303
    %vm312 = vcmp.eq.s32.totalorder %v210, %v306
    %vm313 = vcmp.eq.s32.totalorder %v210, %v309
    %v314 = vsel %vm310, 1, 0
    %v315 = vsel %vm311, 1, 0
    %v316 = vsel %vm312, 1, 0
    %v317 = vsel %vm313, 1, 0
    %v318 = vcvt.s32.f32 %v314
    %v319 = vcvt.s32.f32 %v315
    %v320 = vcvt.s32.f32 %v316
    %v321 = vcvt.s32.f32 %v317
    %v322 = vpack.c.bf16 %v319, %v318
    %v323 = vpack.c.bf16 %v321, %v320
    %v324 = vld [vmem:[#allocation2] sm:$0x3]
    %vm325 = vcmask 31744
    %v327 = vsel %vm325, %v322, 0
    %v330 = vsel %vm325, %v323, 0
    %vm332 = vcmask 1041408
    %v334 = vsel %vm332, %v324, 0
    %336 = vmatprep.subr.bf16.mxu0 0
    %337 = vmatpush1.bf16.msra.mxu0 %v334
    %338 = vmatprep.subr.bf16.mxu0 0
    %339 = vmatpush1.bf16.msra.mxu0 0
    %340 = vmatprep.subr.bf16.mxu0 0
    %341 = vmatpush1.bf16.msra.mxu0 0
    %342 = vmatprep.subr.bf16.mxu0 0
    %343 = vmatpush1.bf16.msra.mxu0 0
    %344 = vmatprep.subr.bf16.mxu0 0
    %345 = vmatpush1.bf16.msra.mxu0 0
    %346 = vmatprep.subr.bf16.mxu0 0
    %347 = vmatpush1.bf16.msra.mxu0 0
    %348 = vmatprep.subr.bf16.mxu0 0
    %349 = vmatpush1.bf16.msra.mxu0 0
    %350 = vmatprep.subr.bf16.mxu0 0
    %351 = vmatpush1.bf16.msra.mxu0 0
    %352 = vmatprep.subr.bf16.mxu0 0
    %353 = vmatpush1.bf16.msra.mxu0 0
    %354 = vmatprep.subr.bf16.mxu0 0
    %355 = vmatpush1.bf16.msra.mxu0 0
    %356 = vmatprep.subr.bf16.mxu0 0
    %357 = vmatpush1.bf16.msra.mxu0 0
    %358 = vmatprep.subr.bf16.mxu0 0
    %359 = vmatpush1.bf16.msra.mxu0 0
    %360 = vmatprep.subr.bf16.mxu0 0
    %361 = vmatpush1.bf16.msra.mxu0 0
    %362 = vmatprep.subr.bf16.mxu0 0
    %363 = vmatpush1.bf16.msra.mxu0 0
    %364 = vmatprep.subr.bf16.mxu0 0
    %365 = vmatpush1.bf16.msra.mxu0 0
    %366 = vmatprep.subr.bf16.mxu0 0
    %367 = vmatpush1.bf16.msra.mxu0 0
    %368 = vmatprep.mubr.bf16.mxu0 0
    %369 = vmatmul.mubr.bf16.gmra.mrb[0].mxu0 %v327
    %v370 = vpop.f32.mrb[0].mxu0
    %v371 = vadd.f32 0.0, %v370
    %v372 = vpop.f32.mrb[0].mxu0
    %v373 = vpop.f32.mrb[0].mxu0
    %v374 = vadd.f32 0.0, %v373
    %v375 = vpop.f32.mrb[0].mxu0
    %376 = vmatprep.mubr.bf16.mxu0 0
    %377 = vmatmul.mubr.bf16.gmra.mrb[0].mxu0 %v330
    %v378 = vpop.f32.mrb[0].mxu0
    %v379 = vadd.f32 0.0, %v378
    %v380 = vpop.f32.mrb[0].mxu0
    %v381 = vpop.f32.mrb[0].mxu0
    %v382 = vadd.f32 0.0, %v381
    %v383 = vpop.f32.mrb[0].mxu0
    %384 = vdwg.mxu0
    %v385 = vpack.c.bf16 %v374, %v371
    %v386 = vpack.c.bf16 %v382, %v379
    %v389 = vunpack.c.l.b16 %v385
    %v390 = vunpack.c.h.b16 %v385
    %v391 = vunpack.c.l.b16 %v386
    %v392 = vunpack.c.h.b16 %v386
    %v393 = vpack.c.b16 %v389, %v389
    %v394 = vpack.c.b16 %v390, %v390
    %v395 = vpack.c.b16 %v391, %v391
    %v396 = vpack.c.b16 %v392, %v392
    %401 = vst [vmem:[%s9] sm:$0xf] %v393
    %402 = vst [vmem:[%s9 + $0x4] sm:$0xf] %v394
    %403 = vst [vmem:[%s9 + $0x8] sm:$0xf] %v395
    %404 = vst [vmem:[%s9 + $0xc] sm:$0xf] %v396
    // Predicated region
    $region38: #{gps_forward.3} parent=1 // pred_check
      _
    $region39: #{gps_forward.3} parent=1 // pred_check_branch
      %406 = sbr.rel (0) target = $region41
    $region40: #{gps_forward.3} parent=1 // pred_region
      _
    $region41: #{gps_forward.3} parent=1 // pred_fallthru
      _
    // Predicated region
    $region42: #{gps_forward.3} parent=1 // pred_check
      _
    $region43: #{gps_forward.3} parent=1 // pred_check_branch
      %408 = sbr.rel (0) target = $region45
    $region44: #{gps_forward.3} parent=1 // pred_region
      _
    $region45: #{gps_forward.3} parent=1 // pred_fallthru
      _
    // Predicated region
    $region46: #{gps_forward.3} parent=1 // pred_check
      _
    $region47: #{gps_forward.3} parent=1 // pred_check_branch
      %410 = sbr.rel (0) target = $region49
    $region48: #{gps_forward.3} parent=1 // pred_region
      _
    $region49: #{gps_forward.3} parent=1 // pred_fallthru
      _
    // Predicated region
    $region50: #{gps_forward.3} parent=1 // pred_check
      _
    $region51: #{gps_forward.3} parent=1 // pred_check_branch
      %412 = sbr.rel (0) target = $region53
    $region52: #{gps_forward.3} parent=1 // pred_region
      _
    $region53: #{gps_forward.3} parent=1 // pred_fallthru
      _
    %413 = vsyncpa [#allocation3], 1

// kernel: gps_forward.4
$region0: #{gps_forward.4}
  #allocation0 [shape = 'u32[]', space=smem, size = 0x4, offset = 0x4, fixed_abs, tag = 'smem constant byte address 0x4 - core index']
  #allocation1 [shape = 'u32[144,128]{1,0:T(1,128)}', space=vmem, size = 0x12000, scoped, tag = 'internal scratch']
  #allocation2 [shape = 'bf16[32,16]{1,0:T(16,128)(2,1)}', space=vmem, size = 0x2000, scoped, tag = 'scratch operand']
  #allocation3 [shape = 'bf16[16,32]{1,0:T(16,128)(2,1)}', space=vmem, size = 0x1000, scoped, tag = 'scratch operand']
  #allocation4 [shape = 'f32[16,16]{1,0:T(8,128)}', space=vmem, size = 0x2000, scoped, tag = 'scratch operand']
  %s0 = inlined_call_operand.vmem [shape: f32[16,128], index: 0, kind: input, shape index: {}]
  %s1 = inlined_call_operand.vmem [shape: bf16[32,128], index: 1, kind: input, shape index: {}]
  %s2 = inlined_call_operand.vmem [shape: s32[16,1], index: 2, kind: input, shape index: {}]
  %s3 = inlined_call_operand.vmem [shape: s32[1,16], index: 3, kind: input, shape index: {}]
  %s4 = inlined_call_operand.vmem [shape: s32[32,1], index: 4, kind: input, shape index: {}]
  %s5 = inlined_call_operand.vmem [shape: s32[1,32], index: 5, kind: input, shape index: {}]
  %s6 = inlined_call_operand.vmem [shape: bf16[2,128,384], index: 6, kind: input, shape index: {}]
  %s7 = inlined_call_operand.hbm [shape: bf16[2,5,128,128], index: 7, kind: input, shape index: {}]
  %s8 = inlined_call_operand.vmem [shape: f32[2,16,128], index: 8, kind: input, shape index: {}]
  %s9 = inlined_call_operand.vmem [shape: f32[16,128], index: 9, kind: output, shape index: {}]
  %s10 = sld [smem:[#allocation0]]
  $region77: #{gps_forward.4} parent=0
    _
  %s12 = ssub.s32 1, %s10
  %s13 = scalar_select 0, %s12, %s10
  $region1: #{gps_forward.4} parent=0
    #allocation5 [shape = 'u8[327680]{0}', space=vmem, size = 0x50000, scoped, tag = 'input window, operand 7']
    #allocation6 [shape = 's32[2]{0}', space=sflag, size = 0x8, scoped, tag = 'scoped memory for gps_forward.4']
    %14 = vsyncpa [#allocation6], 0
    %s15 = scalar_lea.sflag [#allocation6], 1
    %16 = vsyncpa %s15, 0
    loop: start=0, step=1, limit=4
    $region2: #{gps_forward.4} parent=1 // loop_pre_header
      _
    $region3: #{gps_forward.4} parent=1 // loop_header
      %s18 = sphi 0, %s22
      %p19 = scmp.ge.s32.totalorder %s18, 4
      %s26 = sphi 0, %s26
      %s28 = sphi 0, %s26
      %s29 = sphi 0, %s28
      %s43 = sphi 0, %s29
      %s47 = sphi 0, %s47
      %s49 = sphi 0, %s47
      %s50 = sphi 0, %s49
      %s64 = sphi 0, %s50
      %s68 = sphi 0, %s68
      %s70 = sphi 0, %s68
      %s71 = sphi 0, %s70
      %s85 = sphi 0, %s71
      %s89 = sphi 0, %s89
      %s91 = sphi 0, %s89
      %s92 = sphi 0, %s91
      %s106 = sphi 0, %s92
      %s110 = sphi 0, %s110
      %s112 = sphi 0, %s110
      %s113 = sphi 0, %s112
      %s127 = sphi 0, %s113
      %s131 = sphi 0, %s131
      %s133 = sphi 0, %s131
      %s134 = sphi 0, %s133
      %s148 = sphi 0, %s134
      %s154 = sphi 0, %s156
      %s157 = sphi 0, %s154
      %s158 = sphi 0, %s157
      %s174 = sphi 0, %s158
      %s180 = sphi 0, %s182
      %s183 = sphi 0, %s180
      %s184 = sphi 0, %s183
      %s200 = sphi 0, %s184
      %s206 = sphi 0, %s208
      %s209 = sphi 0, %s206
      %s210 = sphi 0, %s209
      %s226 = sphi 0, %s210
      %s230 = sphi 0, %s230
      %s232 = sphi 0, %s230
      %s233 = sphi 0, %s232
      %s247 = sphi 0, %s233
    $region4: #{gps_forward.4} parent=1 // loop_header_branch
      %21 = sbr.rel (%p19) target = $region8
    $region5: #{gps_forward.4} parent=1 // loop_body
      %s23 = ssub.s32 %s18, 1
      %s24 = ssub.s32 %s18, 2
      %s25 = sadd.s32 %s18, 1
      %s27 = sadd.s32 %s26, 1
      %p30 = scmp.eq.s32.totalorder %s18, 1
      %p31 = scmp.ne.s32.totalorder %s26, %s28
      %p32 = scmp.eq.s32.totalorder %s18, 0
      %p33 = por %p31, %p32
      %p34 = scmp.ne.s32.totalorder %s26, %s28
      %p35 = scmp.eq.s32.totalorder %s23, 1
      %p36 = por %p34, %p35
      %p37 = scmp.ne.s32.totalorder %s28, %s29
      %p38 = scmp.eq.s32.totalorder %s23, 0
      %p39 = por %p37, %p38
      %p40 = scmp.ne.s32.totalorder %s28, %s29
      %p41 = scmp.eq.s32.totalorder %s24, 1
      %p42 = por %p40, %p41
      %p44 = scmp.ne.s32.totalorder %s29, %s43
      %p45 = scmp.eq.s32.totalorder %s24, 0
      %p46 = por %p44, %p45
      %s48 = sadd.s32 %s47, 1
      %p51 = scmp.eq.s32.totalorder %s18, 1
      %p52 = scmp.ne.s32.totalorder %s47, %s49
      %p53 = scmp.eq.s32.totalorder %s18, 0
      %p54 = por %p52, %p53
      %p55 = scmp.ne.s32.totalorder %s47, %s49
      %p56 = scmp.eq.s32.totalorder %s23, 1
      %p57 = por %p55, %p56
      %p58 = scmp.ne.s32.totalorder %s49, %s50
      %p59 = scmp.eq.s32.totalorder %s23, 0
      %p60 = por %p58, %p59
      %p61 = scmp.ne.s32.totalorder %s49, %s50
      %p62 = scmp.eq.s32.totalorder %s24, 1
      %p63 = por %p61, %p62
      %p65 = scmp.ne.s32.totalorder %s50, %s64
      %p66 = scmp.eq.s32.totalorder %s24, 0
      %p67 = por %p65, %p66
      %s69 = sadd.s32 %s68, 1
      %p72 = scmp.eq.s32.totalorder %s18, 1
      %p73 = scmp.ne.s32.totalorder %s68, %s70
      %p74 = scmp.eq.s32.totalorder %s18, 0
      %p75 = por %p73, %p74
      %p76 = scmp.ne.s32.totalorder %s68, %s70
      %p77 = scmp.eq.s32.totalorder %s23, 1
      %p78 = por %p76, %p77
      %p79 = scmp.ne.s32.totalorder %s70, %s71
      %p80 = scmp.eq.s32.totalorder %s23, 0
      %p81 = por %p79, %p80
      %p82 = scmp.ne.s32.totalorder %s70, %s71
      %p83 = scmp.eq.s32.totalorder %s24, 1
      %p84 = por %p82, %p83
      %p86 = scmp.ne.s32.totalorder %s71, %s85
      %p87 = scmp.eq.s32.totalorder %s24, 0
      %p88 = por %p86, %p87
      %s90 = sadd.s32 %s89, 1
      %p93 = scmp.eq.s32.totalorder %s18, 1
      %p94 = scmp.ne.s32.totalorder %s89, %s91
      %p95 = scmp.eq.s32.totalorder %s18, 0
      %p96 = por %p94, %p95
      %p97 = scmp.ne.s32.totalorder %s89, %s91
      %p98 = scmp.eq.s32.totalorder %s23, 1
      %p99 = por %p97, %p98
      %p100 = scmp.ne.s32.totalorder %s91, %s92
      %p101 = scmp.eq.s32.totalorder %s23, 0
      %p102 = por %p100, %p101
      %p103 = scmp.ne.s32.totalorder %s91, %s92
      %p104 = scmp.eq.s32.totalorder %s24, 1
      %p105 = por %p103, %p104
      %p107 = scmp.ne.s32.totalorder %s92, %s106
      %p108 = scmp.eq.s32.totalorder %s24, 0
      %p109 = por %p107, %p108
      %s111 = sadd.s32 %s110, 1
      %p114 = scmp.eq.s32.totalorder %s18, 1
      %p115 = scmp.ne.s32.totalorder %s110, %s112
      %p116 = scmp.eq.s32.totalorder %s18, 0
      %p117 = por %p115, %p116
      %p118 = scmp.ne.s32.totalorder %s110, %s112
      %p119 = scmp.eq.s32.totalorder %s23, 1
      %p120 = por %p118, %p119
      %p121 = scmp.ne.s32.totalorder %s112, %s113
      %p122 = scmp.eq.s32.totalorder %s23, 0
      %p123 = por %p121, %p122
      %p124 = scmp.ne.s32.totalorder %s112, %s113
      %p125 = scmp.eq.s32.totalorder %s24, 1
      %p126 = por %p124, %p125
      %p128 = scmp.ne.s32.totalorder %s113, %s127
      %p129 = scmp.eq.s32.totalorder %s24, 0
      %p130 = por %p128, %p129
      %s132 = sadd.s32 %s131, 1
      %p135 = scmp.eq.s32.totalorder %s18, 1
      %p136 = scmp.ne.s32.totalorder %s131, %s133
      %p137 = scmp.eq.s32.totalorder %s18, 0
      %p138 = por %p136, %p137
      %p139 = scmp.ne.s32.totalorder %s131, %s133
      %p140 = scmp.eq.s32.totalorder %s23, 1
      %p141 = por %p139, %p140
      %p142 = scmp.ne.s32.totalorder %s133, %s134
      %p143 = scmp.eq.s32.totalorder %s23, 0
      %p144 = por %p142, %p143
      %p145 = scmp.ne.s32.totalorder %s133, %s134
      %p146 = scmp.eq.s32.totalorder %s24, 1
      %p147 = por %p145, %p146
      %p149 = scmp.ne.s32.totalorder %s134, %s148
      %p150 = scmp.eq.s32.totalorder %s24, 0
      %p151 = por %p149, %p150
      %s152 = ssub.s32 %s18, %s25
      %p153 = scmp.eq.s32.totalorder %s152, 0
      %s155 = sadd.s32 %s154, 1
      %s156 = scalar_select %p153, %s154, %s155
      %p159 = pneg %p153
      %p160 = scmp.eq.s32.totalorder %s18, 1
      %p161 = por %p159, %p160
      %p162 = scmp.ne.s32.totalorder %s154, %s157
      %p163 = scmp.eq.s32.totalorder %s18, 0
      %p164 = por %p162, %p163
      %p165 = scmp.ne.s32.totalorder %s154, %s157
      %p166 = scmp.eq.s32.totalorder %s23, 1
      %p167 = por %p165, %p166
      %p168 = scmp.ne.s32.totalorder %s157, %s158
      %p169 = scmp.eq.s32.totalorder %s23, 0
      %p170 = por %p168, %p169
      %p171 = scmp.ne.s32.totalorder %s157, %s158
      %p172 = scmp.eq.s32.totalorder %s24, 1
      %p173 = por %p171, %p172
      %p175 = scmp.ne.s32.totalorder %s158, %s174
      %p176 = scmp.eq.s32.totalorder %s24, 0
      %p177 = por %p175, %p176
      %s178 = ssub.s32 %s18, %s25
      %p179 = scmp.eq.s32.totalorder %s178, 0
      %s181 = sadd.s32 %s180, 1
      %s182 = scalar_select %p179, %s180, %s181
      %p185 = pneg %p179
      %p186 = scmp.eq.s32.totalorder %s18, 1
      %p187 = por %p185, %p186
      %p188 = scmp.ne.s32.totalorder %s180, %s183
      %p189 = scmp.eq.s32.totalorder %s18, 0
      %p190 = por %p188, %p189
      %p191 = scmp.ne.s32.totalorder %s180, %s183
      %p192 = scmp.eq.s32.totalorder %s23, 1
      %p193 = por %p191, %p192
      %p194 = scmp.ne.s32.totalorder %s183, %s184
      %p195 = scmp.eq.s32.totalorder %s23, 0
      %p196 = por %p194, %p195
      %p197 = scmp.ne.s32.totalorder %s183, %s184
      %p198 = scmp.eq.s32.totalorder %s24, 1
      %p199 = por %p197, %p198
      %p201 = scmp.ne.s32.totalorder %s184, %s200
      %p202 = scmp.eq.s32.totalorder %s24, 0
      %p203 = por %p201, %p202
      %s204 = ssub.s32 %s18, %s25
      %p205 = scmp.eq.s32.totalorder %s204, 0
      %s207 = sadd.s32 %s206, 1
      %s208 = scalar_select %p205, %s206, %s207
      %p211 = pneg %p205
      %p212 = scmp.eq.s32.totalorder %s18, 1
      %p213 = por %p211, %p212
      %p214 = scmp.ne.s32.totalorder %s206, %s209
      %p215 = scmp.eq.s32.totalorder %s18, 0
      %p216 = por %p214, %p215
      %p217 = scmp.ne.s32.totalorder %s206, %s209
      %p218 = scmp.eq.s32.totalorder %s23, 1
      %p219 = por %p217, %p218
      %p220 = scmp.ne.s32.totalorder %s209, %s210
      %p221 = scmp.eq.s32.totalorder %s23, 0
      %p222 = por %p220, %p221
      %p223 = scmp.ne.s32.totalorder %s209, %s210
      %p224 = scmp.eq.s32.totalorder %s24, 1
      %p225 = por %p223, %p224
      %p227 = scmp.ne.s32.totalorder %s210, %s226
      %p228 = scmp.eq.s32.totalorder %s24, 0
      %p229 = por %p227, %p228
      %s231 = sadd.s32 %s230, 1
      %p234 = scmp.eq.s32.totalorder %s18, 1
      %p235 = scmp.ne.s32.totalorder %s230, %s232
      %p236 = scmp.eq.s32.totalorder %s18, 0
      %p237 = por %p235, %p236
      %p238 = scmp.ne.s32.totalorder %s230, %s232
      %p239 = scmp.eq.s32.totalorder %s23, 1
      %p240 = por %p238, %p239
      %p241 = scmp.ne.s32.totalorder %s232, %s233
      %p242 = scmp.eq.s32.totalorder %s23, 0
      %p243 = por %p241, %p242
      %p244 = scmp.ne.s32.totalorder %s232, %s233
      %p245 = scmp.eq.s32.totalorder %s24, 1
      %p246 = por %p244, %p245
      %p248 = scmp.ne.s32.totalorder %s233, %s247
      %p249 = scmp.eq.s32.totalorder %s24, 0
      %p250 = por %p248, %p249
      %p251 = scmp.le.s32.totalorder 1, %s18
      %p252 = scmp.lt.s32.totalorder %s18, 3
      %p253 = pnand %p251, %p252
      %p254 = pneg %p253
      // Predicated region
      $region9: #{gps_forward.4} parent=5 // pred_check
        _
      $region10: #{gps_forward.4} parent=5 // pred_check_branch
        %256 = sbr.rel (%p253) target = $region12
      $region11: #{gps_forward.4} parent=5 // pred_region
        %s257 = ssub.s32 %s18, 1
        // Predicated region
        $region13: #{gps_forward.4} parent=11 // pred_check
          %p258 = pneg %p39
        $region14: #{gps_forward.4} parent=11 // pred_check_branch
          %260 = sbr.rel (%p258) target = $region16
        $region15: #{gps_forward.4} parent=11 // pred_region
          _
        $region16: #{gps_forward.4} parent=11 // pred_fallthru
          _
        // Predicated region
        $region17: #{gps_forward.4} parent=11 // pred_check
          %p261 = pneg %p60
        $region18: #{gps_forward.4} parent=11 // pred_check_branch
          %263 = sbr.rel (%p261) target = $region20
        $region19: #{gps_forward.4} parent=11 // pred_region
          _
        $region20: #{gps_forward.4} parent=11 // pred_fallthru
          _
        // Predicated region
        $region21: #{gps_forward.4} parent=11 // pred_check
          %p264 = pneg %p81
        $region22: #{gps_forward.4} parent=11 // pred_check_branch
          %266 = sbr.rel (%p264) target = $region24
        $region23: #{gps_forward.4} parent=11 // pred_region
          _
        $region24: #{gps_forward.4} parent=11 // pred_fallthru
          _
        // Predicated region
        $region25: #{gps_forward.4} parent=11 // pred_check
          %p267 = pneg %p102
        $region26: #{gps_forward.4} parent=11 // pred_check_branch
          %269 = sbr.rel (%p267) target = $region28
        $region27: #{gps_forward.4} parent=11 // pred_region
          _
        $region28: #{gps_forward.4} parent=11 // pred_fallthru
          _
        // Predicated region
        $region29: #{gps_forward.4} parent=11 // pred_check
          %p270 = pneg %p123
        $region30: #{gps_forward.4} parent=11 // pred_check_branch
          %272 = sbr.rel (%p270) target = $region32
        $region31: #{gps_forward.4} parent=11 // pred_region
          _
        $region32: #{gps_forward.4} parent=11 // pred_fallthru
          _
        // Predicated region
        $region33: #{gps_forward.4} parent=11 // pred_check
          %p273 = pneg %p144
        $region34: #{gps_forward.4} parent=11 // pred_check_branch
          %275 = sbr.rel (%p273) target = $region36
        $region35: #{gps_forward.4} parent=11 // pred_region
          _
        $region36: #{gps_forward.4} parent=11 // pred_fallthru
          _
      $region12: #{gps_forward.4} parent=5 // pred_fallthru
        _
      %p276 = scmp.lt.s32.totalorder %s18, 2
      // Predicated region
      $region37: #{gps_forward.4} parent=5 // pred_check
        %p277 = pneg %p276
      $region38: #{gps_forward.4} parent=5 // pred_check_branch
        %279 = sbr.rel (%p277) target = $region40
      $region39: #{gps_forward.4} parent=5 // pred_region
        // Predicated region
        $region41: #{gps_forward.4} parent=39 // pred_check
          %p280 = pneg %p164
        $region42: #{gps_forward.4} parent=39 // pred_check_branch
          %282 = sbr.rel (%p280) target = $region44
        $region43: #{gps_forward.4} parent=39 // pred_region
          %p283 = scmp.lt.s32.totalorder %s18, 1
          %s284 = scalar_select %p283, %s18, 1
          %s285 = smul.addr %s284, 48
          %s286 = smul.addr %s285, 4
          %s287 = scalar_lea.vmem %s6, %s286
        $region44: #{gps_forward.4} parent=39 // pred_fallthru
          _
        // Predicated region
        $region45: #{gps_forward.4} parent=39 // pred_check
          %p288 = pneg %p190
        $region46: #{gps_forward.4} parent=39 // pred_check_branch
          %290 = sbr.rel (%p288) target = $region48
        $region47: #{gps_forward.4} parent=39 // pred_region
          %s291 = sand.u32 %s180, 1
          %s292 = scalar_lea.sflag [#allocation6], %s291
          %s293 = sand.u32 %s180, 1
          %s294 = smul.addr %s293, 320
          %s295 = scalar_lea.vmem [#allocation5], %s294
          %s297 = ssub.s32 5120, 5120
          %298 = vsyncadd %s292, %s297
          %s299 = smul.addr %s18, 80
          %s300 = smul.addr %s299, 64
          %s301 = scalar_lea.hbm %s7, %s300
          %s302 = sshll.u32 %s295, 4
          %s303 = int_to_ptr.vmem [resolvable:$true] %s302
          %308 = dma.hbm_to_vmem [thread:$0]  %s301, 5120, %s303, %s292, 64, 64, 4
        $region48: #{gps_forward.4} parent=39 // pred_fallthru
          _
        // Predicated region
        $region49: #{gps_forward.4} parent=39 // pred_check
          %p309 = pneg %p216
        $region50: #{gps_forward.4} parent=39 // pred_check_branch
          %311 = sbr.rel (%p309) target = $region52
        $region51: #{gps_forward.4} parent=39 // pred_region
          %p312 = scmp.lt.s32.totalorder %s18, 1
          %s313 = scalar_select %p312, %s18, 1
          %s314 = smul.addr %s313, 2
          %s315 = smul.addr %s314, 8
          %s316 = scalar_lea.vmem %s8, %s315
        $region52: #{gps_forward.4} parent=39 // pred_fallthru
          _
      $region40: #{gps_forward.4} parent=5 // pred_fallthru
        _
      %p317 = scmp.le.s32.totalorder 1, %s18
      %p318 = scmp.lt.s32.totalorder %s18, 3
      %p319 = pnand %p317, %p318
      %p320 = pneg %p319
      // Predicated region
      $region53: #{gps_forward.4} parent=5 // pred_check
        _
      $region54: #{gps_forward.4} parent=5 // pred_check_branch
        %322 = sbr.rel (%p319) target = $region56
      $region55: #{gps_forward.4} parent=5 // pred_region
        %s323 = ssub.s32 %s18, 1
        %s324 = sand.u32 %s183, 1
        %s325 = scalar_lea.sflag [#allocation6], %s324
        %s326 = sand.u32 %s183, 1
        %s327 = smul.addr %s326, 320
        %s328 = scalar_lea.vmem [#allocation5], %s327
        // Predicated region
        $region57: #{gps_forward.4} parent=55 // pred_check
          %p329 = pneg %p196
        $region58: #{gps_forward.4} parent=55 // pred_check_branch
          %331 = sbr.rel (%p329) target = $region60
        $region59: #{gps_forward.4} parent=55 // pred_region
          %332 = dma.done %s325, 5120
        $region60: #{gps_forward.4} parent=55 // pred_fallthru
          _
        %p333 = pneg %p39
        %p334 = pneg %p36
        %p335 = pneg %p60
        %p336 = pneg %p57
        %p337 = pneg %p81
        %p338 = pneg %p78
        %p339 = pneg %p102
        %p340 = pneg %p99
        %p341 = pneg %p123
        %p342 = pneg %p120
        %p343 = pneg %p144
        %p344 = pneg %p141
        %p345 = scmp.lt.s32.totalorder %s23, 1
        %s346 = scalar_select %p345, %s23, 1
        %s347 = smul.addr %s346, 48
        %s348 = smul.addr %s347, 4
        %s349 = scalar_lea.vmem %s6, %s348
        %p350 = pneg %p170
        %p351 = pneg %p167
        %s352 = sand.u32 %s183, 1
        %s353 = scalar_lea.sflag [#allocation6], %s352
        %s354 = sand.u32 %s183, 1
        %s355 = smul.addr %s354, 320
        %s356 = scalar_lea.vmem [#allocation5], %s355
        %p357 = pneg %p196
        %p358 = pneg %p193
        %p359 = scmp.lt.s32.totalorder %s23, 1
        %s360 = scalar_select %p359, %s23, 1
        %s361 = smul.addr %s360, 2
        %s362 = smul.addr %s361, 8
        %s363 = scalar_lea.vmem %s8, %s362
        %p364 = pneg %p222
        %p365 = pneg %p219
        %p366 = pneg %p243
        %p367 = pneg %p240
        %p368 = scmp.lt.s32.totalorder %s23, 1
        %s369 = scalar_select %p368, %s23, 1
        %s370 = smul.addr %s369, 48
        %s371 = smul.addr %s370, 4
        %s372 = scalar_lea.vmem %s6, %s371
        %p373 = scmp.lt.s32.totalorder %s23, 1
        %s374 = scalar_select %p373, %s23, 1
        %s375 = smul.addr %s374, 2
        %s376 = smul.addr %s375, 8
        %s377 = scalar_lea.vmem %s8, %s376
        %p379 = scmp.eq.s32.totalorder %s23, 0
        // Predicated region
        $region61: #{gps_forward.4} parent=55 // pred_check
          %p380 = pneg %p379
        $region62: #{gps_forward.4} parent=55 // pred_check_branch
          %382 = sbr.rel (%p380) target = $region64
        $region63: #{gps_forward.4} parent=55 // pred_region
          %v383 = vlaneseq
          %v384 = vand.u32 %v383, 127
          %v385 = vld [vmem:[%s4] sm:$0xff]
          %v386 = vld [vmem:[%s4 + $0x8] sm:$0xff]
          %v387 = vld [vmem:[%s4 + $0x10] sm:$0xff]
          %v388 = vld [vmem:[%s4 + $0x18] sm:$0xff]
          %389 = vset.pattern.permute.xlu0 0
          %390 = vperm.xlu0 %389, %v385
          %v391 = vpop.permute.xlu0 %390
          %392 = vset.pattern.permute.xlu0 0
          %393 = vperm.xlu0 %392, %v386
          %v394 = vpop.permute.xlu0 %393
          %395 = vset.pattern.permute.xlu0 0
          %396 = vperm.xlu0 %395, %v387
          %v397 = vpop.permute.xlu0 %396
          %398 = vset.pattern.permute.xlu0 0
          %399 = vperm.xlu0 %398, %v388
          %v400 = vpop.permute.xlu0 %399
          %vm401 = vcmp.eq.s32.totalorder %v384, %v391
          %vm402 = vcmp.eq.s32.totalorder %v384, %v394
          %vm403 = vcmp.eq.s32.totalorder %v384, %v397
          %vm404 = vcmp.eq.s32.totalorder %v384, %v400
          %v405 = vsel %vm401, 1, 0
          %v406 = vsel %vm402, 1, 0
          %v407 = vsel %vm403, 1, 0
          %v408 = vsel %vm404, 1, 0
          %v409 = vcvt.s32.f32 %v405
          %v410 = vcvt.s32.f32 %v406
          %v411 = vcvt.s32.f32 %v407
          %v412 = vcvt.s32.f32 %v408
          %v413 = vpack.c.bf16 %v410, %v409
          %v414 = vpack.c.bf16 %v412, %v411
          %vm415 = vcmask 130048
          %416 = vst.msk [vmem:[#allocation2] sm:$0xff] %vm415, %v413
          %417 = vst.msk [vmem:[#allocation2 + $0x8] sm:$0xff] %vm415, %v414
          %v418 = vlaneseq
          %v419 = vshrl.u32 %v418, 7
          %v420 = vadd.s32 %v419, 8
          %v421 = vld [vmem:[%s5] sm:$0x1]
          %v422 = vlaneseq
          %v423 = vshrl.u32 %v422, 7
          %v424 = vsub.s32 0, %v423
          %v425 = vrot.slane %v421, %v424
          %vm426 = vcmp.eq.s32.totalorder %v419, %v425
          %vm427 = vcmp.eq.s32.totalorder %v420, %v425
          %v428 = vsel %vm426, 1, 0
          %v429 = vsel %vm427, 1, 0
          %v430 = vcvt.s32.f32 %v428
          %v431 = vcvt.s32.f32 %v429
          %v432 = vpack.c.bf16 %v431, %v430
          %vm433 = vcmask 261120
          %434 = vst.msk [vmem:[#allocation3] sm:$0xff] %vm433, %v432
          %v435 = vld [vmem:[%s2] sm:$0xff]
          %v436 = vld [vmem:[%s2 + $0x8] sm:$0xff]
          %v437 = vld [vmem:[%s3] sm:$0x1]
          %438 = vset.pattern.permute.xlu0 0
          %439 = vperm.xlu0 %438, %v435
          %v440 = vpop.permute.xlu0 %439
          %441 = vset.pattern.permute.xlu0 0
          %442 = vperm.xlu0 %441, %v436
          %v443 = vpop.permute.xlu0 %442
          %v444 = vlaneseq
          %v445 = vshrl.u32 %v444, 7
          %v446 = vsub.s32 0, %v445
          %v447 = vrot.slane %v437, %v446
          %vm448 = vcmp.eq.s32.totalorder %v440, %v447
          %vm449 = vcmp.eq.s32.totalorder %v443, %v447
          %v450 = vsel %vm448, 0.0, -1e+30
          %v451 = vsel %vm449, 0.0, -1e+30
          %452 = vst.msk [vmem:[#allocation4] sm:$0xff] %vm415, %v450
          %453 = vst.msk [vmem:[#allocation4 + $0x8] sm:$0xff] %vm415, %v451
          %v454 = vld [vmem:[%s0] sm:$0xff]
          %v455 = vld [vmem:[%s0 + $0x8] sm:$0xff]
          %456 = vst [vmem:[%s9] sm:$0xff] %v454
          %457 = vst [vmem:[%s9 + $0x8] sm:$0xff] %v455
        $region64: #{gps_forward.4} parent=55 // pred_fallthru
          _
        %v458 = vld [vmem:[%s9] sm:$0xff]
        %v459 = vld [vmem:[%s9 + $0x8] sm:$0xff]
        %v460 = vld [vmem:[%s377] sm:$0xff]
        %v461 = vld [vmem:[%s377 + $0x8] sm:$0xff]
        %v462 = vlaneseq
        %v463 = vshrl.u32 %v462, 7
        %v464 = vadd.s32 %v463, 8
        %vm465 = vcmp.lt.s32.totalorder %v463, 15
        %vm466 = vcmp.lt.s32.totalorder %v464, 15
        %v467 = vsel %vm465, 1, 0
        %v468 = vsel %vm466, 1, 0
        %v469 = vcvt.s32.f32 %v467
        %v470 = vcvt.s32.f32 %v468
        %v471 = vpack.c.bf16 %v459, %v458
        %v472 = vld [vmem:[#allocation2] sm:$0xff]
        %v473 = vld [vmem:[#allocation2 + $0x8] sm:$0xff]
        %v474 = vld [vmem:[%s1] sm:$0xf]
        %v475 = vld [vmem:[%s1 + $0x4] sm:$0xf]
        %v476 = vld [vmem:[%s1 + $0x8] sm:$0xf]
        %v477 = vld [vmem:[%s1 + $0xc] sm:$0xf]
        %v478 = vunpack.c.l.bf16 %v474
        %v479 = vunpack.c.l.bf16 %v475
        %v480 = vunpack.c.l.bf16 %v476
        %v481 = vunpack.c.l.bf16 %v477
        %vm482 = vcmask 130048
        %v484 = vsel %vm482, %v472, 0
        %v487 = vsel %vm482, %v473, 0
        %489 = vmatprep.subr.bf16.mxu0 0
        %490 = vmatpush1.bf16.msra.mxu0 %v471
        %491 = vmatprep.subr.bf16.mxu0 0
        %492 = vmatpush1.bf16.msra.mxu0 0
        %493 = vmatprep.subr.bf16.mxu0 0
        %494 = vmatpush1.bf16.msra.mxu0 0
        %495 = vmatprep.subr.bf16.mxu0 0
        %496 = vmatpush1.bf16.msra.mxu0 0
        %497 = vmatprep.subr.bf16.mxu0 0
        %498 = vmatpush1.bf16.msra.mxu0 0
        %499 = vmatprep.subr.bf16.mxu0 0
        %500 = vmatpush1.bf16.msra.mxu0 0
        %501 = vmatprep.subr.bf16.mxu0 0
        %502 = vmatpush1.bf16.msra.mxu0 0
        %503 = vmatprep.subr.bf16.mxu0 0
        %504 = vmatpush1.bf16.msra.mxu0 0
        %505 = vmatprep.subr.bf16.mxu0 0
        %506 = vmatpush1.bf16.msra.mxu0 0
        %507 = vmatprep.subr.bf16.mxu0 0
        %508 = vmatpush1.bf16.msra.mxu0 0
        %509 = vmatprep.subr.bf16.mxu0 0
        %510 = vmatpush1.bf16.msra.mxu0 0
        %511 = vmatprep.subr.bf16.mxu0 0
        %512 = vmatpush1.bf16.msra.mxu0 0
        %513 = vmatprep.subr.bf16.mxu0 0
        %514 = vmatpush1.bf16.msra.mxu0 0
        %515 = vmatprep.subr.bf16.mxu0 0
        %516 = vmatpush1.bf16.msra.mxu0 0
        %517 = vmatprep.subr.bf16.mxu0 0
        %518 = vmatpush1.bf16.msra.mxu0 0
        %519 = vmatprep.subr.bf16.mxu0 0
        %520 = vmatpush1.bf16.msra.mxu0 0
        %521 = vmatprep.mubr.bf16.mxu0 0
        %522 = vmatmul.mubr.bf16.gmra.mrb[0].mxu0 %v484
        %v523 = vpop.f32.mrb[0].mxu0
        %v524 = vadd.f32 %v478, %v523
        %v525 = vpop.f32.mrb[0].mxu0
        %v526 = vpop.f32.mrb[0].mxu0
        %v527 = vadd.f32 %v479, %v526
        %v528 = vpop.f32.mrb[0].mxu0
        %529 = vmatprep.mubr.bf16.mxu0 0
        %530 = vmatmul.mubr.bf16.gmra.mrb[0].mxu0 %v487
        %v531 = vpop.f32.mrb[0].mxu0
        %v532 = vadd.f32 %v480, %v531
        %v533 = vpop.f32.mrb[0].mxu0
        %v534 = vpop.f32.mrb[0].mxu0
        %v535 = vadd.f32 %v481, %v534
        %v536 = vpop.f32.mrb[0].mxu0
        %537 = vdwg.mxu0
        %v538 = vmax.f32 %v524, 0.0
        %v539 = vmax.f32 %v527, 0.0
        %v540 = vmax.f32 %v532, 0.0
        %v541 = vmax.f32 %v535, 0.0
        %v542 = vld [vmem:[#allocation3] sm:$0xff]
        %v543 = vpack.c.bf16 %v539, %v538
        %v544 = vpack.c.bf16 %v541, %v540
        %vm545 = vcmask 261120
        %v547 = vsel %vm545, %v542, 0
        %549 = vmatprep.subr.bf16.mxu0 0
        %550 = vmatpush1.bf16.msra.mxu0 %v543
        %551 = vmatprep.subr.bf16.mxu0 0
        %552 = vmatpush1.bf16.msra.mxu0 %v544
        %553 = vmatprep.subr.bf16.mxu0 0
        %554 = vmatpush1.bf16.msra.mxu0 0
        %555 = vmatprep.subr.bf16.mxu0 0
        %556 = vmatpush1.bf16.msra.mxu0 0
        %557 = vmatprep.subr.bf16.mxu0 0
        %558 = vmatpush1.bf16.msra.mxu0 0
        %559 = vmatprep.subr.bf16.mxu0 0
        %560 = vmatpush1.bf16.msra.mxu0 0
        %561 = vmatprep.subr.bf16.mxu0 0
        %562 = vmatpush1.bf16.msra.mxu0 0
        %563 = vmatprep.subr.bf16.mxu0 0
        %564 = vmatpush1.bf16.msra.mxu0 0
        %565 = vmatprep.subr.bf16.mxu0 0
        %566 = vmatpush1.bf16.msra.mxu0 0
        %567 = vmatprep.subr.bf16.mxu0 0
        %568 = vmatpush1.bf16.msra.mxu0 0
        %569 = vmatprep.subr.bf16.mxu0 0
        %570 = vmatpush1.bf16.msra.mxu0 0
        %571 = vmatprep.subr.bf16.mxu0 0
        %572 = vmatpush1.bf16.msra.mxu0 0
        %573 = vmatprep.subr.bf16.mxu0 0
        %574 = vmatpush1.bf16.msra.mxu0 0
        %575 = vmatprep.subr.bf16.mxu0 0
        %576 = vmatpush1.bf16.msra.mxu0 0
        %577 = vmatprep.subr.bf16.mxu0 0
        %578 = vmatpush1.bf16.msra.mxu0 0
        %579 = vmatprep.subr.bf16.mxu0 0
        %580 = vmatpush1.bf16.msra.mxu0 0
        %581 = vmatprep.mubr.bf16.mxu0 0
        %582 = vmatmul.mubr.bf16.gmra.mrb[0].mxu0 %v547
        %v583 = vpop.f32.mrb[0].mxu0
        %v584 = vadd.f32 %v458, %v583
        %v585 = vpop.f32.mrb[0].mxu0
        %v586 = vpop.f32.mrb[0].mxu0
        %v587 = vadd.f32 %v459, %v586
        %v588 = vpop.f32.mrb[0].mxu0
        %589 = vdwg.mxu0
        %v590 = vpack.c.bf16 %v587, %v584
        %v591 = vld [vmem:[%s328] sm:$0xf]
        %v592 = vld [vmem:[%s328 + $0x4] sm:$0xf]
        %v593 = vld [vmem:[%s328 + $0x8] sm:$0xf]
        %v594 = vld [vmem:[%s328 + $0xc] sm:$0xf]
        %v595 = vld [vmem:[%s328 + $0x10] sm:$0xf]
        %v596 = vld [vmem:[%s328 + $0x14] sm:$0xf]
        %v597 = vld [vmem:[%s328 + $0x18] sm:$0xf]
        %v598 = vld [vmem:[%s328 + $0x1c] sm:$0xf]
        %v599 = vld [vmem:[%s328 + $0x20] sm:$0xf]
        %v600 = vld [vmem:[%s328 + $0x24] sm:$0xf]
        %v601 = vld [vmem:[%s328 + $0x28] sm:$0xf]
        %v602 = vld [vmem:[%s328 + $0x2c] sm:$0xf]
        %v603 = vld [vmem:[%s328 + $0x30] sm:$0xf]
        %v604 = vld [vmem:[%s328 + $0x34] sm:$0xf]
        %v605 = vld [vmem:[%s328 + $0x38] sm:$0xf]
        %v606 = vld [vmem:[%s328 + $0x3c] sm:$0xf]
        %v607 = vlaneseq
        %v608 = vshrl.u32 %v607, 7
        %v609 = vsub.s32 0, %v608
        %v610 = vrot.slane %v460, %v609
        %v627 = vunpack.c.l.b16 %v591
        %v628 = vunpack.c.l.b16 %v592
        %v629 = vunpack.c.l.b16 %v593
        %v630 = vunpack.c.l.b16 %v594
        %v631 = vunpack.c.l.b16 %v595
        %v632 = vunpack.c.l.b16 %v596
        %v633 = vunpack.c.l.b16 %v597
        %v634 = vunpack.c.l.b16 %v598
        %v635 = vunpack.c.l.b16 %v599
        %v636 = vunpack.c.l.b16 %v600
        %v637 = vunpack.c.l.b16 %v601
        %v638 = vunpack.c.l.b16 %v602
        %v639 = vunpack.c.l.b16 %v603
        %v640 = vunpack.c.l.b16 %v604
        %v641 = vunpack.c.l.b16 %v605
        %v642 = vunpack.c.l.b16 %v606
        %v643 = vpack.c.b16 %v628, %v627
        %v644 = vpack.c.b16 %v630, %v629
        %v645 = vpack.c.b16 %v632, %v631
        %v646 = vpack.c.b16 %v634, %v633
        %v647 = vpack.c.b16 %v636, %v635
        %v648 = vpack.c.b16 %v638, %v637
        %v649 = vpack.c.b16 %v640, %v639
        %v650 = vpack.c.b16 %v642, %v641
        %659 = vmatprep.subr.bf16.mxu0 0
        %660 = vmatpush1.bf16.msra.mxu0 %v643
        %661 = vmatprep.subr.bf16.mxu0 0
        %662 = vmatpush1.bf16.msra.mxu0 %v644
        %663 = vmatprep.subr.bf16.mxu0 0
        %664 = vmatpush1.bf16.msra.mxu0 %v645
        %665 = vmatprep.subr.bf16.mxu0 0
        %666 = vmatpush1.bf16.msra.mxu0 %v646
        %667 = vmatprep.subr.bf16.mxu0 0
        %668 = vmatpush1.bf16.msra.mxu0 %v647
        %669 = vmatprep.subr.bf16.mxu0 0
        %670 = vmatpush1.bf16.msra.mxu0 %v648
        %671 = vmatprep.subr.bf16.mxu0 0
        %672 = vmatpush1.bf16.msra.mxu0 %v649
        %673 = vmatprep.subr.bf16.mxu0 0
        %674 = vmatpush1.bf16.msra.mxu0 %v650
        %675 = vmatprep.subr.bf16.mxu0 0
        %676 = vmatpush1.bf16.msra.mxu0 0
        %677 = vmatprep.subr.bf16.mxu0 0
        %678 = vmatpush1.bf16.msra.mxu0 0
        %679 = vmatprep.subr.bf16.mxu0 0
        %680 = vmatpush1.bf16.msra.mxu0 0
        %681 = vmatprep.subr.bf16.mxu0 0
        %682 = vmatpush1.bf16.msra.mxu0 0
        %683 = vmatprep.subr.bf16.mxu0 0
        %684 = vmatpush1.bf16.msra.mxu0 0
        %685 = vmatprep.subr.bf16.mxu0 0
        %686 = vmatpush1.bf16.msra.mxu0 0
        %687 = vmatprep.subr.bf16.mxu0 0
        %688 = vmatpush1.bf16.msra.mxu0 0
        %689 = vmatprep.subr.bf16.mxu0 0
        %690 = vmatpush1.bf16.msra.mxu0 0
        %691 = vmatprep.mubr.bf16.mxu0 0
        %692 = vmatmul.mubr.bf16.gmra.mrb[0].mxu0 %v590
        %v693 = vpop.f32.mrb[0].mxu0
        %v694 = vadd.f32 %v610, %v693
        %v695 = vpop.f32.mrb[0].mxu0
        %v696 = vpop.f32.mrb[0].mxu0
        %v697 = vadd.f32 %v610, %v696
        %v698 = vpop.f32.mrb[0].mxu0
        %699 = vdwg.mxu0
        %v700 = vmax.f32 %v694, 0.0
        %v701 = vmax.f32 %v697, 0.0
        %v702 = vpack.c.bf16 %v701, %v700
        %s703 = scalar_lea.vmem %s328, 64 [#allocation5]
        %v704 = vld [vmem:[%s703] sm:$0xf]
        %v705 = vld [vmem:[%s703 + $0x4] sm:$0xf]
        %v706 = vld [vmem:[%s703 + $0x8] sm:$0xf]
        %v707 = vld [vmem:[%s703 + $0xc] sm:$0xf]
        %v708 = vld [vmem:[%s703 + $0x10] sm:$0xf]
        %v709 = vld [vmem:[%s703 + $0x14] sm:$0xf]
        %v710 = vld [vmem:[%s703 + $0x18] sm:$0xf]
        %v711 = vld [vmem:[%s703 + $0x1c] sm:$0xf]
        %v712 = vld [vmem:[%s703 + $0x20] sm:$0xf]
        %v713 = vld [vmem:[%s703 + $0x24] sm:$0xf]
        %v714 = vld [vmem:[%s703 + $0x28] sm:$0xf]
        %v715 = vld [vmem:[%s703 + $0x2c] sm:$0xf]
        %v716 = vld [vmem:[%s703 + $0x30] sm:$0xf]
        %v717 = vld [vmem:[%s703 + $0x34] sm:$0xf]
        %v718 = vld [vmem:[%s703 + $0x38] sm:$0xf]
        %v719 = vld [vmem:[%s703 + $0x3c] sm:$0xf]
        %v720 = vlaneseq
        %v721 = vshrl.u32 %v720, 7
        %v722 = vsub.s32 1, %v721
        %v723 = vrot.slane %v460, %v722
        %v740 = vunpack.c.l.b16 %v704
        %v741 = vunpack.c.l.b16 %v705
        %v742 = vunpack.c.l.b16 %v706
        %v743 = vunpack.c.l.b16 %v707
        %v744 = vunpack.c.l.b16 %v708
        %v745 = vunpack.c.l.b16 %v709
        %v746 = vunpack.c.l.b16 %v710
        %v747 = vunpack.c.l.b16 %v711
        %v748 = vunpack.c.l.b16 %v712
        %v749 = vunpack.c.l.b16 %v713
        %v750 = vunpack.c.l.b16 %v714
        %v751 = vunpack.c.l.b16 %v715
        %v752 = vunpack.c.l.b16 %v716
        %v753 = vunpack.c.l.b16 %v717
        %v754 = vunpack.c.l.b16 %v718
        %v755 = vunpack.c.l.b16 %v719
        %v756 = vpack.c.b16 %v741, %v740
        %v757 = vpack.c.b16 %v743, %v742
        %v758 = vpack.c.b16 %v745, %v744
        %v759 = vpack.c.b16 %v747, %v746
        %v760 = vpack.c.b16 %v749, %v748
        %v761 = vpack.c.b16 %v751, %v750
        %v762 = vpack.c.b16 %v753, %v752
        %v763 = vpack.c.b16 %v755, %v754
        %772 = vmatprep.subr.bf16.mxu0 0
        %773 = vmatpush1.bf16.msra.mxu0 %v756
        %774 = vmatprep.subr.bf16.mxu0 0
        %775 = vmatpush1.bf16.msra.mxu0 %v757
        %776 = vmatprep.subr.bf16.mxu0 0
        %777 = vmatpush1.bf16.msra.mxu0 %v758
        %778 = vmatprep.subr.bf16.mxu0 0
        %779 = vmatpush1.bf16.msra.mxu0 %v759
        %780 = vmatprep.subr.bf16.mxu0 0
        %781 = vmatpush1.bf16.msra.mxu0 %v760
        %782 = vmatprep.subr.bf16.mxu0 0
        %783 = vmatpush1.bf16.msra.mxu0 %v761
        %784 = vmatprep.subr.bf16.mxu0 0
        %785 = vmatpush1.bf16.msra.mxu0 %v762
        %786 = vmatprep.subr.bf16.mxu0 0
        %787 = vmatpush1.bf16.msra.mxu0 %v763
        %788 = vmatprep.subr.bf16.mxu0 0
        %789 = vmatpush1.bf16.msra.mxu0 0
        %790 = vmatprep.subr.bf16.mxu0 0
        %791 = vmatpush1.bf16.msra.mxu0 0
        %792 = vmatprep.subr.bf16.mxu0 0
        %793 = vmatpush1.bf16.msra.mxu0 0
        %794 = vmatprep.subr.bf16.mxu0 0
        %795 = vmatpush1.bf16.msra.mxu0 0
        %796 = vmatprep.subr.bf16.mxu0 0
        %797 = vmatpush1.bf16.msra.mxu0 0
        %798 = vmatprep.subr.bf16.mxu0 0
        %799 = vmatpush1.bf16.msra.mxu0 0
        %800 = vmatprep.subr.bf16.mxu0 0
        %801 = vmatpush1.bf16.msra.mxu0 0
        %802 = vmatprep.subr.bf16.mxu0 0
        %803 = vmatpush1.bf16.msra.mxu0 0
        %804 = vmatprep.mubr.bf16.mxu0 0
        %805 = vmatmul.mubr.bf16.gmra.mrb[0].mxu0 %v702
        %v806 = vpop.f32.mrb[0].mxu0
        %v807 = vadd.f32 %v723, %v806
        %v808 = vpop.f32.mrb[0].mxu0
        %v809 = vpop.f32.mrb[0].mxu0
        %v810 = vadd.f32 %v723, %v809
        %v811 = vpop.f32.mrb[0].mxu0
        %812 = vdwg.mxu0
        %v813 = vadd.f32 %v807, %v458
        %v814 = vadd.f32 %v810, %v459
        %v815 = vmul.f32 %v813, %v469
        %v816 = vmul.f32 %v814, %v470
        %v817 = vadd.f32 %v815, %v816
        %v818 = vrot.slane %v817, 4
        %v819 = vadd.f32 %v817, %v818
        %v820 = vrot.slane %v819, 2
        %v821 = vadd.f32 %v819, %v820
        %v822 = vrot.slane %v821, 1
        %v823 = vadd.f32 %v821, %v822
        %v824 = vmul.f32 %v823, 0.06666667
        %v825 = vsub.f32 %v813, %v824
        %v826 = vsub.f32 %v814, %v824
        %v827 = vmul.f32 %v825, %v469
        %v828 = vmul.f32 %v826, %v470
        %v829 = vmul.f32 %v827, %v827
        %v830 = vmul.f32 %v828, %v828
        %v831 = vadd.f32 %v829, %v830
        %v832 = vrot.slane %v831, 4
        %v833 = vadd.f32 %v831, %v832
        %v834 = vrot.slane %v833, 2
        %v835 = vadd.f32 %v833, %v834
        %v836 = vrot.slane %v835, 1
        %v837 = vadd.f32 %v835, %v836
        %v838 = vmul.f32 %v837, 0.06666667
        %v839 = vadd.f32 %v838, 1e-05
        %v840 = vrsqrt.pop %v839
        %v841 = vmul.f32 %v825, %v840
        %v842 = vmul.f32 %v826, %v840
        %v843 = vlaneseq
        %v844 = vshrl.u32 %v843, 7
        %v845 = vsub.s32 0, %v844
        %v846 = vrot.slane %v461, %v845
        %v847 = vmul.f32 %v841, %v846
        %v848 = vmul.f32 %v842, %v846
        %v849 = vlaneseq
        %v850 = vshrl.u32 %v849, 7
        %v851 = vsub.s32 1, %v850
        %v852 = vrot.slane %v461, %v851
        %v853 = vadd.f32 %v847, %v852
        %v854 = vadd.f32 %v848, %v852
        %v855 = vld [vmem:[%s372] sm:$0xff]
        %v856 = vld [vmem:[%s372 + $0x8] sm:$0xf]
        %v857 = vld [vmem:[%s372 + $0xc] sm:$0xff]
        %v858 = vld [vmem:[%s372 + $0x14] sm:$0xf]
        %v859 = vld [vmem:[%s372 + $0x18] sm:$0xff]
        %v860 = vld [vmem:[%s372 + $0x20] sm:$0xf]
        %v861 = vld [vmem:[%s372 + $0x24] sm:$0xff]
        %v862 = vld [vmem:[%s372 + $0x2c] sm:$0xf]
        %v863 = vld [vmem:[%s372 + $0x30] sm:$0xff]
        %v864 = vld [vmem:[%s372 + $0x38] sm:$0xf]
        %v865 = vld [vmem:[%s372 + $0x3c] sm:$0xff]
        %v866 = vld [vmem:[%s372 + $0x44] sm:$0xf]
        %v867 = vld [vmem:[%s372 + $0x48] sm:$0xff]
        %v868 = vld [vmem:[%s372 + $0x50] sm:$0xf]
        %v869 = vld [vmem:[%s372 + $0x54] sm:$0xff]
        %v870 = vld [vmem:[%s372 + $0x5c] sm:$0xf]
        %v871 = vld [vmem:[%s372 + $0x60] sm:$0xff]
        %v872 = vld [vmem:[%s372 + $0x68] sm:$0xf]
        %v873 = vld [vmem:[%s372 + $0x6c] sm:$0xff]
        %v874 = vld [vmem:[%s372 + $0x74] sm:$0xf]
        %v875 = vld [vmem:[%s372 + $0x78] sm:$0xff]
        %v876 = vld [vmem:[%s372 + $0x80] sm:$0xf]
        %v877 = vld [vmem:[%s372 + $0x84] sm:$0xff]
        %v878 = vld [vmem:[%s372 + $0x8c] sm:$0xf]
        %v879 = vld [vmem:[%s372 + $0x90] sm:$0xff]
        %v880 = vld [vmem:[%s372 + $0x98] sm:$0xf]
        %v881 = vld [vmem:[%s372 + $0x9c] sm:$0xff]
        %v882 = vld [vmem:[%s372 + $0xa4] sm:$0xf]
        %v883 = vld [vmem:[%s372 + $0xa8] sm:$0xff]
        %v884 = vld [vmem:[%s372 + $0xb0] sm:$0xf]
        %v885 = vld [vmem:[%s372 + $0xb4] sm:$0xff]
        %v886 = vld [vmem:[%s372 + $0xbc] sm:$0xf]
        %v919 = vunpack.c.l.b16 %v855
        %v920 = vunpack.c.h.b16 %v855
        %v921 = vunpack.c.l.b16 %v856
        %v922 = vunpack.c.l.b16 %v857
        %v923 = vunpack.c.h.b16 %v857
        %v924 = vunpack.c.l.b16 %v858
        %v925 = vunpack.c.l.b16 %v859
        %v926 = vunpack.c.h.b16 %v859
        %v927 = vunpack.c.l.b16 %v860
        %v928 = vunpack.c.l.b16 %v861
        %v929 = vunpack.c.h.b16 %v861
        %v930 = vunpack.c.l.b16 %v862
        %v931 = vunpack.c.l.b16 %v863
        %v932 = vunpack.c.h.b16 %v863
        %v933 = vunpack.c.l.b16 %v864
        %v934 = vunpack.c.l.b16 %v865
        %v935 = vunpack.c.h.b16 %v865
        %v936 = vunpack.c.l.b16 %v866
        %v937 = vunpack.c.l.b16 %v867
        %v938 = vunpack.c.h.b16 %v867
        %v939 = vunpack.c.l.b16 %v868
        %v940 = vunpack.c.l.b16 %v869
        %v941 = vunpack.c.h.b16 %v869
        %v942 = vunpack.c.l.b16 %v870
        %v943 = vunpack.c.l.b16 %v871
        %v944 = vunpack.c.h.b16 %v871
        %v945 = vunpack.c.l.b16 %v872
        %v946 = vunpack.c.l.b16 %v873
        %v947 = vunpack.c.h.b16 %v873
        %v948 = vunpack.c.l.b16 %v874
        %v949 = vunpack.c.l.b16 %v875
        %v950 = vunpack.c.h.b16 %v875
        %v951 = vunpack.c.l.b16 %v876
        %v952 = vunpack.c.l.b16 %v877
        %v953 = vunpack.c.h.b16 %v877
        %v954 = vunpack.c.l.b16 %v878
        %v955 = vunpack.c.l.b16 %v879
        %v956 = vunpack.c.h.b16 %v879
        %v957 = vunpack.c.l.b16 %v880
        %v958 = vunpack.c.l.b16 %v881
        %v959 = vunpack.c.h.b16 %v881
        %v960 = vunpack.c.l.b16 %v882
        %v961 = vunpack.c.l.b16 %v883
        %v962 = vunpack.c.h.b16 %v883
        %v963 = vunpack.c.l.b16 %v884
        %v964 = vunpack.c.l.b16 %v885
        %v965 = vunpack.c.h.b16 %v885
        %v966 = vunpack.c.l.b16 %v886
        %v967 = vpack.c.b16 %v922, %v919
        %v968 = vpack.c.b16 %v923, %v920
        %v969 = vpack.c.b16 %v924, %v921
        %v970 = vpack.c.b16 %v928, %v925
        %v971 = vpack.c.b16 %v929, %v926
        %v972 = vpack.c.b16 %v930, %v927
        %v973 = vpack.c.b16 %v934, %v931
        %v974 = vpack.c.b16 %v935, %v932
        %v975 = vpack.c.b16 %v936, %v933
        %v976 = vpack.c.b16 %v940, %v937
        %v977 = vpack.c.b16 %v941, %v938
        %v978 = vpack.c.b16 %v942, %v939
        %v979 = vpack.c.b16 %v946, %v943
        %v980 = vpack.c.b16 %v947, %v944
        %v981 = vpack.c.b16 %v948, %v945
        %v982 = vpack.c.b16 %v952, %v949
        %v983 = vpack.c.b16 %v953, %v950
        %v984 = vpack.c.b16 %v954, %v951
        %v985 = vpack.c.b16 %v958, %v955
        %v986 = vpack.c.b16 %v959, %v956
        %v987 = vpack.c.b16 %v960, %v957
        %v988 = vpack.c.b16 %v964, %v961
        %v989 = vpack.c.b16 %v965, %v962
        %v990 = vpack.c.b16 %v966, %v963
        %1015 = vmatprep.subr.bf16.mxu0 %v968
        %1016 = vmatpush1.bf16.msra.mxu0 %v967
        %1017 = vmatprep.subr.bf16.mxu0 %v971
        %1018 = vmatpush1.bf16.msra.mxu0 %v970
        %1019 = vmatprep.subr.bf16.mxu0 %v974
        %1020 = vmatpush1.bf16.msra.mxu0 %v973
        %1021 = vmatprep.subr.bf16.mxu0 %v977
        %1022 = vmatpush1.bf16.msra.mxu0 %v976
        %1023 = vmatprep.subr.bf16.mxu0 %v980
        %1024 = vmatpush1.bf16.msra.mxu0 %v979
        %1025 = vmatprep.subr.bf16.mxu0 %v983
        %1026 = vmatpush1.bf16.msra.mxu0 %v982
        %1027 = vmatprep.subr.bf16.mxu0 %v986
        %1028 = vmatpush1.bf16.msra.mxu0 %v985
        %1029 = vmatprep.subr.bf16.mxu0 %v989
        %1030 = vmatpush1.bf16.msra.mxu0 %v988
        %1031 = vmatprep.subr.bf16.mxu0 0
        %1032 = vmatpush1.bf16.msra.mxu0 0
        %1033 = vmatprep.subr.bf16.mxu0 0
        %1034 = vmatpush1.bf16.msra.mxu0 0
        %1035 = vmatprep.subr.bf16.mxu0 0
        %1036 = vmatpush1.bf16.msra.mxu0 0
        %1037 = vmatprep.subr.bf16.mxu0 0
        %1038 = vmatpush1.bf16.msra.mxu0 0
        %1039 = vmatprep.subr.bf16.mxu0 0
        %1040 = vmatpush1.bf16.msra.mxu0 0
        %1041 = vmatprep.subr.bf16.mxu0 0
        %1042 = vmatpush1.bf16.msra.mxu0 0
        %1043 = vmatprep.subr.bf16.mxu0 0
        %1044 = vmatpush1.bf16.msra.mxu0 0
        %1045 = vmatprep.subr.bf16.mxu0 0
        %1046 = vmatpush1.bf16.msra.mxu0 0
        %1047 = vmatprep.mubr.bf16.mxu0 0
        %1048 = vmatmul.mubr.bf16.gmra.mrb[0].mxu0 %v471
        %v1049 = vpop.f32.mrb[0].mxu0
        %v1050 = vadd.f32 0.0, %v1049
        %v1051 = vpop.f32.mrb[0].mxu0
        %v1052 = vadd.f32 0.0, %v1051
        %v1053 = vpop.f32.mrb[0].mxu0
        %v1054 = vadd.f32 0.0, %v1053
        %v1055 = vpop.f32.mrb[0].mxu0
        %v1056 = vadd.f32 0.0, %v1055
        %1057 = vdwg.mxu0
        %1058 = vmatprep.subr.bf16.mxu0 0
        %1059 = vmatpush1.bf16.msra.mxu0 %v969
        %1060 = vmatprep.subr.bf16.mxu0 0
        %1061 = vmatpush1.bf16.msra.mxu0 %v972
        %1062 = vmatprep.subr.bf16.mxu0 0
        %1063 = vmatpush1.bf16.msra.mxu0 %v975
        %1064 = vmatprep.subr.bf16.mxu0 0
        %1065 = vmatpush1.bf16.msra.mxu0 %v978
        %1066 = vmatprep.subr.bf16.mxu0 0
        %1067 = vmatpush1.bf16.msra.mxu0 %v981
        %1068 = vmatprep.subr.bf16.mxu0 0
        %1069 = vmatpush1.bf16.msra.mxu0 %v984
        %1070 = vmatprep.subr.bf16.mxu0 0
        %1071 = vmatpush1.bf16.msra.mxu0 %v987
        %1072 = vmatprep.subr.bf16.mxu0 0
        %1073 = vmatpush1.bf16.msra.mxu0 %v990
        %1074 = vmatprep.subr.bf16.mxu0 0
        %1075 = vmatpush1.bf16.msra.mxu0 0
        %1076 = vmatprep.subr.bf16.mxu0 0
        %1077 = vmatpush1.bf16.msra.mxu0 0
        %1078 = vmatprep.subr.bf16.mxu0 0
        %1079 = vmatpush1.bf16.msra.mxu0 0
        %1080 = vmatprep.subr.bf16.mxu0 0
        %1081 = vmatpush1.bf16.msra.mxu0 0
        %1082 = vmatprep.subr.bf16.mxu0 0
        %1083 = vmatpush1.bf16.msra.mxu0 0
        %1084 = vmatprep.subr.bf16.mxu0 0
        %1085 = vmatpush1.bf16.msra.mxu0 0
        %1086 = vmatprep.subr.bf16.mxu0 0
        %1087 = vmatpush1.bf16.msra.mxu0 0
        %1088 = vmatprep.subr.bf16.mxu0 0
        %1089 = vmatpush1.bf16.msra.mxu0 0
        %1090 = vmatprep.mubr.bf16.mxu0 0
        %1091 = vmatmul.mubr.bf16.gmra.mrb[0].mxu0 %v471
        %v1092 = vpop.f32.mrb[0].mxu0
        %v1093 = vadd.f32 0.0, %v1092
        %v1094 = vpop.f32.mrb[0].mxu0
        %v1095 = vpop.f32.mrb[0].mxu0
        %v1096 = vadd.f32 0.0, %v1095
        %v1097 = vpop.f32.mrb[0].mxu0
        %1098 = vdwg.mxu0
        %v1099 = vlaneseq
        %v1100 = vshrl.u32 %v1099, 7
        %v1101 = vsub.s32 2, %v1100
        %v1102 = vrot.slane %v460, %v1101
        %v1103 = vadd.f32 %v1050, %v1102
        %v1104 = vadd.f32 %v1054, %v1102
        %v1105 = vlaneseq
        %v1106 = vshrl.u32 %v1105, 7
        %v1107 = vsub.s32 3, %v1106
        %v1108 = vrot.slane %v460, %v1107
        %v1109 = vadd.f32 %v1052, %v1108
        %v1110 = vadd.f32 %v1056, %v1108
        %v1111 = vlaneseq
        %v1112 = vshrl.u32 %v1111, 7
        %v1113 = vsub.s32 4, %v1112
        %v1114 = vrot.slane %v460, %v1113
        %v1115 = vadd.f32 %v1093, %v1114
        %v1116 = vadd.f32 %v1096, %v1114
        %v1117 = vld [vmem:[#allocation4] sm:$0xff]
        %v1118 = vld [vmem:[#allocation4 + $0x8] sm:$0xff]
        %v1119 = vlaneseq
        %v1120 = vand.u32 %v1119, 127
        %v1121 = vpack.c.bf16 %v1104, %v1103
        %vm1122 = vcmp.ge.s32.totalorder %v1120, 0
        %vm1123 = vcmp.lt.s32.totalorder %v1120, 8
        %vm1124 = vmand %vm1122, %vm1123
        %v1125 = vsel %vm1124, 1, 0
        %v1126 = vcvt.s32.f32 %v1125
        %v1127 = vmul.f32 %v1109, %v1126
        %v1128 = vmul.f32 %v1110, %v1126
        %v1129 = vpack.c.bf16 %v1128, %v1127
        %v1130 = vmul.f32 %v1115, %v1126
        %v1131 = vmul.f32 %v1116, %v1126
        %v1132 = vpack.c.bf16 %v1131, %v1130
        %1133 = vmatprep.subr.bf16.mxu0 0
        %1134 = vmatpush1.bf16.xpose.msra.mxu0 %v1129
        %1135 = vmatprep.subr.bf16.mxu0 0
        %1136 = vmatpush1.bf16.xpose.msra.mxu0 0
        %1137 = vmatprep.subr.bf16.mxu0 0
        %1138 = vmatpush1.bf16.xpose.msra.mxu0 0
        %1139 = vmatprep.subr.bf16.mxu0 0
        %1140 = vmatpush1.bf16.xpose.msra.mxu0 0
        %1141 = vmatprep.subr.bf16.mxu0 0
        %1142 = vmatpush1.bf16.xpose.msra.mxu0 0
        %1143 = vmatprep.subr.bf16.mxu0 0
        %1144 = vmatpush1.bf16.xpose.msra.mxu0 0
        %1145 = vmatprep.subr.bf16.mxu0 0
        %1146 = vmatpush1.bf16.xpose.msra.mxu0 0
        %1147 = vmatprep.subr.bf16.mxu0 0
        %1148 = vmatpush1.bf16.xpose.msra.mxu0 0
        %1149 = vmatprep.subr.bf16.mxu0 0
        %1150 = vmatpush1.bf16.xpose.msra.mxu0 0
        %1151 = vmatprep.subr.bf16.mxu0 0
        %1152 = vmatpush1.bf16.xpose.msra.mxu0 0
        %1153 = vmatprep.subr.bf16.mxu0 0
        %1154 = vmatpush1.bf16.xpose.msra.mxu0 0
        %1155 = vmatprep.subr.bf16.mxu0 0
        %1156 = vmatpush1.bf16.xpose.msra.mxu0 0
        %1157 = vmatprep.subr.bf16.mxu0 0
        %1158 = vmatpush1.bf16.xpose.msra.mxu0 0
        %1159 = vmatprep.subr.bf16.mxu0 0
        %1160 = vmatpush1.bf16.xpose.msra.mxu0 0
        %1161 = vmatprep.subr.bf16.mxu0 0
        %1162 = vmatpush1.bf16.xpose.msra.mxu0 0
        %1163 = vmatprep.subr.bf16.mxu0 0
        %1164 = vmatpush1.bf16.xpose.msra.mxu0 0
        %1165 = vmatprep.mubr.bf16.mxu0 0
        %1166 = vmatmul.mubr.bf16.gmra.mrb[0].mxu0 %v1121
        %v1167 = vpop.f32.mrb[0].mxu0
        %v1168 = vadd.f32 %v1117, %v1167
        %v1169 = vpop.f32.mrb[0].mxu0
        %v1170 = vpop.f32.mrb[0].mxu0
        %v1171 = vadd.f32 %v1118, %v1170
        %v1172 = vpop.f32.mrb[0].mxu0
        %1173 = vdwg.mxu0
        %v1174 = vsel %vm482, %v1168, -inf
        %1175 = vmax.xlane.f32.xlu0 %v1174
        %v1176 = vpop.xlane.xlu0 %1175
        %v1177 = vsel %vm482, %v1171, -inf
        %1178 = vmax.xlane.f32.xlu0 %v1177
        %v1179 = vpop.xlane.xlu0 %1178
        %v1180 = vsub.f32 %v1168, %v1176
        %v1181 = vsub.f32 %v1171, %v1179
        %v1182 = vmul.f32 %v1180, 1.442695
        %v1183 = vpow.pop %v1182
        %v1184 = vmul.f32 %v1181, 1.442695
        %v1185 = vpow.pop %v1184
        %v1186 = vsel %vm482, %v1183, 0.0
        %1187 = vadd.xlane.f32.xlu0 %v1186
        %v1188 = vpop.xlane.xlu0 %1187
        %v1189 = vsel %vm482, %v1185, 0.0
        %1190 = vadd.xlane.f32.xlu0 %v1189
        %v1191 = vpop.xlane.xlu0 %1190
        %v1192 = vrcp.pop %v1188
        %v1193 = vrcp.pop %v1191
        %v1194 = vmul.f32 %v1183, %v1192
        %v1195 = vmul.f32 %v1185, %v1193
        %v1196 = vpack.c.bf16 %v1195, %v1194
        %vm1197 = vcmp.ge.s32.totalorder %v1120, 8
        %vm1198 = vcmp.lt.s32.totalorder %v1120, 16
        %vm1199 = vmand %vm1197, %vm1198
        %v1200 = vsel %vm1199, 1, 0
        %v1201 = vcvt.s32.f32 %v1200
        %v1202 = vmul.f32 %v1109, %v1201
        %v1203 = vmul.f32 %v1110, %v1201
        %v1204 = vpack.c.bf16 %v1203, %v1202
        %v1205 = vmul.f32 %v1115, %v1201
        %v1206 = vmul.f32 %v1116, %v1201
        %v1207 = vpack.c.bf16 %v1206, %v1205
        %1208 = vmatprep.subr.bf16.mxu0 0
        %1209 = vmatpush1.bf16.xpose.msra.mxu0 %v1204
        %1210 = vmatprep.subr.bf16.mxu0 0
        %1211 = vmatpush1.bf16.xpose.msra.mxu0 0
        %1212 = vmatprep.subr.bf16.mxu0 0
        %1213 = vmatpush1.bf16.xpose.msra.mxu0 0
        %1214 = vmatprep.subr.bf16.mxu0 0
        %1215 = vmatpush1.bf16.xpose.msra.mxu0 0
        %1216 = vmatprep.subr.bf16.mxu0 0
        %1217 = vmatpush1.bf16.xpose.msra.mxu0 0
        %1218 = vmatprep.subr.bf16.mxu0 0
        %1219 = vmatpush1.bf16.xpose.msra.mxu0 0
        %1220 = vmatprep.subr.bf16.mxu0 0
        %1221 = vmatpush1.bf16.xpose.msra.mxu0 0
        %1222 = vmatprep.subr.bf16.mxu0 0
        %1223 = vmatpush1.bf16.xpose.msra.mxu0 0
        %1224 = vmatprep.subr.bf16.mxu0 0
        %1225 = vmatpush1.bf16.xpose.msra.mxu0 0
        %1226 = vmatprep.subr.bf16.mxu0 0
        %1227 = vmatpush1.bf16.xpose.msra.mxu0 0
        %1228 = vmatprep.subr.bf16.mxu0 0
        %1229 = vmatpush1.bf16.xpose.msra.mxu0 0
        %1230 = vmatprep.subr.bf16.mxu0 0
        %1231 = vmatpush1.bf16.xpose.msra.mxu0 0
        %1232 = vmatprep.subr.bf16.mxu0 0
        %1233 = vmatpush1.bf16.xpose.msra.mxu0 0
        %1234 = vmatprep.subr.bf16.mxu0 0
        %1235 = vmatpush1.bf16.xpose.msra.mxu0 0
        %1236 = vmatprep.subr.bf16.mxu0 0
        %1237 = vmatpush1.bf16.xpose.msra.mxu0 0
        %1238 = vmatprep.subr.bf16.mxu0 0
        %1239 = vmatpush1.bf16.xpose.msra.mxu0 0
        %1240 = vmatprep.mubr.bf16.mxu0 0
        %1241 = vmatmul.mubr.bf16.gmra.mrb[0].mxu0 %v1121
        %v1242 = vpop.f32.mrb[0].mxu0
        %v1243 = vadd.f32 %v1117, %v1242
        %v1244 = vpop.f32.mrb[0].mxu0
        %v1245 = vpop.f32.mrb[0].mxu0
        %v1246 = vadd.f32 %v1118, %v1245
        %v1247 = vpop.f32.mrb[0].mxu0
        %1248 = vdwg.mxu0
        %v1249 = vsel %vm482, %v1243, -inf
        %1250 = vmax.xlane.f32.xlu0 %v1249
        %v1251 = vpop.xlane.xlu0 %1250
        %v1252 = vsel %vm482, %v1246, -inf
        %1253 = vmax.xlane.f32.xlu0 %v1252
        %v1254 = vpop.xlane.xlu0 %1253
        %v1255 = vsub.f32 %v1243, %v1251
        %v1256 = vsub.f32 %v1246, %v1254
        %v1257 = vmul.f32 %v1255, 1.442695
        %v1258 = vpow.pop %v1257
        %v1259 = vmul.f32 %v1256, 1.442695
        %v1260 = vpow.pop %v1259
        %v1261 = vsel %vm482, %v1258, 0.0
        %1262 = vadd.xlane.f32.xlu0 %v1261
        %v1263 = vpop.xlane.xlu0 %1262
        %v1264 = vsel %vm482, %v1260, 0.0
        %1265 = vadd.xlane.f32.xlu0 %v1264
        %v1266 = vpop.xlane.xlu0 %1265
        %v1267 = vrcp.pop %v1263
        %v1268 = vrcp.pop %v1266
        %v1269 = vmul.f32 %v1258, %v1267
        %v1270 = vmul.f32 %v1260, %v1268
        %v1271 = vpack.c.bf16 %v1270, %v1269
        %v1273 = vsel %vm482, %v1271, 0
        %1275 = vmatprep.subr.bf16.mxu0 0
        %1276 = vmatpush1.bf16.msra.mxu0 %v1207
        %1277 = vmatprep.subr.bf16.mxu0 0
        %1278 = vmatpush1.bf16.msra.mxu0 0
        %1279 = vmatprep.subr.bf16.mxu0 0
        %1280 = vmatpush1.bf16.msra.mxu0 0
        %1281 = vmatprep.subr.bf16.mxu0 0
        %1282 = vmatpush1.bf16.msra.mxu0 0
        %1283 = vmatprep.subr.bf16.mxu0 0
        %1284 = vmatpush1.bf16.msra.mxu0 0
        %1285 = vmatprep.subr.bf16.mxu0 0
        %1286 = vmatpush1.bf16.msra.mxu0 0
        %1287 = vmatprep.subr.bf16.mxu0 0
        %1288 = vmatpush1.bf16.msra.mxu0 0
        %1289 = vmatprep.subr.bf16.mxu0 0
        %1290 = vmatpush1.bf16.msra.mxu0 0
        %1291 = vmatprep.subr.bf16.mxu0 0
        %1292 = vmatpush1.bf16.msra.mxu0 0
        %1293 = vmatprep.subr.bf16.mxu0 0
        %1294 = vmatpush1.bf16.msra.mxu0 0
        %1295 = vmatprep.subr.bf16.mxu0 0
        %1296 = vmatpush1.bf16.msra.mxu0 0
        %1297 = vmatprep.subr.bf16.mxu0 0
        %1298 = vmatpush1.bf16.msra.mxu0 0
        %1299 = vmatprep.subr.bf16.mxu0 0
        %1300 = vmatpush1.bf16.msra.mxu0 0
        %1301 = vmatprep.subr.bf16.mxu0 0
        %1302 = vmatpush1.bf16.msra.mxu0 0
        %1303 = vmatprep.subr.bf16.mxu0 0
        %1304 = vmatpush1.bf16.msra.mxu0 0
        %1305 = vmatprep.subr.bf16.mxu0 0
        %1306 = vmatpush1.bf16.msra.mxu0 0
        %1307 = vmatprep.mubr.bf16.mxu0 0
        %1308 = vmatmul.mubr.bf16.gmra.mrb[0].mxu0 %v1273
        %v1309 = vpop.f32.mrb[0].mxu0
        %v1310 = vadd.f32 0.0, %v1309
        %v1311 = vpop.f32.mrb[0].mxu0
        %v1312 = vpop.f32.mrb[0].mxu0
        %v1313 = vadd.f32 0.0, %v1312
        %v1314 = vpop.f32.mrb[0].mxu0
        %1315 = vdwg.mxu0
        %v1317 = vsel %vm482, %v1196, 0
        %1319 = vmatprep.subr.bf16.mxu0 0
        %1320 = vmatpush1.bf16.msra.mxu0 %v1132
        %1321 = vmatprep.subr.bf16.mxu0 0
        %1322 = vmatpush1.bf16.msra.mxu0 0
        %1323 = vmatprep.subr.bf16.mxu0 0
        %1324 = vmatpush1.bf16.msra.mxu0 0
        %1325 = vmatprep.subr.bf16.mxu0 0
        %1326 = vmatpush1.bf16.msra.mxu0 0
        %1327 = vmatprep.subr.bf16.mxu0 0
        %1328 = vmatpush1.bf16.msra.mxu0 0
        %1329 = vmatprep.subr.bf16.mxu0 0
        %1330 = vmatpush1.bf16.msra.mxu0 0
        %1331 = vmatprep.subr.bf16.mxu0 0
        %1332 = vmatpush1.bf16.msra.mxu0 0
        %1333 = vmatprep.subr.bf16.mxu0 0
        %1334 = vmatpush1.bf16.msra.mxu0 0
        %1335 = vmatprep.subr.bf16.mxu0 0
        %1336 = vmatpush1.bf16.msra.mxu0 0
        %1337 = vmatprep.subr.bf16.mxu0 0
        %1338 = vmatpush1.bf16.msra.mxu0 0
        %1339 = vmatprep.subr.bf16.mxu0 0
        %1340 = vmatpush1.bf16.msra.mxu0 0
        %1341 = vmatprep.subr.bf16.mxu0 0
        %1342 = vmatpush1.bf16.msra.mxu0 0
        %1343 = vmatprep.subr.bf16.mxu0 0
        %1344 = vmatpush1.bf16.msra.mxu0 0
        %1345 = vmatprep.subr.bf16.mxu0 0
        %1346 = vmatpush1.bf16.msra.mxu0 0
        %1347 = vmatprep.subr.bf16.mxu0 0
        %1348 = vmatpush1.bf16.msra.mxu0 0
        %1349 = vmatprep.subr.bf16.mxu0 0
        %1350 = vmatpush1.bf16.msra.mxu0 0
        %1351 = vmatprep.mubr.bf16.mxu0 0
        %1352 = vmatmul.mubr.bf16.gmra.mrb[0].mxu0 %v1317
        %v1353 = vpop.f32.mrb[0].mxu0
        %v1354 = vadd.f32 %v1310, %v1353
        %v1355 = vpop.f32.mrb[0].mxu0
        %v1356 = vpop.f32.mrb[0].mxu0
        %v1357 = vadd.f32 %v1313, %v1356
        %v1358 = vpop.f32.mrb[0].mxu0
        %1359 = vdwg.mxu0
        %vm1360 = vcmp.ge.s32.totalorder %v1120, 16
        %vm1361 = vcmp.lt.s32.totalorder %v1120, 24
        %vm1362 = vmand %vm1360, %vm1361
        %v1363 = vsel %vm1362, 1, 0
        %v1364 = vcvt.s32.f32 %v1363
        %v1365 = vmul.f32 %v1109, %v1364
        %v1366 = vmul.f32 %v1110, %v1364
        %v1367 = vpack.c.bf16 %v1366, %v1365
        %v1368 = vmul.f32 %v1115, %v1364
        %v1369 = vmul.f32 %v1116, %v1364
        %v1370 = vpack.c.bf16 %v1369, %v1368
        %1371 = vmatprep.subr.bf16.mxu0 0
        %1372 = vmatpush1.bf16.xpose.msra.mxu0 %v1367
        %1373 = vmatprep.subr.bf16.mxu0 0
        %1374 = vmatpush1.bf16.xpose.msra.mxu0 0
        %1375 = vmatprep.subr.bf16.mxu0 0
        %1376 = vmatpush1.bf16.xpose.msra.mxu0 0
        %1377 = vmatprep.subr.bf16.mxu0 0
        %1378 = vmatpush1.bf16.xpose.msra.mxu0 0
        %1379 = vmatprep.subr.bf16.mxu0 0
        %1380 = vmatpush1.bf16.xpose.msra.mxu0 0
        %1381 = vmatprep.subr.bf16.mxu0 0
        %1382 = vmatpush1.bf16.xpose.msra.mxu0 0
        %1383 = vmatprep.subr.bf16.mxu0 0
        %1384 = vmatpush1.bf16.xpose.msra.mxu0 0
        %1385 = vmatprep.subr.bf16.mxu0 0
        %1386 = vmatpush1.bf16.xpose.msra.mxu0 0
        %1387 = vmatprep.subr.bf16.mxu0 0
        %1388 = vmatpush1.bf16.xpose.msra.mxu0 0
        %1389 = vmatprep.subr.bf16.mxu0 0
        %1390 = vmatpush1.bf16.xpose.msra.mxu0 0
        %1391 = vmatprep.subr.bf16.mxu0 0
        %1392 = vmatpush1.bf16.xpose.msra.mxu0 0
        %1393 = vmatprep.subr.bf16.mxu0 0
        %1394 = vmatpush1.bf16.xpose.msra.mxu0 0
        %1395 = vmatprep.subr.bf16.mxu0 0
        %1396 = vmatpush1.bf16.xpose.msra.mxu0 0
        %1397 = vmatprep.subr.bf16.mxu0 0
        %1398 = vmatpush1.bf16.xpose.msra.mxu0 0
        %1399 = vmatprep.subr.bf16.mxu0 0
        %1400 = vmatpush1.bf16.xpose.msra.mxu0 0
        %1401 = vmatprep.subr.bf16.mxu0 0
        %1402 = vmatpush1.bf16.xpose.msra.mxu0 0
        %1403 = vmatprep.mubr.bf16.mxu0 0
        %1404 = vmatmul.mubr.bf16.gmra.mrb[0].mxu0 %v1121
        %v1405 = vpop.f32.mrb[0].mxu0
        %v1406 = vadd.f32 %v1117, %v1405
        %v1407 = vpop.f32.mrb[0].mxu0
        %v1408 = vpop.f32.mrb[0].mxu0
        %v1409 = vadd.f32 %v1118, %v1408
        %v1410 = vpop.f32.mrb[0].mxu0
        %1411 = vdwg.mxu0
        %v1412 = vsel %vm482, %v1406, -inf
        %1413 = vmax.xlane.f32.xlu0 %v1412
        %v1414 = vpop.xlane.xlu0 %1413
        %v1415 = vsel %vm482, %v1409, -inf
        %1416 = vmax.xlane.f32.xlu0 %v1415
        %v1417 = vpop.xlane.xlu0 %1416
        %v1418 = vsub.f32 %v1406, %v1414
        %v1419 = vsub.f32 %v1409, %v1417
        %v1420 = vmul.f32 %v1418, 1.442695
        %v1421 = vpow.pop %v1420
        %v1422 = vmul.f32 %v1419, 1.442695
        %v1423 = vpow.pop %v1422
        %v1424 = vsel %vm482, %v1421, 0.0
        %1425 = vadd.xlane.f32.xlu0 %v1424
        %v1426 = vpop.xlane.xlu0 %1425
        %v1427 = vsel %vm482, %v1423, 0.0
        %1428 = vadd.xlane.f32.xlu0 %v1427
        %v1429 = vpop.xlane.xlu0 %1428
        %v1430 = vrcp.pop %v1426
        %v1431 = vrcp.pop %v1429
        %v1432 = vmul.f32 %v1421, %v1430
        %v1433 = vmul.f32 %v1423, %v1431
        %v1434 = vpack.c.bf16 %v1433, %v1432
        %v1436 = vsel %vm482, %v1434, 0
        %1438 = vmatprep.subr.bf16.mxu0 0
        %1439 = vmatpush1.bf16.msra.mxu0 %v1370
        %1440 = vmatprep.subr.bf16.mxu0 0
        %1441 = vmatpush1.bf16.msra.mxu0 0
        %1442 = vmatprep.subr.bf16.mxu0 0
        %1443 = vmatpush1.bf16.msra.mxu0 0
        %1444 = vmatprep.subr.bf16.mxu0 0
        %1445 = vmatpush1.bf16.msra.mxu0 0
        %1446 = vmatprep.subr.bf16.mxu0 0
        %1447 = vmatpush1.bf16.msra.mxu0 0
        %1448 = vmatprep.subr.bf16.mxu0 0
        %1449 = vmatpush1.bf16.msra.mxu0 0
        %1450 = vmatprep.subr.bf16.mxu0 0
        %1451 = vmatpush1.bf16.msra.mxu0 0
        %1452 = vmatprep.subr.bf16.mxu0 0
        %1453 = vmatpush1.bf16.msra.mxu0 0
        %1454 = vmatprep.subr.bf16.mxu0 0
        %1455 = vmatpush1.bf16.msra.mxu0 0
        %1456 = vmatprep.subr.bf16.mxu0 0
        %1457 = vmatpush1.bf16.msra.mxu0 0
        %1458 = vmatprep.subr.bf16.mxu0 0
        %1459 = vmatpush1.bf16.msra.mxu0 0
        %1460 = vmatprep.subr.bf16.mxu0 0
        %1461 = vmatpush1.bf16.msra.mxu0 0
        %1462 = vmatprep.subr.bf16.mxu0 0
        %1463 = vmatpush1.bf16.msra.mxu0 0
        %1464 = vmatprep.subr.bf16.mxu0 0
        %1465 = vmatpush1.bf16.msra.mxu0 0
        %1466 = vmatprep.subr.bf16.mxu0 0
        %1467 = vmatpush1.bf16.msra.mxu0 0
        %1468 = vmatprep.subr.bf16.mxu0 0
        %1469 = vmatpush1.bf16.msra.mxu0 0
        %1470 = vmatprep.mubr.bf16.mxu0 0
        %1471 = vmatmul.mubr.bf16.gmra.mrb[0].mxu0 %v1436
        %v1472 = vpop.f32.mrb[0].mxu0
        %v1473 = vadd.f32 0.0, %v1472
        %v1474 = vpop.f32.mrb[0].mxu0
        %v1475 = vpop.f32.mrb[0].mxu0
        %v1476 = vadd.f32 0.0, %v1475
        %v1477 = vpop.f32.mrb[0].mxu0
        %1478 = vdwg.mxu0
        %v1479 = vadd.f32 %v1354, %v1473
        %v1480 = vadd.f32 %v1357, %v1476
        %vm1481 = vcmp.ge.s32.totalorder %v1120, 24
        %vm1482 = vcmp.lt.s32.totalorder %v1120, 32
        %vm1483 = vmand %vm1481, %vm1482
        %v1484 = vsel %vm1483, 1, 0
        %v1485 = vcvt.s32.f32 %v1484
        %v1486 = vmul.f32 %v1109, %v1485
        %v1487 = vmul.f32 %v1110, %v1485
        %v1488 = vpack.c.bf16 %v1487, %v1486
        %v1489 = vmul.f32 %v1115, %v1485
        %v1490 = vmul.f32 %v1116, %v1485
        %v1491 = vpack.c.bf16 %v1490, %v1489
        %1492 = vmatprep.subr.bf16.mxu0 0
        %1493 = vmatpush1.bf16.xpose.msra.mxu0 %v1488
        %1494 = vmatprep.subr.bf16.mxu0 0
        %1495 = vmatpush1.bf16.xpose.msra.mxu0 0
        %1496 = vmatprep.subr.bf16.mxu0 0
        %1497 = vmatpush1.bf16.xpose.msra.mxu0 0
        %1498 = vmatprep.subr.bf16.mxu0 0
        %1499 = vmatpush1.bf16.xpose.msra.mxu0 0
        %1500 = vmatprep.subr.bf16.mxu0 0
        %1501 = vmatpush1.bf16.xpose.msra.mxu0 0
        %1502 = vmatprep.subr.bf16.mxu0 0
        %1503 = vmatpush1.bf16.xpose.msra.mxu0 0
        %1504 = vmatprep.subr.bf16.mxu0 0
        %1505 = vmatpush1.bf16.xpose.msra.mxu0 0
        %1506 = vmatprep.subr.bf16.mxu0 0
        %1507 = vmatpush1.bf16.xpose.msra.mxu0 0
        %1508 = vmatprep.subr.bf16.mxu0 0
        %1509 = vmatpush1.bf16.xpose.msra.mxu0 0
        %1510 = vmatprep.subr.bf16.mxu0 0
        %1511 = vmatpush1.bf16.xpose.msra.mxu0 0
        %1512 = vmatprep.subr.bf16.mxu0 0
        %1513 = vmatpush1.bf16.xpose.msra.mxu0 0
        %1514 = vmatprep.subr.bf16.mxu0 0
        %1515 = vmatpush1.bf16.xpose.msra.mxu0 0
        %1516 = vmatprep.subr.bf16.mxu0 0
        %1517 = vmatpush1.bf16.xpose.msra.mxu0 0
        %1518 = vmatprep.subr.bf16.mxu0 0
        %1519 = vmatpush1.bf16.xpose.msra.mxu0 0
        %1520 = vmatprep.subr.bf16.mxu0 0
        %1521 = vmatpush1.bf16.xpose.msra.mxu0 0
        %1522 = vmatprep.subr.bf16.mxu0 0
        %1523 = vmatpush1.bf16.xpose.msra.mxu0 0
        %1524 = vmatprep.mubr.bf16.mxu0 0
        %1525 = vmatmul.mubr.bf16.gmra.mrb[0].mxu0 %v1121
        %v1526 = vpop.f32.mrb[0].mxu0
        %v1527 = vadd.f32 %v1117, %v1526
        %v1528 = vpop.f32.mrb[0].mxu0
        %v1529 = vpop.f32.mrb[0].mxu0
        %v1530 = vadd.f32 %v1118, %v1529
        %v1531 = vpop.f32.mrb[0].mxu0
        %1532 = vdwg.mxu0
        %v1533 = vsel %vm482, %v1527, -inf
        %1534 = vmax.xlane.f32.xlu0 %v1533
        %v1535 = vpop.xlane.xlu0 %1534
        %v1536 = vsel %vm482, %v1530, -inf
        %1537 = vmax.xlane.f32.xlu0 %v1536
        %v1538 = vpop.xlane.xlu0 %1537
        %v1539 = vsub.f32 %v1527, %v1535
        %v1540 = vsub.f32 %v1530, %v1538
        %v1541 = vmul.f32 %v1539, 1.442695
        %v1542 = vpow.pop %v1541
        %v1543 = vmul.f32 %v1540, 1.442695
        %v1544 = vpow.pop %v1543
        %v1545 = vsel %vm482, %v1542, 0.0
        %1546 = vadd.xlane.f32.xlu0 %v1545
        %v1547 = vpop.xlane.xlu0 %1546
        %v1548 = vsel %vm482, %v1544, 0.0
        %1549 = vadd.xlane.f32.xlu0 %v1548
        %v1550 = vpop.xlane.xlu0 %1549
        %v1551 = vrcp.pop %v1547
        %v1552 = vrcp.pop %v1550
        %v1553 = vmul.f32 %v1542, %v1551
        %v1554 = vmul.f32 %v1544, %v1552
        %v1555 = vpack.c.bf16 %v1554, %v1553
        %v1557 = vsel %vm482, %v1555, 0
        %1559 = vmatprep.subr.bf16.mxu0 0
        %1560 = vmatpush1.bf16.msra.mxu0 %v1491
        %1561 = vmatprep.subr.bf16.mxu0 0
        %1562 = vmatpush1.bf16.msra.mxu0 0
        %1563 = vmatprep.subr.bf16.mxu0 0
        %1564 = vmatpush1.bf16.msra.mxu0 0
        %1565 = vmatprep.subr.bf16.mxu0 0
        %1566 = vmatpush1.bf16.msra.mxu0 0
        %1567 = vmatprep.subr.bf16.mxu0 0
        %1568 = vmatpush1.bf16.msra.mxu0 0
        %1569 = vmatprep.subr.bf16.mxu0 0
        %1570 = vmatpush1.bf16.msra.mxu0 0
        %1571 = vmatprep.subr.bf16.mxu0 0
        %1572 = vmatpush1.bf16.msra.mxu0 0
        %1573 = vmatprep.subr.bf16.mxu0 0
        %1574 = vmatpush1.bf16.msra.mxu0 0
        %1575 = vmatprep.subr.bf16.mxu0 0
        %1576 = vmatpush1.bf16.msra.mxu0 0
        %1577 = vmatprep.subr.bf16.mxu0 0
        %1578 = vmatpush1.bf16.msra.mxu0 0
        %1579 = vmatprep.subr.bf16.mxu0 0
        %1580 = vmatpush1.bf16.msra.mxu0 0
        %1581 = vmatprep.subr.bf16.mxu0 0
        %1582 = vmatpush1.bf16.msra.mxu0 0
        %1583 = vmatprep.subr.bf16.mxu0 0
        %1584 = vmatpush1.bf16.msra.mxu0 0
        %1585 = vmatprep.subr.bf16.mxu0 0
        %1586 = vmatpush1.bf16.msra.mxu0 0
        %1587 = vmatprep.subr.bf16.mxu0 0
        %1588 = vmatpush1.bf16.msra.mxu0 0
        %1589 = vmatprep.subr.bf16.mxu0 0
        %1590 = vmatpush1.bf16.msra.mxu0 0
        %1591 = vmatprep.mubr.bf16.mxu0 0
        %1592 = vmatmul.mubr.bf16.gmra.mrb[0].mxu0 %v1557
        %v1593 = vpop.f32.mrb[0].mxu0
        %v1594 = vadd.f32 0.0, %v1593
        %v1595 = vpop.f32.mrb[0].mxu0
        %v1596 = vpop.f32.mrb[0].mxu0
        %v1597 = vadd.f32 0.0, %v1596
        %v1598 = vpop.f32.mrb[0].mxu0
        %1599 = vdwg.mxu0
        %v1600 = vadd.f32 %v1479, %v1594
        %v1601 = vadd.f32 %v1480, %v1597
        %v1602 = vpack.c.bf16 %v1601, %v1600
        %s1603 = scalar_lea.vmem %s328, 128 [#allocation5]
        %v1604 = vld [vmem:[%s1603] sm:$0xf]
        %v1605 = vld [vmem:[%s1603 + $0x4] sm:$0xf]
        %v1606 = vld [vmem:[%s1603 + $0x8] sm:$0xf]
        %v1607 = vld [vmem:[%s1603 + $0xc] sm:$0xf]
        %v1608 = vld [vmem:[%s1603 + $0x10] sm:$0xf]
        %v1609 = vld [vmem:[%s1603 + $0x14] sm:$0xf]
        %v1610 = vld [vmem:[%s1603 + $0x18] sm:$0xf]
        %v1611 = vld [vmem:[%s1603 + $0x1c] sm:$0xf]
        %v1612 = vld [vmem:[%s1603 + $0x20] sm:$0xf]
        %v1613 = vld [vmem:[%s1603 + $0x24] sm:$0xf]
        %v1614 = vld [vmem:[%s1603 + $0x28] sm:$0xf]
        %v1615 = vld [vmem:[%s1603 + $0x2c] sm:$0xf]
        %v1616 = vld [vmem:[%s1603 + $0x30] sm:$0xf]
        %v1617 = vld [vmem:[%s1603 + $0x34] sm:$0xf]
        %v1618 = vld [vmem:[%s1603 + $0x38] sm:$0xf]
        %v1619 = vld [vmem:[%s1603 + $0x3c] sm:$0xf]
        %v1620 = vlaneseq
        %v1621 = vshrl.u32 %v1620, 7
        %v1622 = vsub.s32 5, %v1621
        %v1623 = vrot.slane %v460, %v1622
        %v1640 = vunpack.c.l.b16 %v1604
        %v1641 = vunpack.c.l.b16 %v1605
        %v1642 = vunpack.c.l.b16 %v1606
        %v1643 = vunpack.c.l.b16 %v1607
        %v1644 = vunpack.c.l.b16 %v1608
        %v1645 = vunpack.c.l.b16 %v1609
        %v1646 = vunpack.c.l.b16 %v1610
        %v1647 = vunpack.c.l.b16 %v1611
        %v1648 = vunpack.c.l.b16 %v1612
        %v1649 = vunpack.c.l.b16 %v1613
        %v1650 = vunpack.c.l.b16 %v1614
        %v1651 = vunpack.c.l.b16 %v1615
        %v1652 = vunpack.c.l.b16 %v1616
        %v1653 = vunpack.c.l.b16 %v1617
        %v1654 = vunpack.c.l.b16 %v1618
        %v1655 = vunpack.c.l.b16 %v1619
        %v1656 = vpack.c.b16 %v1641, %v1640
        %v1657 = vpack.c.b16 %v1643, %v1642
        %v1658 = vpack.c.b16 %v1645, %v1644
        %v1659 = vpack.c.b16 %v1647, %v1646
        %v1660 = vpack.c.b16 %v1649, %v1648
        %v1661 = vpack.c.b16 %v1651, %v1650
        %v1662 = vpack.c.b16 %v1653, %v1652
        %v1663 = vpack.c.b16 %v1655, %v1654
        %1672 = vmatprep.subr.bf16.mxu0 0
        %1673 = vmatpush1.bf16.msra.mxu0 %v1656
        %1674 = vmatprep.subr.bf16.mxu0 0
        %1675 = vmatpush1.bf16.msra.mxu0 %v1657
        %1676 = vmatprep.subr.bf16.mxu0 0
        %1677 = vmatpush1.bf16.msra.mxu0 %v1658
        %1678 = vmatprep.subr.bf16.mxu0 0
        %1679 = vmatpush1.bf16.msra.mxu0 %v1659
        %1680 = vmatprep.subr.bf16.mxu0 0
        %1681 = vmatpush1.bf16.msra.mxu0 %v1660
        %1682 = vmatprep.subr.bf16.mxu0 0
        %1683 = vmatpush1.bf16.msra.mxu0 %v1661
        %1684 = vmatprep.subr.bf16.mxu0 0
        %1685 = vmatpush1.bf16.msra.mxu0 %v1662
        %1686 = vmatprep.subr.bf16.mxu0 0
        %1687 = vmatpush1.bf16.msra.mxu0 %v1663
        %1688 = vmatprep.subr.bf16.mxu0 0
        %1689 = vmatpush1.bf16.msra.mxu0 0
        %1690 = vmatprep.subr.bf16.mxu0 0
        %1691 = vmatpush1.bf16.msra.mxu0 0
        %1692 = vmatprep.subr.bf16.mxu0 0
        %1693 = vmatpush1.bf16.msra.mxu0 0
        %1694 = vmatprep.subr.bf16.mxu0 0
        %1695 = vmatpush1.bf16.msra.mxu0 0
        %1696 = vmatprep.subr.bf16.mxu0 0
        %1697 = vmatpush1.bf16.msra.mxu0 0
        %1698 = vmatprep.subr.bf16.mxu0 0
        %1699 = vmatpush1.bf16.msra.mxu0 0
        %1700 = vmatprep.subr.bf16.mxu0 0
        %1701 = vmatpush1.bf16.msra.mxu0 0
        %1702 = vmatprep.subr.bf16.mxu0 0
        %1703 = vmatpush1.bf16.msra.mxu0 0
        %1704 = vmatprep.mubr.bf16.mxu0 0
        %1705 = vmatmul.mubr.bf16.gmra.mrb[0].mxu0 %v1602
        %v1706 = vpop.f32.mrb[0].mxu0
        %v1707 = vadd.f32 %v1623, %v1706
        %v1708 = vpop.f32.mrb[0].mxu0
        %v1709 = vpop.f32.mrb[0].mxu0
        %v1710 = vadd.f32 %v1623, %v1709
        %v1711 = vpop.f32.mrb[0].mxu0
        %1712 = vdwg.mxu0
        %v1713 = vadd.f32 %v1707, %v458
        %v1714 = vadd.f32 %v1710, %v459
        %v1715 = vmul.f32 %v1713, %v469
        %v1716 = vmul.f32 %v1714, %v470
        %v1717 = vadd.f32 %v1715, %v1716
        %v1718 = vrot.slane %v1717, 4
        %v1719 = vadd.f32 %v1717, %v1718
        %v1720 = vrot.slane %v1719, 2
        %v1721 = vadd.f32 %v1719, %v1720
        %v1722 = vrot.slane %v1721, 1
        %v1723 = vadd.f32 %v1721, %v1722
        %v1724 = vmul.f32 %v1723, 0.06666667
        %v1725 = vsub.f32 %v1713, %v1724
        %v1726 = vsub.f32 %v1714, %v1724
        %v1727 = vmul.f32 %v1725, %v469
        %v1728 = vmul.f32 %v1726, %v470
        %v1729 = vmul.f32 %v1727, %v1727
        %v1730 = vmul.f32 %v1728, %v1728
        %v1731 = vadd.f32 %v1729, %v1730
        %v1732 = vrot.slane %v1731, 4
        %v1733 = vadd.f32 %v1731, %v1732
        %v1734 = vrot.slane %v1733, 2
        %v1735 = vadd.f32 %v1733, %v1734
        %v1736 = vrot.slane %v1735, 1
        %v1737 = vadd.f32 %v1735, %v1736
        %v1738 = vmul.f32 %v1737, 0.06666667
        %v1739 = vadd.f32 %v1738, 1e-05
        %v1740 = vrsqrt.pop %v1739
        %v1741 = vmul.f32 %v1725, %v1740
        %v1742 = vmul.f32 %v1726, %v1740
        %v1743 = vlaneseq
        %v1744 = vshrl.u32 %v1743, 7
        %v1745 = vsub.s32 2, %v1744
        %v1746 = vrot.slane %v461, %v1745
        %v1747 = vmul.f32 %v1741, %v1746
        %v1748 = vmul.f32 %v1742, %v1746
        %v1749 = vlaneseq
        %v1750 = vshrl.u32 %v1749, 7
        %v1751 = vsub.s32 3, %v1750
        %v1752 = vrot.slane %v461, %v1751
        %v1753 = vadd.f32 %v1747, %v1752
        %v1754 = vadd.f32 %v1748, %v1752
        %v1755 = vadd.f32 %v853, %v1753
        %v1756 = vadd.f32 %v854, %v1754
        %v1757 = vpack.c.bf16 %v1756, %v1755
        %s1758 = scalar_lea.vmem %s328, 192 [#allocation5]
        %v1759 = vld [vmem:[%s1758] sm:$0xf]
        %v1760 = vld [vmem:[%s1758 + $0x4] sm:$0xf]
        %v1761 = vld [vmem:[%s1758 + $0x8] sm:$0xf]
        %v1762 = vld [vmem:[%s1758 + $0xc] sm:$0xf]
        %v1763 = vld [vmem:[%s1758 + $0x10] sm:$0xf]
        %v1764 = vld [vmem:[%s1758 + $0x14] sm:$0xf]
        %v1765 = vld [vmem:[%s1758 + $0x18] sm:$0xf]
        %v1766 = vld [vmem:[%s1758 + $0x1c] sm:$0xf]
        %v1767 = vld [vmem:[%s1758 + $0x20] sm:$0xf]
        %v1768 = vld [vmem:[%s1758 + $0x24] sm:$0xf]
        %v1769 = vld [vmem:[%s1758 + $0x28] sm:$0xf]
        %v1770 = vld [vmem:[%s1758 + $0x2c] sm:$0xf]
        %v1771 = vld [vmem:[%s1758 + $0x30] sm:$0xf]
        %v1772 = vld [vmem:[%s1758 + $0x34] sm:$0xf]
        %v1773 = vld [vmem:[%s1758 + $0x38] sm:$0xf]
        %v1774 = vld [vmem:[%s1758 + $0x3c] sm:$0xf]
        %v1775 = vlaneseq
        %v1776 = vshrl.u32 %v1775, 7
        %v1777 = vsub.s32 6, %v1776
        %v1778 = vrot.slane %v460, %v1777
        %v1795 = vunpack.c.l.b16 %v1759
        %v1796 = vunpack.c.l.b16 %v1760
        %v1797 = vunpack.c.l.b16 %v1761
        %v1798 = vunpack.c.l.b16 %v1762
        %v1799 = vunpack.c.l.b16 %v1763
        %v1800 = vunpack.c.l.b16 %v1764
        %v1801 = vunpack.c.l.b16 %v1765
        %v1802 = vunpack.c.l.b16 %v1766
        %v1803 = vunpack.c.l.b16 %v1767
        %v1804 = vunpack.c.l.b16 %v1768
        %v1805 = vunpack.c.l.b16 %v1769
        %v1806 = vunpack.c.l.b16 %v1770
        %v1807 = vunpack.c.l.b16 %v1771
        %v1808 = vunpack.c.l.b16 %v1772
        %v1809 = vunpack.c.l.b16 %v1773
        %v1810 = vunpack.c.l.b16 %v1774
        %v1811 = vpack.c.b16 %v1796, %v1795
        %v1812 = vpack.c.b16 %v1798, %v1797
        %v1813 = vpack.c.b16 %v1800, %v1799
        %v1814 = vpack.c.b16 %v1802, %v1801
        %v1815 = vpack.c.b16 %v1804, %v1803
        %v1816 = vpack.c.b16 %v1806, %v1805
        %v1817 = vpack.c.b16 %v1808, %v1807
        %v1818 = vpack.c.b16 %v1810, %v1809
        %1827 = vmatprep.subr.bf16.mxu0 0
        %1828 = vmatpush1.bf16.msra.mxu0 %v1811
        %1829 = vmatprep.subr.bf16.mxu0 0
        %1830 = vmatpush1.bf16.msra.mxu0 %v1812
        %1831 = vmatprep.subr.bf16.mxu0 0
        %1832 = vmatpush1.bf16.msra.mxu0 %v1813
        %1833 = vmatprep.subr.bf16.mxu0 0
        %1834 = vmatpush1.bf16.msra.mxu0 %v1814
        %1835 = vmatprep.subr.bf16.mxu0 0
        %1836 = vmatpush1.bf16.msra.mxu0 %v1815
        %1837 = vmatprep.subr.bf16.mxu0 0
        %1838 = vmatpush1.bf16.msra.mxu0 %v1816
        %1839 = vmatprep.subr.bf16.mxu0 0
        %1840 = vmatpush1.bf16.msra.mxu0 %v1817
        %1841 = vmatprep.subr.bf16.mxu0 0
        %1842 = vmatpush1.bf16.msra.mxu0 %v1818
        %1843 = vmatprep.subr.bf16.mxu0 0
        %1844 = vmatpush1.bf16.msra.mxu0 0
        %1845 = vmatprep.subr.bf16.mxu0 0
        %1846 = vmatpush1.bf16.msra.mxu0 0
        %1847 = vmatprep.subr.bf16.mxu0 0
        %1848 = vmatpush1.bf16.msra.mxu0 0
        %1849 = vmatprep.subr.bf16.mxu0 0
        %1850 = vmatpush1.bf16.msra.mxu0 0
        %1851 = vmatprep.subr.bf16.mxu0 0
        %1852 = vmatpush1.bf16.msra.mxu0 0
        %1853 = vmatprep.subr.bf16.mxu0 0
        %1854 = vmatpush1.bf16.msra.mxu0 0
        %1855 = vmatprep.subr.bf16.mxu0 0
        %1856 = vmatpush1.bf16.msra.mxu0 0
        %1857 = vmatprep.subr.bf16.mxu0 0
        %1858 = vmatpush1.bf16.msra.mxu0 0
        %1859 = vmatprep.mubr.bf16.mxu0 0
        %1860 = vmatmul.mubr.bf16.gmra.mrb[0].mxu0 %v1757
        %v1861 = vpop.f32.mrb[0].mxu0
        %v1862 = vadd.f32 %v1778, %v1861
        %v1863 = vpop.f32.mrb[0].mxu0
        %v1864 = vpop.f32.mrb[0].mxu0
        %v1865 = vadd.f32 %v1778, %v1864
        %v1866 = vpop.f32.mrb[0].mxu0
        %1867 = vdwg.mxu0
        %v1868 = vmax.f32 %v1862, 0.0
        %v1869 = vmax.f32 %v1865, 0.0
        %v1870 = vpack.c.bf16 %v1869, %v1868
        %s1871 = scalar_lea.vmem %s328, 256 [#allocation5]
        %v1872 = vld [vmem:[%s1871] sm:$0xf]
        %v1873 = vld [vmem:[%s1871 + $0x4] sm:$0xf]
        %v1874 = vld [vmem:[%s1871 + $0x8] sm:$0xf]
        %v1875 = vld [vmem:[%s1871 + $0xc] sm:$0xf]
        %v1876 = vld [vmem:[%s1871 + $0x10] sm:$0xf]
        %v1877 = vld [vmem:[%s1871 + $0x14] sm:$0xf]
        %v1878 = vld [vmem:[%s1871 + $0x18] sm:$0xf]
        %v1879 = vld [vmem:[%s1871 + $0x1c] sm:$0xf]
        %v1880 = vld [vmem:[%s1871 + $0x20] sm:$0xf]
        %v1881 = vld [vmem:[%s1871 + $0x24] sm:$0xf]
        %v1882 = vld [vmem:[%s1871 + $0x28] sm:$0xf]
        %v1883 = vld [vmem:[%s1871 + $0x2c] sm:$0xf]
        %v1884 = vld [vmem:[%s1871 + $0x30] sm:$0xf]
        %v1885 = vld [vmem:[%s1871 + $0x34] sm:$0xf]
        %v1886 = vld [vmem:[%s1871 + $0x38] sm:$0xf]
        %v1887 = vld [vmem:[%s1871 + $0x3c] sm:$0xf]
        %v1888 = vlaneseq
        %v1889 = vshrl.u32 %v1888, 7
        %v1890 = vsub.s32 7, %v1889
        %v1891 = vrot.slane %v460, %v1890
        %v1908 = vunpack.c.l.b16 %v1872
        %v1909 = vunpack.c.l.b16 %v1873
        %v1910 = vunpack.c.l.b16 %v1874
        %v1911 = vunpack.c.l.b16 %v1875
        %v1912 = vunpack.c.l.b16 %v1876
        %v1913 = vunpack.c.l.b16 %v1877
        %v1914 = vunpack.c.l.b16 %v1878
        %v1915 = vunpack.c.l.b16 %v1879
        %v1916 = vunpack.c.l.b16 %v1880
        %v1917 = vunpack.c.l.b16 %v1881
        %v1918 = vunpack.c.l.b16 %v1882
        %v1919 = vunpack.c.l.b16 %v1883
        %v1920 = vunpack.c.l.b16 %v1884
        %v1921 = vunpack.c.l.b16 %v1885
        %v1922 = vunpack.c.l.b16 %v1886
        %v1923 = vunpack.c.l.b16 %v1887
        %v1924 = vpack.c.b16 %v1909, %v1908
        %v1925 = vpack.c.b16 %v1911, %v1910
        %v1926 = vpack.c.b16 %v1913, %v1912
        %v1927 = vpack.c.b16 %v1915, %v1914
        %v1928 = vpack.c.b16 %v1917, %v1916
        %v1929 = vpack.c.b16 %v1919, %v1918
        %v1930 = vpack.c.b16 %v1921, %v1920
        %v1931 = vpack.c.b16 %v1923, %v1922
        %1940 = vmatprep.subr.bf16.mxu0 0
        %1941 = vmatpush1.bf16.msra.mxu0 %v1924
        %1942 = vmatprep.subr.bf16.mxu0 0
        %1943 = vmatpush1.bf16.msra.mxu0 %v1925
        %1944 = vmatprep.subr.bf16.mxu0 0
        %1945 = vmatpush1.bf16.msra.mxu0 %v1926
        %1946 = vmatprep.subr.bf16.mxu0 0
        %1947 = vmatpush1.bf16.msra.mxu0 %v1927
        %1948 = vmatprep.subr.bf16.mxu0 0
        %1949 = vmatpush1.bf16.msra.mxu0 %v1928
        %1950 = vmatprep.subr.bf16.mxu0 0
        %1951 = vmatpush1.bf16.msra.mxu0 %v1929
        %1952 = vmatprep.subr.bf16.mxu0 0
        %1953 = vmatpush1.bf16.msra.mxu0 %v1930
        %1954 = vmatprep.subr.bf16.mxu0 0
        %1955 = vmatpush1.bf16.msra.mxu0 %v1931
        %1956 = vmatprep.subr.bf16.mxu0 0
        %1957 = vmatpush1.bf16.msra.mxu0 0
        %1958 = vmatprep.subr.bf16.mxu0 0
        %1959 = vmatpush1.bf16.msra.mxu0 0
        %1960 = vmatprep.subr.bf16.mxu0 0
        %1961 = vmatpush1.bf16.msra.mxu0 0
        %1962 = vmatprep.subr.bf16.mxu0 0
        %1963 = vmatpush1.bf16.msra.mxu0 0
        %1964 = vmatprep.subr.bf16.mxu0 0
        %1965 = vmatpush1.bf16.msra.mxu0 0
        %1966 = vmatprep.subr.bf16.mxu0 0
        %1967 = vmatpush1.bf16.msra.mxu0 0
        %1968 = vmatprep.subr.bf16.mxu0 0
        %1969 = vmatpush1.bf16.msra.mxu0 0
        %1970 = vmatprep.subr.bf16.mxu0 0
        %1971 = vmatpush1.bf16.msra.mxu0 0
        %1972 = vmatprep.mubr.bf16.mxu0 0
        %1973 = vmatmul.mubr.bf16.gmra.mrb[0].mxu0 %v1870
        %v1974 = vpop.f32.mrb[0].mxu0
        %v1975 = vadd.f32 %v1891, %v1974
        %v1976 = vpop.f32.mrb[0].mxu0
        %v1977 = vpop.f32.mrb[0].mxu0
        %v1978 = vadd.f32 %v1891, %v1977
        %v1979 = vpop.f32.mrb[0].mxu0
        %1980 = vdwg.mxu0
        %v1981 = vadd.f32 %v1755, %v1975
        %v1982 = vadd.f32 %v1756, %v1978
        %v1983 = vmul.f32 %v1981, %v469
        %v1984 = vmul.f32 %v1982, %v470
        %v1985 = vadd.f32 %v1983, %v1984
        %v1986 = vrot.slane %v1985, 4
        %v1987 = vadd.f32 %v1985, %v1986
        %v1988 = vrot.slane %v1987, 2
        %v1989 = vadd.f32 %v1987, %v1988
        %v1990 = vrot.slane %v1989, 1
        %v1991 = vadd.f32 %v1989, %v1990
        %v1992 = vmul.f32 %v1991, 0.06666667
        %v1993 = vsub.f32 %v1981, %v1992
        %v1994 = vsub.f32 %v1982, %v1992
        %v1995 = vmul.f32 %v1993, %v469
        %v1996 = vmul.f32 %v1994, %v470
        %v1997 = vmul.f32 %v1995, %v1995
        %v1998 = vmul.f32 %v1996, %v1996
        %v1999 = vadd.f32 %v1997, %v1998
        %v2000 = vrot.slane %v1999, 4
        %v2001 = vadd.f32 %v1999, %v2000
        %v2002 = vrot.slane %v2001, 2
        %v2003 = vadd.f32 %v2001, %v2002
        %v2004 = vrot.slane %v2003, 1
        %v2005 = vadd.f32 %v2003, %v2004
        %v2006 = vmul.f32 %v2005, 0.06666667
        %v2007 = vadd.f32 %v2006, 1e-05
        %v2008 = vrsqrt.pop %v2007
        %v2009 = vmul.f32 %v1993, %v2008
        %v2010 = vmul.f32 %v1994, %v2008
        %v2011 = vlaneseq
        %v2012 = vshrl.u32 %v2011, 7
        %v2013 = vsub.s32 4, %v2012
        %v2014 = vrot.slane %v461, %v2013
        %v2015 = vmul.f32 %v2009, %v2014
        %v2016 = vmul.f32 %v2010, %v2014
        %v2017 = vlaneseq
        %v2018 = vshrl.u32 %v2017, 7
        %v2019 = vsub.s32 5, %v2018
        %v2020 = vrot.slane %v461, %v2019
        %v2021 = vadd.f32 %v2015, %v2020
        %v2022 = vadd.f32 %v2016, %v2020
        %v2023 = vmul.f32 %v2021, %v469
        %v2024 = vmul.f32 %v2022, %v470
        %2025 = vst [vmem:[%s9] sm:$0xff] %v2023
        %2026 = vst [vmem:[%s9 + $0x8] sm:$0xff] %v2024
        // Predicated region
        $region65: #{gps_forward.4} parent=55 // pred_check
          %p2027 = pneg %p240
        $region66: #{gps_forward.4} parent=55 // pred_check_branch
          %2029 = sbr.rel (%p2027) target = $region68
        $region67: #{gps_forward.4} parent=55 // pred_region
          _
        $region68: #{gps_forward.4} parent=55 // pred_fallthru
          _
        // Predicated region
        $region69: #{gps_forward.4} parent=55 // pred_check
          %p2030 = pneg %p240
        $region70: #{gps_forward.4} parent=55 // pred_check_branch
          %2032 = sbr.rel (%p2030) target = $region72
        $region71: #{gps_forward.4} parent=55 // pred_region
          _
        $region72: #{gps_forward.4} parent=55 // pred_fallthru
          _
      $region56: #{gps_forward.4} parent=5 // pred_fallthru
        _
      %p2033 = scmp.le.s32.totalorder 2, %s18
      // Predicated region
      $region73: #{gps_forward.4} parent=5 // pred_check
        %p2034 = pneg %p2033
      $region74: #{gps_forward.4} parent=5 // pred_check_branch
        %2036 = sbr.rel (%p2034) target = $region76
      $region75: #{gps_forward.4} parent=5 // pred_region
        %s2037 = ssub.s32 %s18, 2
      $region76: #{gps_forward.4} parent=5 // pred_fallthru
        _
    $region6: #{gps_forward.4} parent=1 // loop_footer
      %s22 = sadd.s32 1, %s18
    $region7: #{gps_forward.4} parent=1 // loop_footer_branch
      %17 = sbr.rel target = $region3
    $region8: #{gps_forward.4} parent=1 // loop_exit
      _
    %2038 = vsyncpa [#allocation6], 1
    %s2039 = scalar_lea.sflag [#allocation6], 1
    %2040 = vsyncpa %s2039, 1

</llo_original>
